<compile_context>
chip_gen: v7x
topology: tpu7x:2x2x1
jax: 0.10.0
libtpu: 0.0.40
codegen_flags: <defaults>
</compile_context>

<pallas_src>
import jax
import jax.numpy as jnp
from jax.experimental import pallas as pl
from jax.experimental.pallas import tpu as pltpu

_INV_SQRT2 = 0.7071067811865476


def mlp_kernel(x_ref, w1_ref, w2_ref, o_ref, xn_ref, acc_ref):
    """One (row-tile i, hidden-tile j) step of LayerNorm -> c_fc -> GELU -> c_proj."""
    j = pl.program_id(1)

    # LayerNorm (no affine, eps=1e-8, biased variance == F.layer_norm), once per
    # row tile.  Cache normalized rows in the MXU compute dtype; zero accumulator.
    @pl.when(j == 0)
    def _init():
        x = x_ref[...].astype(jnp.float32)
        mean = jnp.mean(x, axis=-1, keepdims=True)
        var = jnp.mean((x - mean) * (x - mean), axis=-1, keepdims=True)
        xn = (x - mean) * jax.lax.rsqrt(var + 1e-8)
        xn_ref[...] = xn.astype(xn_ref.dtype)
        acc_ref[...] = jnp.zeros_like(acc_ref)

    # c_fc column tile: (tm, D) @ (D, th) on the MXU, f32 accumulation.
    h = jnp.dot(xn_ref[...], w1_ref[...], preferred_element_type=jnp.float32)

    # Exact (erf) GELU — PyTorch default F.gelu — in f32 on the VPU/EUP.
    h = 0.5 * h * (1.0 + jax.lax.erf(h * jnp.float32(_INV_SQRT2)))

    # c_proj partial: (tm, th) @ (th, D), accumulated over hidden tiles.
    acc_ref[...] += jnp.dot(h.astype(w2_ref.dtype), w2_ref[...],
                            preferred_element_type=jnp.float32)

    @pl.when(j == pl.num_programs(1) - 1)
    def _finalize():
        o_ref[...] = acc_ref[...].astype(o_ref.dtype)


def _pick_hidden_tile(H, th_request):
    """Largest multiple of 128 <= th_request that divides H (fallback: full H)."""
    th = min(th_request, H)
    th = (th // 128) * 128
    while th >= 128:
        if H % th == 0:
            return th
        th -= 128
    return H


def _vmem_budget_bytes(tm, D, th, x_bytes, w_bytes, out_bytes):
    """Rough per-call VMEM footprint (double-buffered streamed tiles + scratch)."""
    x_tile = 2 * tm * D * x_bytes          # input rows (double-buffered)
    w1_tile = 2 * D * th * w_bytes         # c_fc column tile
    w2_tile = 2 * th * D * w_bytes         # c_proj row tile
    out_tile = 2 * tm * D * out_bytes      # output rows
    xn_scr = tm * D * w_bytes              # cached normalized rows
    acc_scr = tm * D * 4                   # f32 accumulator
    h_tmp = 2 * tm * th * 4                # f32 c_fc output + GELU temporaries
    return x_tile + w1_tile + w2_tile + out_tile + xn_scr + acc_scr + h_tmp


def mlp_pallas(x, w_fc, w_proj, *, tm=256, th=512,
               compute_dtype=jnp.bfloat16,
               vmem_cap_bytes=40 * 1024 * 1024):
    """x: (B, T, D); w_fc: (D, 4D); w_proj: (4D, D). Returns (B, T, D)."""
    B, T, D = x.shape
    Din, H = w_fc.shape
    assert Din == D and w_proj.shape == (H, D)

    M = B * T
    x2d = x.reshape(M, D)

    # Cast weights once in the wrapper: halves HBM traffic, feeds the MXU bf16 path.
    w1 = w_fc.astype(compute_dtype)
    w2 = w_proj.astype(compute_dtype)

    w_bytes = jnp.dtype(compute_dtype).itemsize
    x_bytes = jnp.dtype(x.dtype).itemsize

    # Hidden tile: multiple of 128 that divides H.
    th = _pick_hidden_tile(H, th)

    # Row tile: multiple of 8, clamped to the (sublane-padded) row count, then
    # shrunk (if ever necessary) to fit a conservative VMEM cap (v7x = 64 MiB).
    tm = max(8, min((tm // 8) * 8, pl.cdiv(M, 8) * 8))
    while tm > 8 and _vmem_budget_bytes(tm, D, th, x_bytes, w_bytes, x_bytes) > vmem_cap_bytes:
        tm = max(8, ((tm // 2) // 8) * 8)

    # Pad rows so the grid tiles evenly; padded rows are sliced off afterwards
    # (LayerNorm of an all-zero row is 0, so padding is numerically harmless).
    Mp = pl.cdiv(M, tm) * tm
    pad = Mp - M
    if pad:
        x2d = jnp.pad(x2d, ((0, pad), (0, 0)))

    grid = (Mp // tm, H // th)

    cost = pl.CostEstimate(
        flops=int(4 * Mp * D * H),            # two matmuls: 2*M*D*H each
        transcendentals=int(Mp * H),          # erf per hidden activation
        bytes_accessed=int(Mp * D * x_bytes + D * H * w_bytes
                           + H * D * w_bytes + Mp * D * x_bytes),
    )

    out2d = pl.pallas_call(
        mlp_kernel,
        out_shape=jax.ShapeDtypeStruct((Mp, D), x.dtype),
        grid_spec=pltpu.PrefetchScalarGridSpec(
            num_scalar_prefetch=0,
            grid=grid,
            in_specs=[
                pl.BlockSpec((tm, D), lambda i, j: (i, 0)),   # x rows (invariant in j)
                pl.BlockSpec((D, th), lambda i, j: (0, j)),   # c_fc column tile
                pl.BlockSpec((th, D), lambda i, j: (j, 0)),   # c_proj row tile
            ],
            out_specs=pl.BlockSpec((tm, D), lambda i, j: (i, 0)),
            scratch_shapes=[
                pltpu.VMEM((tm, D), compute_dtype),   # cached LayerNorm output
                pltpu.VMEM((tm, D), jnp.float32),     # c_proj accumulator
            ],
        ),
        compiler_params=pltpu.CompilerParams(
            dimension_semantics=("parallel", "arbitrary"),
            vmem_limit_bytes=int(vmem_cap_bytes),
        ),
        cost_estimate=cost,
    )(x2d, w1, w2)

    out2d = out2d[:M] if pad else out2d
    return out2d.reshape(B, T, D)


def mlp_reference(x, w_fc, w_proj, compute_dtype=jnp.float32):
    """Pure-JAX reference mirroring the PyTorch forward (optionally bf16 operands)."""
    xf = x.astype(jnp.float32)
    mean = jnp.mean(xf, axis=-1, keepdims=True)
    var = jnp.mean((xf - mean) ** 2, axis=-1, keepdims=True)
    xn = (xf - mean) * jax.lax.rsqrt(var + 1e-8)
    h = jnp.dot(xn.astype(compute_dtype), w_fc.astype(compute_dtype),
                preferred_element_type=jnp.float32)
    h = 0.5 * h * (1.0 + jax.lax.erf(h * jnp.float32(_INV_SQRT2)))
    out = jnp.dot(h.astype(compute_dtype), w_proj.astype(compute_dtype),
                  preferred_element_type=jnp.float32)
    return out.astype(x.dtype)


if __name__ == "__main__":
    # Module spec: d_model = 384, hidden = 4 * d_model.  Small but MXU-friendly
    # batch/seq so the row grid has several programs (2-TC friendly on v7x).
    d_model = 384
    B, T, D = 4, 256, d_model
    H = 4 * D

    key = jax.random.PRNGKey(0)
    kx, k1, k2 = jax.random.split(key, 3)

    x = jax.random.normal(kx, (B, T, D), dtype=jnp.float32)
    # Deterministic init ~ nn.Linear default scale (uniform in +-1/sqrt(fan_in)).
    w_fc = jax.random.uniform(k1, (D, H), jnp.float32, -1.0, 1.0) / jnp.sqrt(D)
    w_proj = jax.random.uniform(k2, (H, D), jnp.float32, -1.0, 1.0) / jnp.sqrt(H)

    out = mlp_pallas(x, w_fc, w_proj, tm=256, th=512)
    out = jax.block_until_ready(out)
    assert out.shape == (B, T, D)
    assert bool(jnp.all(jnp.isfinite(out)))

    # Matching-precision reference (bf16 matmul operands, f32 accumulation).
    ref_bf16 = mlp_reference(x, w_fc, w_proj, compute_dtype=jnp.bfloat16)
    assert jnp.allclose(out, ref_bf16, atol=2e-3, rtol=2e-3), "mismatch vs bf16-operand reference"

    # Full-f32 PyTorch-equivalent reference; tolerance loosened only by bf16
    # operand rounding in the two matmuls.
    ref_f32 = mlp_reference(x, w_fc, w_proj, compute_dtype=jnp.float32)
    assert jnp.allclose(out, ref_f32, atol=3e-2, rtol=3e-2), "mismatch vs f32 reference"

    print("KERNEL_OK")
</pallas_src>

<mosaic_0001>
module attributes {stable_mosaic.version = 11 : i64} {
  func.func @mlp_kernel(%arg0: i32, %arg1: i32, %arg2: memref<256x384xf32, #tpu.memory_space<vmem>>, %arg3: memref<384x512xbf16, #tpu.memory_space<vmem>>, %arg4: memref<512x384xbf16, #tpu.memory_space<vmem>>, %arg5: memref<256x384xf32, #tpu.memory_space<vmem>>, %arg6: memref<256x384xbf16, #tpu.memory_space<vmem>>, %arg7: memref<256x384xf32, #tpu.memory_space<vmem>>) attributes {dimension_semantics = [#tpu.dimension_semantics<parallel>, #tpu.dimension_semantics<arbitrary>], iteration_bounds = array<i64: 4, 3>, scalar_prefetch = 0 : i64, scratch_operands = 2 : i64, tpu.core_type = #tpu.core_type<tc>, window_params = [{transform_indices = @transform_0, window_bounds = array<i64: 256, 384>}, {transform_indices = @transform_1, window_bounds = array<i64: 384, 512>}, {transform_indices = @transform_2, window_bounds = array<i64: 512, 384>}, {transform_indices = @transform_3, window_bounds = array<i64: 256, 384>}]} {
    %c0_i32 = arith.constant 0 : i32
    %0 = arith.cmpi eq, %arg1, %c0_i32 : i32
    %1 = arith.extui %0 : i1 to i32
    %c0_i32_0 = arith.constant 0 : i32
    %2 = arith.cmpi ne, %1, %c0_i32_0 : i32
    scf.if %2 {
      %c0_15 = arith.constant 0 : index
      %c0_16 = arith.constant 0 : index
      %23 = vector.load %arg2[%c0_15, %c0_16] : memref<256x384xf32, #tpu.memory_space<vmem>>, vector<256x384xf32>
      %cst_17 = arith.constant dense<0.000000e+00> : vector<256xf32>
      %24 = vector.multi_reduction <add>, %23, %cst_17 [1] : vector<256x384xf32> to vector<256xf32>
      %25 = vector.shape_cast %24 : vector<256xf32> to vector<256x1xf32>
      %cst_18 = arith.constant 3.840000e+02 : f32
      %26 = vector.broadcast %cst_18 : f32 to vector<256x1xf32>
      %27 = arith.divf %25, %26 : vector<256x1xf32>
      %28 = vector.broadcast %27 : vector<256x1xf32> to vector<256x384xf32>
      %29 = arith.subf %23, %28 : vector<256x384xf32>
      %30 = vector.broadcast %27 : vector<256x1xf32> to vector<256x384xf32>
      %31 = arith.subf %23, %30 : vector<256x384xf32>
      %32 = arith.mulf %29, %31 : vector<256x384xf32>
      %cst_19 = arith.constant dense<0.000000e+00> : vector<256xf32>
      %33 = vector.multi_reduction <add>, %32, %cst_19 [1] : vector<256x384xf32> to vector<256xf32>
      %34 = vector.shape_cast %33 : vector<256xf32> to vector<256x1xf32>
      %cst_20 = arith.constant 3.840000e+02 : f32
      %35 = vector.broadcast %cst_20 : f32 to vector<256x1xf32>
      %36 = arith.divf %34, %35 : vector<256x1xf32>
      %37 = vector.broadcast %27 : vector<256x1xf32> to vector<256x384xf32>
      %38 = arith.subf %23, %37 : vector<256x384xf32>
      %cst_21 = arith.constant 9.99999993E-9 : f32
      %39 = vector.broadcast %cst_21 : f32 to vector<256x1xf32>
      %40 = arith.addf %36, %39 : vector<256x1xf32>
      %41 = math.rsqrt %40 : vector<256x1xf32>
      %42 = vector.broadcast %41 : vector<256x1xf32> to vector<256x384xf32>
      %43 = arith.mulf %38, %42 : vector<256x384xf32>
      %44 = arith.truncf %43 : vector<256x384xf32> to vector<256x384xbf16>
      %c0_22 = arith.constant 0 : index
      %c0_23 = arith.constant 0 : index
      %45 = vector.load %arg6[%c0_22, %c0_23] : memref<256x384xbf16, #tpu.memory_space<vmem>>, vector<256x384xbf16>
      tpu.vector_store %arg6[%c0_22, %c0_23], %44 {strides = array<i32>} : memref<256x384xbf16, #tpu.memory_space<vmem>>, vector<256x384xbf16>,
      %cst_24 = arith.constant 0.000000e+00 : f32
      %46 = vector.broadcast %cst_24 : f32 to vector<256x384xf32>
      %c0_25 = arith.constant 0 : index
      %c0_26 = arith.constant 0 : index
      %47 = vector.load %arg7[%c0_25, %c0_26] : memref<256x384xf32, #tpu.memory_space<vmem>>, vector<256x384xf32>
      tpu.vector_store %arg7[%c0_25, %c0_26], %46 {strides = array<i32>} : memref<256x384xf32, #tpu.memory_space<vmem>>, vector<256x384xf32>,
    } else {
    }
    %c0 = arith.constant 0 : index
    %c0_1 = arith.constant 0 : index
    %3 = vector.load %arg6[%c0, %c0_1] : memref<256x384xbf16, #tpu.memory_space<vmem>>, vector<256x384xbf16>
    %c0_2 = arith.constant 0 : index
    %c0_3 = arith.constant 0 : index
    %4 = vector.load %arg3[%c0_2, %c0_3] : memref<384x512xbf16, #tpu.memory_space<vmem>>, vector<384x512xbf16>
    %cst = arith.constant dense<0.000000e+00> : vector<256x512xf32>
    %5 = tpu.matmul %3, %4, %cst {dimension_numbers = #tpu.dot_dimension_numbers<[1], [0], [0], [1], [0, 0, 1, 1], [], []>} : vector<256x384xbf16>, vector<384x512xbf16>, vector<256x512xf32> -> vector<256x512xf32>
    %cst_4 = arith.constant 5.000000e-01 : f32
    %6 = vector.broadcast %cst_4 : f32 to vector<256x512xf32>
    %7 = arith.mulf %6, %5 : vector<256x512xf32>
    %cst_5 = arith.constant 0.707106769 : f32
    %8 = vector.broadcast %cst_5 : f32 to vector<256x512xf32>
    %9 = arith.mulf %5, %8 : vector<256x512xf32>
    %10 = math.erf %9 : vector<256x512xf32>
    %cst_6 = arith.constant 1.000000e+00 : f32
    %11 = vector.broadcast %cst_6 : f32 to vector<256x512xf32>
    %12 = arith.addf %11, %10 : vector<256x512xf32>
    %13 = arith.mulf %7, %12 : vector<256x512xf32>
    %c0_7 = arith.constant 0 : index
    %c0_8 = arith.constant 0 : index
    %14 = vector.load %arg7[%c0_7, %c0_8] : memref<256x384xf32, #tpu.memory_space<vmem>>, vector<256x384xf32>
    %15 = arith.truncf %13 : vector<256x512xf32> to vector<256x512xbf16>
    %c0_9 = arith.constant 0 : index
    %c0_10 = arith.constant 0 : index
    %16 = vector.load %arg4[%c0_9, %c0_10] : memref<512x384xbf16, #tpu.memory_space<vmem>>, vector<512x384xbf16>
    %cst_11 = arith.constant dense<0.000000e+00> : vector<256x384xf32>
    %17 = tpu.matmul %15, %16, %cst_11 {dimension_numbers = #tpu.dot_dimension_numbers<[1], [0], [0], [1], [0, 0, 1, 1], [], []>} : vector<256x512xbf16>, vector<512x384xbf16>, vector<256x384xf32> -> vector<256x384xf32>
    %18 = arith.addf %14, %17 : vector<256x384xf32>
    %c0_12 = arith.constant 0 : index
    %c0_13 = arith.constant 0 : index
    %19 = vector.load %arg7[%c0_12, %c0_13] : memref<256x384xf32, #tpu.memory_space<vmem>>, vector<256x384xf32>
    tpu.vector_store %arg7[%c0_12, %c0_13], %18 {strides = array<i32>} : memref<256x384xf32, #tpu.memory_space<vmem>>, vector<256x384xf32>,
    %c2_i32 = arith.constant 2 : i32
    %20 = arith.cmpi eq, %arg1, %c2_i32 : i32
    %21 = arith.extui %20 : i1 to i32
    %c0_i32_14 = arith.constant 0 : i32
    %22 = arith.cmpi ne, %21, %c0_i32_14 : i32
    scf.if %22 {
      %c0_15 = arith.constant 0 : index
      %c0_16 = arith.constant 0 : index
      %23 = vector.load %arg7[%c0_15, %c0_16] : memref<256x384xf32, #tpu.memory_space<vmem>>, vector<256x384xf32>
      %c0_17 = arith.constant 0 : index
      %c0_18 = arith.constant 0 : index
      %24 = vector.load %arg5[%c0_17, %c0_18] : memref<256x384xf32, #tpu.memory_space<vmem>>, vector<256x384xf32>
      tpu.vector_store %arg5[%c0_17, %c0_18], %23 {strides = array<i32>} : memref<256x384xf32, #tpu.memory_space<vmem>>, vector<256x384xf32>,
    } else {
    }
    return
  }
  func.func @transform_0(%arg0: i32, %arg1: i32) -> (i32, i32) {
    %c0_i32 = arith.constant 0 : i32
    %c0_i32_0 = arith.constant 0 : i32
    return %arg0, %c0_i32 : i32, i32
  }
  func.func @transform_1(%arg0: i32, %arg1: i32) -> (i32, i32) {
    %c0_i32 = arith.constant 0 : i32
    %c0_i32_0 = arith.constant 0 : i32
    return %c0_i32, %arg1 : i32, i32
  }
  func.func @transform_2(%arg0: i32, %arg1: i32) -> (i32, i32) {
    %c0_i32 = arith.constant 0 : i32
    %c0_i32_0 = arith.constant 0 : i32
    return %arg1, %c0_i32 : i32, i32
  }
  func.func @transform_3(%arg0: i32, %arg1: i32) -> (i32, i32) {
    %c0_i32 = arith.constant 0 : i32
    %c0_i32_0 = arith.constant 0 : i32
    return %arg0, %c0_i32 : i32, i32
  }
}

</mosaic_0001>

<llo_original>
// kernel: tpu_custom_call.1
$region0: #{tpu_custom_call.1}
  #allocation0 [shape = 'u32[]', space=smem, size = 0x4, offset = 0x4, fixed_abs, tag = 'smem constant byte address 0x4 - core index']
  #allocation1 [shape = 'u32[144,128]{1,0:T(1,128)}', space=vmem, size = 0x12000, scoped, tag = 'internal scratch']
  #allocation2 [shape = 'bf16[256,384]{1,0:T(16,128)(2,1)}', space=vmem, size = 0x30000, scoped, tag = 'scratch operand']
  #allocation3 [shape = 'f32[256,384]{1,0:T(8,128)}', space=vmem, size = 0x60000, scoped, tag = 'scratch operand']
  %s0 = inlined_call_operand.hbm [shape: f32[1024,384], index: 0, kind: input, shape index: {}]
  %s1 = inlined_call_operand.hbm [shape: bf16[384,1536], index: 1, kind: input, shape index: {}]
  %s2 = inlined_call_operand.hbm [shape: bf16[1536,384], index: 2, kind: input, shape index: {}]
  %s3 = inlined_call_operand.hbm [shape: f32[1024,384], index: 3, kind: output, shape index: {}]
  %s4 = sld [smem:[#allocation0]]
  $region65: #{tpu_custom_call.1} parent=0
    _
  %s6 = ssub.s32 1, %s4
  %s7 = scalar_select 0, %s6, %s4
  $region1: #{tpu_custom_call.1} parent=0
    #allocation4 [shape = 'u8[786432]{0}', space=vmem, size = 0xc0000, scoped, tag = 'input window, operand 0']
    #allocation5 [shape = 's32[2]{0}', space=sflag, size = 0x8, scoped, tag = 'scoped memory for tpu_custom_call.1']
    #allocation6 [shape = 's32[2]{0}', space=sflag, size = 0x8, scoped, tag = 'scoped memory for tpu_custom_call.1']
    #allocation7 [shape = 'u8[786432]{0}', space=vmem, size = 0xc0000, scoped, tag = 'input window, operand 1']
    #allocation8 [shape = 's32[2]{0}', space=sflag, size = 0x8, scoped, tag = 'scoped memory for tpu_custom_call.1']
    #allocation9 [shape = 'u8[786432]{0}', space=vmem, size = 0xc0000, scoped, tag = 'input window, operand 2']
    #allocation10 [shape = 'u8[786432]{0}', space=vmem, size = 0xc0000, scoped, tag = 'output window, operand 0']
    %8 = vsyncpa [#allocation5], 0
    %s9 = scalar_lea.sflag [#allocation5], 1
    %10 = vsyncpa %s9, 0
    %11 = vsyncpa [#allocation8], 0
    %s12 = scalar_lea.sflag [#allocation8], 1
    %13 = vsyncpa %s12, 0
    %14 = vsyncpa [#allocation6], 0
    %s15 = scalar_lea.sflag [#allocation6], 1
    %16 = vsyncpa %s15, 0
    loop: start=0, step=1, limit=14
    $region2: #{tpu_custom_call.1} parent=1 // loop_pre_header
      _
    $region3: #{tpu_custom_call.1} parent=1 // loop_header
      %s18 = sphi 0, %s22
      %p19 = scmp.ge.s32.totalorder %s18, 14
      %s25 = sphi 0, %s37
      %s26 = sphi 0, %s33
      %s27 = sphi 0, %s25
      %s28 = sphi 0, %s26
      %s29 = sphi 0, %s27
      %s30 = sphi 0, %s28
      %s40 = sphi 0, %s42
      %s43 = sphi 0, %s40
      %s44 = sphi 0, %s43
      %s60 = sphi 0, %s44
      %s66 = sphi 0, %s68
      %s69 = sphi 0, %s66
      %s70 = sphi 0, %s69
      %s86 = sphi 0, %s70
      %s92 = sphi 0, %s94
      %s95 = sphi 0, %s92
      %s96 = sphi 0, %s95
      %s112 = sphi 0, %s96
      %s118 = sphi 0, %s120
      %s121 = sphi 0, %s118
      %s122 = sphi 0, %s121
      %s138 = sphi 0, %s122
    $region4: #{tpu_custom_call.1} parent=1 // loop_header_branch
      %21 = sbr.rel (%p19) target = $region8
    $region5: #{tpu_custom_call.1} parent=1 // loop_body
      %s23 = ssub.s32 %s18, 1
      %s24 = ssub.s32 %s18, 2
      %s31 = sadd.s32 1, %s26
      %p32 = scmp.ge.s32.totalorder %s31, 3
      %s33 = scalar_select %p32, 0, %s31
      %s34 = sadd.s32 1, %s25
      %s35 = scalar_select %p32, %s34, %s25
      %p36 = scmp.ge.s32.totalorder %s35, 4
      %s37 = scalar_select %p36, 0, %s35
      %s38 = ssub.s32 %s25, %s37
      %p39 = scmp.eq.s32.totalorder %s38, 0
      %s41 = sadd.s32 %s40, 1
      %s42 = scalar_select %p39, %s40, %s41
      %p45 = pneg %p39
      %p46 = scmp.eq.s32.totalorder %s18, 11
      %p47 = por %p45, %p46
      %p48 = scmp.ne.s32.totalorder %s40, %s43
      %p49 = scmp.eq.s32.totalorder %s18, 0
      %p50 = por %p48, %p49
      %p51 = scmp.ne.s32.totalorder %s40, %s43
      %p52 = scmp.eq.s32.totalorder %s23, 11
      %p53 = por %p51, %p52
      %p54 = scmp.ne.s32.totalorder %s43, %s44
      %p55 = scmp.eq.s32.totalorder %s23, 0
      %p56 = por %p54, %p55
      %p57 = scmp.ne.s32.totalorder %s43, %s44
      %p58 = scmp.eq.s32.totalorder %s24, 11
      %p59 = por %p57, %p58
      %p61 = scmp.ne.s32.totalorder %s44, %s60
      %p62 = scmp.eq.s32.totalorder %s24, 0
      %p63 = por %p61, %p62
      %s64 = ssub.s32 %s26, %s33
      %p65 = scmp.eq.s32.totalorder %s64, 0
      %s67 = sadd.s32 %s66, 1
      %s68 = scalar_select %p65, %s66, %s67
      %p71 = pneg %p65
      %p72 = scmp.eq.s32.totalorder %s18, 11
      %p73 = por %p71, %p72
      %p74 = scmp.ne.s32.totalorder %s66, %s69
      %p75 = scmp.eq.s32.totalorder %s18, 0
      %p76 = por %p74, %p75
      %p77 = scmp.ne.s32.totalorder %s66, %s69
      %p78 = scmp.eq.s32.totalorder %s23, 11
      %p79 = por %p77, %p78
      %p80 = scmp.ne.s32.totalorder %s69, %s70
      %p81 = scmp.eq.s32.totalorder %s23, 0
      %p82 = por %p80, %p81
      %p83 = scmp.ne.s32.totalorder %s69, %s70
      %p84 = scmp.eq.s32.totalorder %s24, 11
      %p85 = por %p83, %p84
      %p87 = scmp.ne.s32.totalorder %s70, %s86
      %p88 = scmp.eq.s32.totalorder %s24, 0
      %p89 = por %p87, %p88
      %s90 = ssub.s32 %s26, %s33
      %p91 = scmp.eq.s32.totalorder %s90, 0
      %s93 = sadd.s32 %s92, 1
      %s94 = scalar_select %p91, %s92, %s93
      %p97 = pneg %p91
      %p98 = scmp.eq.s32.totalorder %s18, 11
      %p99 = por %p97, %p98
      %p100 = scmp.ne.s32.totalorder %s92, %s95
      %p101 = scmp.eq.s32.totalorder %s18, 0
      %p102 = por %p100, %p101
      %p103 = scmp.ne.s32.totalorder %s92, %s95
      %p104 = scmp.eq.s32.totalorder %s23, 11
      %p105 = por %p103, %p104
      %p106 = scmp.ne.s32.totalorder %s95, %s96
      %p107 = scmp.eq.s32.totalorder %s23, 0
      %p108 = por %p106, %p107
      %p109 = scmp.ne.s32.totalorder %s95, %s96
      %p110 = scmp.eq.s32.totalorder %s24, 11
      %p111 = por %p109, %p110
      %p113 = scmp.ne.s32.totalorder %s96, %s112
      %p114 = scmp.eq.s32.totalorder %s24, 0
      %p115 = por %p113, %p114
      %s116 = ssub.s32 %s25, %s37
      %p117 = scmp.eq.s32.totalorder %s116, 0
      %s119 = sadd.s32 %s118, 1
      %s120 = scalar_select %p117, %s118, %s119
      %p123 = pneg %p117
      %p124 = scmp.eq.s32.totalorder %s18, 11
      %p125 = por %p123, %p124
      %p126 = scmp.ne.s32.totalorder %s118, %s121
      %p127 = scmp.eq.s32.totalorder %s18, 0
      %p128 = por %p126, %p127
      %p129 = scmp.ne.s32.totalorder %s118, %s121
      %p130 = scmp.eq.s32.totalorder %s23, 11
      %p131 = por %p129, %p130
      %p132 = scmp.ne.s32.totalorder %s121, %s122
      %p133 = scmp.eq.s32.totalorder %s23, 0
      %p134 = por %p132, %p133
      %p135 = scmp.ne.s32.totalorder %s121, %s122
      %p136 = scmp.eq.s32.totalorder %s24, 11
      %p137 = por %p135, %p136
      %p139 = scmp.ne.s32.totalorder %s122, %s138
      %p140 = scmp.eq.s32.totalorder %s24, 0
      %p141 = por %p139, %p140
      %p142 = scmp.le.s32.totalorder 1, %s18
      %p143 = scmp.lt.s32.totalorder %s18, 13
      %p144 = pnand %p142, %p143
      %p145 = pneg %p144
      // Predicated region
      $region9: #{tpu_custom_call.1} parent=5 // pred_check
        _
      $region10: #{tpu_custom_call.1} parent=5 // pred_check_branch
        %147 = sbr.rel (%p144) target = $region12
      $region11: #{tpu_custom_call.1} parent=5 // pred_region
        %s148 = ssub.s32 %s18, 1
      $region12: #{tpu_custom_call.1} parent=5 // pred_fallthru
        _
      %p149 = scmp.lt.s32.totalorder %s18, 12
      // Predicated region
      $region13: #{tpu_custom_call.1} parent=5 // pred_check
        %p150 = pneg %p149
      $region14: #{tpu_custom_call.1} parent=5 // pred_check_branch
        %152 = sbr.rel (%p150) target = $region16
      $region15: #{tpu_custom_call.1} parent=5 // pred_region
        // Predicated region
        $region17: #{tpu_custom_call.1} parent=15 // pred_check
          %p153 = pneg %p50
        $region18: #{tpu_custom_call.1} parent=15 // pred_check_branch
          %155 = sbr.rel (%p153) target = $region20
        $region19: #{tpu_custom_call.1} parent=15 // pred_region
          %s156 = sand.u32 %s40, 1
          %s157 = scalar_lea.sflag [#allocation5], %s156
          %s158 = sand.u32 %s40, 1
          %s159 = smul.addr %s158, 768
          %s160 = scalar_lea.vmem [#allocation4], %s159
          %s161 = smul.u32 32, %s25
          %s163 = ssub.s32 12288, 12288
          %164 = vsyncadd %s157, %s163
          %s165 = smul.addr %s161, 3
          %s166 = smul.addr %s165, 128
          %s167 = scalar_lea.hbm %s0, %s166
          %s168 = sshll.u32 %s160, 4
          %s169 = int_to_ptr.vmem [resolvable:$true] %s168
          %174 = dma.hbm_to_vmem [thread:$0]  %s167, 12288, %s169, %s157, 384, 384, 24
        $region20: #{tpu_custom_call.1} parent=15 // pred_fallthru
          _
        // Predicated region
        $region21: #{tpu_custom_call.1} parent=15 // pred_check
          %p175 = pneg %p76
        $region22: #{tpu_custom_call.1} parent=15 // pred_check_branch
          %177 = sbr.rel (%p175) target = $region24
        $region23: #{tpu_custom_call.1} parent=15 // pred_region
          %s178 = sand.u32 %s18, 1
          %s179 = scalar_lea.sflag [#allocation8], %s178
          %s180 = sand.u32 %s66, 1
          %s181 = smul.addr %s180, 768
          %s182 = scalar_lea.vmem [#allocation7], %s181
          %s183 = smul.u32 4, %s26
          %s185 = ssub.s32 12288, 12288
          %186 = vsyncadd %s179, %s185
          %s187 = smul.addr %s183, 64
          %s188 = scalar_lea.hbm %s1, %s187
          %s189 = sshll.u32 %s182, 4
          %s190 = int_to_ptr.vmem [resolvable:$true] %s189
          %195 = dma.hbm_to_vmem [thread:$0]  %s188, 12288, %s190, %s179, 768, 256, 16
        $region24: #{tpu_custom_call.1} parent=15 // pred_fallthru
          _
        // Predicated region
        $region25: #{tpu_custom_call.1} parent=15 // pred_check
          %p196 = pneg %p102
        $region26: #{tpu_custom_call.1} parent=15 // pred_check_branch
          %198 = sbr.rel (%p196) target = $region28
        $region27: #{tpu_custom_call.1} parent=15 // pred_region
          %s199 = sand.u32 %s18, 1
          %s200 = scalar_lea.sflag [#allocation8], %s199
          %s201 = sand.u32 %s92, 1
          %s202 = smul.addr %s201, 768
          %s203 = scalar_lea.vmem [#allocation9], %s202
          %s204 = smul.u32 64, %s26
          %s206 = ssub.s32 12288, 12288
          %207 = vsyncadd %s200, %s206
          %s208 = smul.addr %s204, 3
          %s209 = smul.addr %s208, 64
          %s210 = scalar_lea.hbm %s2, %s209
          %s211 = sshll.u32 %s203, 4
          %s212 = int_to_ptr.vmem [resolvable:$true] %s211
          %217 = dma.hbm_to_vmem [thread:$0]  %s210, 12288, %s212, %s200, 192, 192, 12
        $region28: #{tpu_custom_call.1} parent=15 // pred_fallthru
          _
      $region16: #{tpu_custom_call.1} parent=5 // pred_fallthru
        _
      %p218 = scmp.le.s32.totalorder 1, %s18
      %p219 = scmp.lt.s32.totalorder %s18, 13
      %p220 = pnand %p218, %p219
      %p221 = pneg %p220
      // Predicated region
      $region29: #{tpu_custom_call.1} parent=5 // pred_check
        _
      $region30: #{tpu_custom_call.1} parent=5 // pred_check_branch
        %223 = sbr.rel (%p220) target = $region32
      $region31: #{tpu_custom_call.1} parent=5 // pred_region
        %s224 = ssub.s32 %s18, 1
        %s225 = sand.u32 %s43, 1
        %s226 = scalar_lea.sflag [#allocation5], %s225
        %s227 = sand.u32 %s43, 1
        %s228 = smul.addr %s227, 768
        %s229 = scalar_lea.vmem [#allocation4], %s228
        // Predicated region
        $region33: #{tpu_custom_call.1} parent=31 // pred_check
          %p230 = pneg %p56
        $region34: #{tpu_custom_call.1} parent=31 // pred_check_branch
          %232 = sbr.rel (%p230) target = $region36
        $region35: #{tpu_custom_call.1} parent=31 // pred_region
          %233 = dma.done %s226, 12288
        $region36: #{tpu_custom_call.1} parent=31 // pred_fallthru
          _
        %s234 = sand.u32 %s23, 1
        %s235 = scalar_lea.sflag [#allocation8], %s234
        %s236 = sand.u32 %s69, 1
        %s237 = smul.addr %s236, 768
        %s238 = scalar_lea.vmem [#allocation7], %s237
        // Predicated region
        $region37: #{tpu_custom_call.1} parent=31 // pred_check
          %p239 = pneg %p82
        $region38: #{tpu_custom_call.1} parent=31 // pred_check_branch
          %241 = sbr.rel (%p239) target = $region40
        $region39: #{tpu_custom_call.1} parent=31 // pred_region
          %242 = dma.done %s235, 12288
        $region40: #{tpu_custom_call.1} parent=31 // pred_fallthru
          _
        %s243 = sand.u32 %s23, 1
        %s244 = scalar_lea.sflag [#allocation8], %s243
        %s245 = sand.u32 %s95, 1
        %s246 = smul.addr %s245, 768
        %s247 = scalar_lea.vmem [#allocation9], %s246
        // Predicated region
        $region41: #{tpu_custom_call.1} parent=31 // pred_check
          %p248 = pneg %p108
        $region42: #{tpu_custom_call.1} parent=31 // pred_check_branch
          %250 = sbr.rel (%p248) target = $region44
        $region43: #{tpu_custom_call.1} parent=31 // pred_region
          %251 = dma.done %s244, 12288
        $region44: #{tpu_custom_call.1} parent=31 // pred_fallthru
          _
        %s252 = sand.u32 %s43, 1
        %s253 = scalar_lea.sflag [#allocation5], %s252
        %s254 = sand.u32 %s43, 1
        %s255 = smul.addr %s254, 768
        %s256 = scalar_lea.vmem [#allocation4], %s255
        %p257 = pneg %p56
        %p258 = pneg %p53
        %s259 = sand.u32 %s23, 1
        %s260 = scalar_lea.sflag [#allocation8], %s259
        %s261 = sand.u32 %s69, 1
        %s262 = smul.addr %s261, 768
        %s263 = scalar_lea.vmem [#allocation7], %s262
        %p264 = pneg %p82
        %p265 = pneg %p79
        %s266 = sand.u32 %s23, 1
        %s267 = scalar_lea.sflag [#allocation8], %s266
        %s268 = sand.u32 %s95, 1
        %s269 = smul.addr %s268, 768
        %s270 = scalar_lea.vmem [#allocation9], %s269
        %p271 = pneg %p108
        %p272 = pneg %p105
        %p273 = pneg %p134
        %p274 = pneg %p131
        %s275 = sand.u32 %s121, 1
        %s276 = scalar_lea.sflag [#allocation6], %s275
        %s277 = sand.u32 %s121, 1
        %s278 = smul.addr %s277, 768
        %s279 = scalar_lea.vmem [#allocation10], %s278
        %s280 = smul.u32 32, %s27
        %s281 = smul.u32 4, %s28
        %s282 = smul.u32 64, %s28
        %s283 = smul.u32 32, %s27
        %p285 = scmp.eq.s32.totalorder %s28, 0
        // Predicated region
        $region45: #{tpu_custom_call.1} parent=31 // pred_check
          %p286 = pneg %p285
        $region46: #{tpu_custom_call.1} parent=31 // pred_check_branch
          %288 = sbr.rel (%p286) target = $region48
        $region47: #{tpu_custom_call.1} parent=31 // pred_region
          %v289 = vld [vmem:[%s229] sm:$0xff]
          %v290 = vld [vmem:[%s229 + $0x8] sm:$0xff]
          %v291 = vld [vmem:[%s229 + $0x10] sm:$0xff]
          %v292 = vld [vmem:[%s229 + $0x18] sm:$0xff]
          %v293 = vld [vmem:[%s229 + $0x20] sm:$0xff]
          %v294 = vld [vmem:[%s229 + $0x28] sm:$0xff]
          %v295 = vld [vmem:[%s229 + $0x30] sm:$0xff]
          %v296 = vld [vmem:[%s229 + $0x38] sm:$0xff]
          %v297 = vld [vmem:[%s229 + $0x40] sm:$0xff]
          %v298 = vld [vmem:[%s229 + $0x48] sm:$0xff]
          %v299 = vld [vmem:[%s229 + $0x50] sm:$0xff]
          %v300 = vld [vmem:[%s229 + $0x58] sm:$0xff]
          %v301 = vld [vmem:[%s229 + $0x60] sm:$0xff]
          %v302 = vld [vmem:[%s229 + $0x68] sm:$0xff]
          %v303 = vld [vmem:[%s229 + $0x70] sm:$0xff]
          %v304 = vld [vmem:[%s229 + $0x78] sm:$0xff]
          %v305 = vld [vmem:[%s229 + $0x80] sm:$0xff]
          %v306 = vld [vmem:[%s229 + $0x88] sm:$0xff]
          %v307 = vld [vmem:[%s229 + $0x90] sm:$0xff]
          %v308 = vld [vmem:[%s229 + $0x98] sm:$0xff]
          %v309 = vld [vmem:[%s229 + $0xa0] sm:$0xff]
          %v310 = vld [vmem:[%s229 + $0xa8] sm:$0xff]
          %v311 = vld [vmem:[%s229 + $0xb0] sm:$0xff]
          %v312 = vld [vmem:[%s229 + $0xb8] sm:$0xff]
          %v313 = vld [vmem:[%s229 + $0xc0] sm:$0xff]
          %v314 = vld [vmem:[%s229 + $0xc8] sm:$0xff]
          %v315 = vld [vmem:[%s229 + $0xd0] sm:$0xff]
          %v316 = vld [vmem:[%s229 + $0xd8] sm:$0xff]
          %v317 = vld [vmem:[%s229 + $0xe0] sm:$0xff]
          %v318 = vld [vmem:[%s229 + $0xe8] sm:$0xff]
          %v319 = vld [vmem:[%s229 + $0xf0] sm:$0xff]
          %v320 = vld [vmem:[%s229 + $0xf8] sm:$0xff]
          %v321 = vld [vmem:[%s229 + $0x100] sm:$0xff]
          %v322 = vld [vmem:[%s229 + $0x108] sm:$0xff]
          %v323 = vld [vmem:[%s229 + $0x110] sm:$0xff]
          %v324 = vld [vmem:[%s229 + $0x118] sm:$0xff]
          %v325 = vld [vmem:[%s229 + $0x120] sm:$0xff]
          %v326 = vld [vmem:[%s229 + $0x128] sm:$0xff]
          %v327 = vld [vmem:[%s229 + $0x130] sm:$0xff]
          %v328 = vld [vmem:[%s229 + $0x138] sm:$0xff]
          %v329 = vld [vmem:[%s229 + $0x140] sm:$0xff]
          %v330 = vld [vmem:[%s229 + $0x148] sm:$0xff]
          %v331 = vld [vmem:[%s229 + $0x150] sm:$0xff]
          %v332 = vld [vmem:[%s229 + $0x158] sm:$0xff]
          %v333 = vld [vmem:[%s229 + $0x160] sm:$0xff]
          %v334 = vld [vmem:[%s229 + $0x168] sm:$0xff]
          %v335 = vld [vmem:[%s229 + $0x170] sm:$0xff]
          %v336 = vld [vmem:[%s229 + $0x178] sm:$0xff]
          %v337 = vld [vmem:[%s229 + $0x180] sm:$0xff]
          %v338 = vld [vmem:[%s229 + $0x188] sm:$0xff]
          %v339 = vld [vmem:[%s229 + $0x190] sm:$0xff]
          %v340 = vld [vmem:[%s229 + $0x198] sm:$0xff]
          %v341 = vld [vmem:[%s229 + $0x1a0] sm:$0xff]
          %v342 = vld [vmem:[%s229 + $0x1a8] sm:$0xff]
          %v343 = vld [vmem:[%s229 + $0x1b0] sm:$0xff]
          %v344 = vld [vmem:[%s229 + $0x1b8] sm:$0xff]
          %v345 = vld [vmem:[%s229 + $0x1c0] sm:$0xff]
          %v346 = vld [vmem:[%s229 + $0x1c8] sm:$0xff]
          %v347 = vld [vmem:[%s229 + $0x1d0] sm:$0xff]
          %v348 = vld [vmem:[%s229 + $0x1d8] sm:$0xff]
          %v349 = vld [vmem:[%s229 + $0x1e0] sm:$0xff]
          %v350 = vld [vmem:[%s229 + $0x1e8] sm:$0xff]
          %v351 = vld [vmem:[%s229 + $0x1f0] sm:$0xff]
          %v352 = vld [vmem:[%s229 + $0x1f8] sm:$0xff]
          %v353 = vld [vmem:[%s229 + $0x200] sm:$0xff]
          %v354 = vld [vmem:[%s229 + $0x208] sm:$0xff]
          %v355 = vld [vmem:[%s229 + $0x210] sm:$0xff]
          %v356 = vld [vmem:[%s229 + $0x218] sm:$0xff]
          %v357 = vld [vmem:[%s229 + $0x220] sm:$0xff]
          %v358 = vld [vmem:[%s229 + $0x228] sm:$0xff]
          %v359 = vld [vmem:[%s229 + $0x230] sm:$0xff]
          %v360 = vld [vmem:[%s229 + $0x238] sm:$0xff]
          %v361 = vld [vmem:[%s229 + $0x240] sm:$0xff]
          %v362 = vld [vmem:[%s229 + $0x248] sm:$0xff]
          %v363 = vld [vmem:[%s229 + $0x250] sm:$0xff]
          %v364 = vld [vmem:[%s229 + $0x258] sm:$0xff]
          %v365 = vld [vmem:[%s229 + $0x260] sm:$0xff]
          %v366 = vld [vmem:[%s229 + $0x268] sm:$0xff]
          %v367 = vld [vmem:[%s229 + $0x270] sm:$0xff]
          %v368 = vld [vmem:[%s229 + $0x278] sm:$0xff]
          %v369 = vld [vmem:[%s229 + $0x280] sm:$0xff]
          %v370 = vld [vmem:[%s229 + $0x288] sm:$0xff]
          %v371 = vld [vmem:[%s229 + $0x290] sm:$0xff]
          %v372 = vld [vmem:[%s229 + $0x298] sm:$0xff]
          %v373 = vld [vmem:[%s229 + $0x2a0] sm:$0xff]
          %v374 = vld [vmem:[%s229 + $0x2a8] sm:$0xff]
          %v375 = vld [vmem:[%s229 + $0x2b0] sm:$0xff]
          %v376 = vld [vmem:[%s229 + $0x2b8] sm:$0xff]
          %v377 = vld [vmem:[%s229 + $0x2c0] sm:$0xff]
          %v378 = vld [vmem:[%s229 + $0x2c8] sm:$0xff]
          %v379 = vld [vmem:[%s229 + $0x2d0] sm:$0xff]
          %v380 = vld [vmem:[%s229 + $0x2d8] sm:$0xff]
          %v381 = vld [vmem:[%s229 + $0x2e0] sm:$0xff]
          %v382 = vld [vmem:[%s229 + $0x2e8] sm:$0xff]
          %v383 = vld [vmem:[%s229 + $0x2f0] sm:$0xff]
          %v384 = vld [vmem:[%s229 + $0x2f8] sm:$0xff]
          %v385 = vadd.f32 %v289, %v290
          %v386 = vadd.f32 %v385, %v291
          %387 = vadd.xlane.f32.xlu0 %v386
          %v388 = vpop.xlane.xlu0 %387
          %v389 = vadd.f32 %v292, %v293
          %v390 = vadd.f32 %v389, %v294
          %391 = vadd.xlane.f32.xlu0 %v390
          %v392 = vpop.xlane.xlu0 %391
          %v393 = vadd.f32 %v295, %v296
          %v394 = vadd.f32 %v393, %v297
          %395 = vadd.xlane.f32.xlu0 %v394
          %v396 = vpop.xlane.xlu0 %395
          %v397 = vadd.f32 %v298, %v299
          %v398 = vadd.f32 %v397, %v300
          %399 = vadd.xlane.f32.xlu0 %v398
          %v400 = vpop.xlane.xlu0 %399
          %v401 = vadd.f32 %v301, %v302
          %v402 = vadd.f32 %v401, %v303
          %403 = vadd.xlane.f32.xlu0 %v402
          %v404 = vpop.xlane.xlu0 %403
          %v405 = vadd.f32 %v304, %v305
          %v406 = vadd.f32 %v405, %v306
          %407 = vadd.xlane.f32.xlu0 %v406
          %v408 = vpop.xlane.xlu0 %407
          %v409 = vadd.f32 %v307, %v308
          %v410 = vadd.f32 %v409, %v309
          %411 = vadd.xlane.f32.xlu0 %v410
          %v412 = vpop.xlane.xlu0 %411
          %v413 = vadd.f32 %v310, %v311
          %v414 = vadd.f32 %v413, %v312
          %415 = vadd.xlane.f32.xlu0 %v414
          %v416 = vpop.xlane.xlu0 %415
          %v417 = vadd.f32 %v313, %v314
          %v418 = vadd.f32 %v417, %v315
          %419 = vadd.xlane.f32.xlu0 %v418
          %v420 = vpop.xlane.xlu0 %419
          %v421 = vadd.f32 %v316, %v317
          %v422 = vadd.f32 %v421, %v318
          %423 = vadd.xlane.f32.xlu0 %v422
          %v424 = vpop.xlane.xlu0 %423
          %v425 = vadd.f32 %v319, %v320
          %v426 = vadd.f32 %v425, %v321
          %427 = vadd.xlane.f32.xlu0 %v426
          %v428 = vpop.xlane.xlu0 %427
          %v429 = vadd.f32 %v322, %v323
          %v430 = vadd.f32 %v429, %v324
          %431 = vadd.xlane.f32.xlu0 %v430
          %v432 = vpop.xlane.xlu0 %431
          %v433 = vadd.f32 %v325, %v326
          %v434 = vadd.f32 %v433, %v327
          %435 = vadd.xlane.f32.xlu0 %v434
          %v436 = vpop.xlane.xlu0 %435
          %v437 = vadd.f32 %v328, %v329
          %v438 = vadd.f32 %v437, %v330
          %439 = vadd.xlane.f32.xlu0 %v438
          %v440 = vpop.xlane.xlu0 %439
          %v441 = vadd.f32 %v331, %v332
          %v442 = vadd.f32 %v441, %v333
          %443 = vadd.xlane.f32.xlu0 %v442
          %v444 = vpop.xlane.xlu0 %443
          %v445 = vadd.f32 %v334, %v335
          %v446 = vadd.f32 %v445, %v336
          %447 = vadd.xlane.f32.xlu0 %v446
          %v448 = vpop.xlane.xlu0 %447
          %v449 = vadd.f32 %v337, %v338
          %v450 = vadd.f32 %v449, %v339
          %451 = vadd.xlane.f32.xlu0 %v450
          %v452 = vpop.xlane.xlu0 %451
          %v453 = vadd.f32 %v340, %v341
          %v454 = vadd.f32 %v453, %v342
          %455 = vadd.xlane.f32.xlu0 %v454
          %v456 = vpop.xlane.xlu0 %455
          %v457 = vadd.f32 %v343, %v344
          %v458 = vadd.f32 %v457, %v345
          %459 = vadd.xlane.f32.xlu0 %v458
          %v460 = vpop.xlane.xlu0 %459
          %v461 = vadd.f32 %v346, %v347
          %v462 = vadd.f32 %v461, %v348
          %463 = vadd.xlane.f32.xlu0 %v462
          %v464 = vpop.xlane.xlu0 %463
          %v465 = vadd.f32 %v349, %v350
          %v466 = vadd.f32 %v465, %v351
          %467 = vadd.xlane.f32.xlu0 %v466
          %v468 = vpop.xlane.xlu0 %467
          %v469 = vadd.f32 %v352, %v353
          %v470 = vadd.f32 %v469, %v354
          %471 = vadd.xlane.f32.xlu0 %v470
          %v472 = vpop.xlane.xlu0 %471
          %v473 = vadd.f32 %v355, %v356
          %v474 = vadd.f32 %v473, %v357
          %475 = vadd.xlane.f32.xlu0 %v474
          %v476 = vpop.xlane.xlu0 %475
          %v477 = vadd.f32 %v358, %v359
          %v478 = vadd.f32 %v477, %v360
          %479 = vadd.xlane.f32.xlu0 %v478
          %v480 = vpop.xlane.xlu0 %479
          %v481 = vadd.f32 %v361, %v362
          %v482 = vadd.f32 %v481, %v363
          %483 = vadd.xlane.f32.xlu0 %v482
          %v484 = vpop.xlane.xlu0 %483
          %v485 = vadd.f32 %v364, %v365
          %v486 = vadd.f32 %v485, %v366
          %487 = vadd.xlane.f32.xlu0 %v486
          %v488 = vpop.xlane.xlu0 %487
          %v489 = vadd.f32 %v367, %v368
          %v490 = vadd.f32 %v489, %v369
          %491 = vadd.xlane.f32.xlu0 %v490
          %v492 = vpop.xlane.xlu0 %491
          %v493 = vadd.f32 %v370, %v371
          %v494 = vadd.f32 %v493, %v372
          %495 = vadd.xlane.f32.xlu0 %v494
          %v496 = vpop.xlane.xlu0 %495
          %v497 = vadd.f32 %v373, %v374
          %v498 = vadd.f32 %v497, %v375
          %499 = vadd.xlane.f32.xlu0 %v498
          %v500 = vpop.xlane.xlu0 %499
          %v501 = vadd.f32 %v376, %v377
          %v502 = vadd.f32 %v501, %v378
          %503 = vadd.xlane.f32.xlu0 %v502
          %v504 = vpop.xlane.xlu0 %503
          %v505 = vadd.f32 %v379, %v380
          %v506 = vadd.f32 %v505, %v381
          %507 = vadd.xlane.f32.xlu0 %v506
          %v508 = vpop.xlane.xlu0 %507
          %v509 = vadd.f32 %v382, %v383
          %v510 = vadd.f32 %v509, %v384
          %511 = vadd.xlane.f32.xlu0 %v510
          %v512 = vpop.xlane.xlu0 %511
          %v513 = vrcp.pop 384.0
          %v514 = vmul.f32 %v388, %v513
          %v515 = vmul.f32 %v392, %v513
          %v516 = vmul.f32 %v396, %v513
          %v517 = vmul.f32 %v400, %v513
          %v518 = vmul.f32 %v404, %v513
          %v519 = vmul.f32 %v408, %v513
          %v520 = vmul.f32 %v412, %v513
          %v521 = vmul.f32 %v416, %v513
          %v522 = vmul.f32 %v420, %v513
          %v523 = vmul.f32 %v424, %v513
          %v524 = vmul.f32 %v428, %v513
          %v525 = vmul.f32 %v432, %v513
          %v526 = vmul.f32 %v436, %v513
          %v527 = vmul.f32 %v440, %v513
          %v528 = vmul.f32 %v444, %v513
          %v529 = vmul.f32 %v448, %v513
          %v530 = vmul.f32 %v452, %v513
          %v531 = vmul.f32 %v456, %v513
          %v532 = vmul.f32 %v460, %v513
          %v533 = vmul.f32 %v464, %v513
          %v534 = vmul.f32 %v468, %v513
          %v535 = vmul.f32 %v472, %v513
          %v536 = vmul.f32 %v476, %v513
          %v537 = vmul.f32 %v480, %v513
          %v538 = vmul.f32 %v484, %v513
          %v539 = vmul.f32 %v488, %v513
          %v540 = vmul.f32 %v492, %v513
          %v541 = vmul.f32 %v496, %v513
          %v542 = vmul.f32 %v500, %v513
          %v543 = vmul.f32 %v504, %v513
          %v544 = vmul.f32 %v508, %v513
          %v545 = vmul.f32 %v512, %v513
          %v546 = vsub.f32 %v289, %v514
          %v547 = vsub.f32 %v290, %v514
          %v548 = vsub.f32 %v291, %v514
          %v549 = vsub.f32 %v292, %v515
          %v550 = vsub.f32 %v293, %v515
          %v551 = vsub.f32 %v294, %v515
          %v552 = vsub.f32 %v295, %v516
          %v553 = vsub.f32 %v296, %v516
          %v554 = vsub.f32 %v297, %v516
          %v555 = vsub.f32 %v298, %v517
          %v556 = vsub.f32 %v299, %v517
          %v557 = vsub.f32 %v300, %v517
          %v558 = vsub.f32 %v301, %v518
          %v559 = vsub.f32 %v302, %v518
          %v560 = vsub.f32 %v303, %v518
          %v561 = vsub.f32 %v304, %v519
          %v562 = vsub.f32 %v305, %v519
          %v563 = vsub.f32 %v306, %v519
          %v564 = vsub.f32 %v307, %v520
          %v565 = vsub.f32 %v308, %v520
          %v566 = vsub.f32 %v309, %v520
          %v567 = vsub.f32 %v310, %v521
          %v568 = vsub.f32 %v311, %v521
          %v569 = vsub.f32 %v312, %v521
          %v570 = vsub.f32 %v313, %v522
          %v571 = vsub.f32 %v314, %v522
          %v572 = vsub.f32 %v315, %v522
          %v573 = vsub.f32 %v316, %v523
          %v574 = vsub.f32 %v317, %v523
          %v575 = vsub.f32 %v318, %v523
          %v576 = vsub.f32 %v319, %v524
          %v577 = vsub.f32 %v320, %v524
          %v578 = vsub.f32 %v321, %v524
          %v579 = vsub.f32 %v322, %v525
          %v580 = vsub.f32 %v323, %v525
          %v581 = vsub.f32 %v324, %v525
          %v582 = vsub.f32 %v325, %v526
          %v583 = vsub.f32 %v326, %v526
          %v584 = vsub.f32 %v327, %v526
          %v585 = vsub.f32 %v328, %v527
          %v586 = vsub.f32 %v329, %v527
          %v587 = vsub.f32 %v330, %v527
          %v588 = vsub.f32 %v331, %v528
          %v589 = vsub.f32 %v332, %v528
          %v590 = vsub.f32 %v333, %v528
          %v591 = vsub.f32 %v334, %v529
          %v592 = vsub.f32 %v335, %v529
          %v593 = vsub.f32 %v336, %v529
          %v594 = vsub.f32 %v337, %v530
          %v595 = vsub.f32 %v338, %v530
          %v596 = vsub.f32 %v339, %v530
          %v597 = vsub.f32 %v340, %v531
          %v598 = vsub.f32 %v341, %v531
          %v599 = vsub.f32 %v342, %v531
          %v600 = vsub.f32 %v343, %v532
          %v601 = vsub.f32 %v344, %v532
          %v602 = vsub.f32 %v345, %v532
          %v603 = vsub.f32 %v346, %v533
          %v604 = vsub.f32 %v347, %v533
          %v605 = vsub.f32 %v348, %v533
          %v606 = vsub.f32 %v349, %v534
          %v607 = vsub.f32 %v350, %v534
          %v608 = vsub.f32 %v351, %v534
          %v609 = vsub.f32 %v352, %v535
          %v610 = vsub.f32 %v353, %v535
          %v611 = vsub.f32 %v354, %v535
          %v612 = vsub.f32 %v355, %v536
          %v613 = vsub.f32 %v356, %v536
          %v614 = vsub.f32 %v357, %v536
          %v615 = vsub.f32 %v358, %v537
          %v616 = vsub.f32 %v359, %v537
          %v617 = vsub.f32 %v360, %v537
          %v618 = vsub.f32 %v361, %v538
          %v619 = vsub.f32 %v362, %v538
          %v620 = vsub.f32 %v363, %v538
          %v621 = vsub.f32 %v364, %v539
          %v622 = vsub.f32 %v365, %v539
          %v623 = vsub.f32 %v366, %v539
          %v624 = vsub.f32 %v367, %v540
          %v625 = vsub.f32 %v368, %v540
          %v626 = vsub.f32 %v369, %v540
          %v627 = vsub.f32 %v370, %v541
          %v628 = vsub.f32 %v371, %v541
          %v629 = vsub.f32 %v372, %v541
          %v630 = vsub.f32 %v373, %v542
          %v631 = vsub.f32 %v374, %v542
          %v632 = vsub.f32 %v375, %v542
          %v633 = vsub.f32 %v376, %v543
          %v634 = vsub.f32 %v377, %v543
          %v635 = vsub.f32 %v378, %v543
          %v636 = vsub.f32 %v379, %v544
          %v637 = vsub.f32 %v380, %v544
          %v638 = vsub.f32 %v381, %v544
          %v639 = vsub.f32 %v382, %v545
          %v640 = vsub.f32 %v383, %v545
          %v641 = vsub.f32 %v384, %v545
          %v642 = vmul.f32 %v546, %v546
          %v643 = vmul.f32 %v547, %v547
          %v644 = vmul.f32 %v548, %v548
          %v645 = vmul.f32 %v549, %v549
          %v646 = vmul.f32 %v550, %v550
          %v647 = vmul.f32 %v551, %v551
          %v648 = vmul.f32 %v552, %v552
          %v649 = vmul.f32 %v553, %v553
          %v650 = vmul.f32 %v554, %v554
          %v651 = vmul.f32 %v555, %v555
          %v652 = vmul.f32 %v556, %v556
          %v653 = vmul.f32 %v557, %v557
          %v654 = vmul.f32 %v558, %v558
          %v655 = vmul.f32 %v559, %v559
          %v656 = vmul.f32 %v560, %v560
          %v657 = vmul.f32 %v561, %v561
          %v658 = vmul.f32 %v562, %v562
          %v659 = vmul.f32 %v563, %v563
          %v660 = vmul.f32 %v564, %v564
          %v661 = vmul.f32 %v565, %v565
          %v662 = vmul.f32 %v566, %v566
          %v663 = vmul.f32 %v567, %v567
          %v664 = vmul.f32 %v568, %v568
          %v665 = vmul.f32 %v569, %v569
          %v666 = vmul.f32 %v570, %v570
          %v667 = vmul.f32 %v571, %v571
          %v668 = vmul.f32 %v572, %v572
          %v669 = vmul.f32 %v573, %v573
          %v670 = vmul.f32 %v574, %v574
          %v671 = vmul.f32 %v575, %v575
          %v672 = vmul.f32 %v576, %v576
          %v673 = vmul.f32 %v577, %v577
          %v674 = vmul.f32 %v578, %v578
          %v675 = vmul.f32 %v579, %v579
          %v676 = vmul.f32 %v580, %v580
          %v677 = vmul.f32 %v581, %v581
          %v678 = vmul.f32 %v582, %v582
          %v679 = vmul.f32 %v583, %v583
          %v680 = vmul.f32 %v584, %v584
          %v681 = vmul.f32 %v585, %v585
          %v682 = vmul.f32 %v586, %v586
          %v683 = vmul.f32 %v587, %v587
          %v684 = vmul.f32 %v588, %v588
          %v685 = vmul.f32 %v589, %v589
          %v686 = vmul.f32 %v590, %v590
          %v687 = vmul.f32 %v591, %v591
          %v688 = vmul.f32 %v592, %v592
          %v689 = vmul.f32 %v593, %v593
          %v690 = vmul.f32 %v594, %v594
          %v691 = vmul.f32 %v595, %v595
          %v692 = vmul.f32 %v596, %v596
          %v693 = vmul.f32 %v597, %v597
          %v694 = vmul.f32 %v598, %v598
          %v695 = vmul.f32 %v599, %v599
          %v696 = vmul.f32 %v600, %v600
          %v697 = vmul.f32 %v601, %v601
          %v698 = vmul.f32 %v602, %v602
          %v699 = vmul.f32 %v603, %v603
          %v700 = vmul.f32 %v604, %v604
          %v701 = vmul.f32 %v605, %v605
          %v702 = vmul.f32 %v606, %v606
          %v703 = vmul.f32 %v607, %v607
          %v704 = vmul.f32 %v608, %v608
          %v705 = vmul.f32 %v609, %v609
          %v706 = vmul.f32 %v610, %v610
          %v707 = vmul.f32 %v611, %v611
          %v708 = vmul.f32 %v612, %v612
          %v709 = vmul.f32 %v613, %v613
          %v710 = vmul.f32 %v614, %v614
          %v711 = vmul.f32 %v615, %v615
          %v712 = vmul.f32 %v616, %v616
          %v713 = vmul.f32 %v617, %v617
          %v714 = vmul.f32 %v618, %v618
          %v715 = vmul.f32 %v619, %v619
          %v716 = vmul.f32 %v620, %v620
          %v717 = vmul.f32 %v621, %v621
          %v718 = vmul.f32 %v622, %v622
          %v719 = vmul.f32 %v623, %v623
          %v720 = vmul.f32 %v624, %v624
          %v721 = vmul.f32 %v625, %v625
          %v722 = vmul.f32 %v626, %v626
          %v723 = vmul.f32 %v627, %v627
          %v724 = vmul.f32 %v628, %v628
          %v725 = vmul.f32 %v629, %v629
          %v726 = vmul.f32 %v630, %v630
          %v727 = vmul.f32 %v631, %v631
          %v728 = vmul.f32 %v632, %v632
          %v729 = vmul.f32 %v633, %v633
          %v730 = vmul.f32 %v634, %v634
          %v731 = vmul.f32 %v635, %v635
          %v732 = vmul.f32 %v636, %v636
          %v733 = vmul.f32 %v637, %v637
          %v734 = vmul.f32 %v638, %v638
          %v735 = vmul.f32 %v639, %v639
          %v736 = vmul.f32 %v640, %v640
          %v737 = vmul.f32 %v641, %v641
          %v738 = vadd.f32 %v642, %v643
          %v739 = vadd.f32 %v738, %v644
          %740 = vadd.xlane.f32.xlu0 %v739
          %v741 = vpop.xlane.xlu0 %740
          %v742 = vadd.f32 %v645, %v646
          %v743 = vadd.f32 %v742, %v647
          %744 = vadd.xlane.f32.xlu0 %v743
          %v745 = vpop.xlane.xlu0 %744
          %v746 = vadd.f32 %v648, %v649
          %v747 = vadd.f32 %v746, %v650
          %748 = vadd.xlane.f32.xlu0 %v747
          %v749 = vpop.xlane.xlu0 %748
          %v750 = vadd.f32 %v651, %v652
          %v751 = vadd.f32 %v750, %v653
          %752 = vadd.xlane.f32.xlu0 %v751
          %v753 = vpop.xlane.xlu0 %752
          %v754 = vadd.f32 %v654, %v655
          %v755 = vadd.f32 %v754, %v656
          %756 = vadd.xlane.f32.xlu0 %v755
          %v757 = vpop.xlane.xlu0 %756
          %v758 = vadd.f32 %v657, %v658
          %v759 = vadd.f32 %v758, %v659
          %760 = vadd.xlane.f32.xlu0 %v759
          %v761 = vpop.xlane.xlu0 %760
          %v762 = vadd.f32 %v660, %v661
          %v763 = vadd.f32 %v762, %v662
          %764 = vadd.xlane.f32.xlu0 %v763
          %v765 = vpop.xlane.xlu0 %764
          %v766 = vadd.f32 %v663, %v664
          %v767 = vadd.f32 %v766, %v665
          %768 = vadd.xlane.f32.xlu0 %v767
          %v769 = vpop.xlane.xlu0 %768
          %v770 = vadd.f32 %v666, %v667
          %v771 = vadd.f32 %v770, %v668
          %772 = vadd.xlane.f32.xlu0 %v771
          %v773 = vpop.xlane.xlu0 %772
          %v774 = vadd.f32 %v669, %v670
          %v775 = vadd.f32 %v774, %v671
          %776 = vadd.xlane.f32.xlu0 %v775
          %v777 = vpop.xlane.xlu0 %776
          %v778 = vadd.f32 %v672, %v673
          %v779 = vadd.f32 %v778, %v674
          %780 = vadd.xlane.f32.xlu0 %v779
          %v781 = vpop.xlane.xlu0 %780
          %v782 = vadd.f32 %v675, %v676
          %v783 = vadd.f32 %v782, %v677
          %784 = vadd.xlane.f32.xlu0 %v783
          %v785 = vpop.xlane.xlu0 %784
          %v786 = vadd.f32 %v678, %v679
          %v787 = vadd.f32 %v786, %v680
          %788 = vadd.xlane.f32.xlu0 %v787
          %v789 = vpop.xlane.xlu0 %788
          %v790 = vadd.f32 %v681, %v682
          %v791 = vadd.f32 %v790, %v683
          %792 = vadd.xlane.f32.xlu0 %v791
          %v793 = vpop.xlane.xlu0 %792
          %v794 = vadd.f32 %v684, %v685
          %v795 = vadd.f32 %v794, %v686
          %796 = vadd.xlane.f32.xlu0 %v795
          %v797 = vpop.xlane.xlu0 %796
          %v798 = vadd.f32 %v687, %v688
          %v799 = vadd.f32 %v798, %v689
          %800 = vadd.xlane.f32.xlu0 %v799
          %v801 = vpop.xlane.xlu0 %800
          %v802 = vadd.f32 %v690, %v691
          %v803 = vadd.f32 %v802, %v692
          %804 = vadd.xlane.f32.xlu0 %v803
          %v805 = vpop.xlane.xlu0 %804
          %v806 = vadd.f32 %v693, %v694
          %v807 = vadd.f32 %v806, %v695
          %808 = vadd.xlane.f32.xlu0 %v807
          %v809 = vpop.xlane.xlu0 %808
          %v810 = vadd.f32 %v696, %v697
          %v811 = vadd.f32 %v810, %v698
          %812 = vadd.xlane.f32.xlu0 %v811
          %v813 = vpop.xlane.xlu0 %812
          %v814 = vadd.f32 %v699, %v700
          %v815 = vadd.f32 %v814, %v701
          %816 = vadd.xlane.f32.xlu0 %v815
          %v817 = vpop.xlane.xlu0 %816
          %v818 = vadd.f32 %v702, %v703
          %v819 = vadd.f32 %v818, %v704
          %820 = vadd.xlane.f32.xlu0 %v819
          %v821 = vpop.xlane.xlu0 %820
          %v822 = vadd.f32 %v705, %v706
          %v823 = vadd.f32 %v822, %v707
          %824 = vadd.xlane.f32.xlu0 %v823
          %v825 = vpop.xlane.xlu0 %824
          %v826 = vadd.f32 %v708, %v709
          %v827 = vadd.f32 %v826, %v710
          %828 = vadd.xlane.f32.xlu0 %v827
          %v829 = vpop.xlane.xlu0 %828
          %v830 = vadd.f32 %v711, %v712
          %v831 = vadd.f32 %v830, %v713
          %832 = vadd.xlane.f32.xlu0 %v831
          %v833 = vpop.xlane.xlu0 %832
          %v834 = vadd.f32 %v714, %v715
          %v835 = vadd.f32 %v834, %v716
          %836 = vadd.xlane.f32.xlu0 %v835
          %v837 = vpop.xlane.xlu0 %836
          %v838 = vadd.f32 %v717, %v718
          %v839 = vadd.f32 %v838, %v719
          %840 = vadd.xlane.f32.xlu0 %v839
          %v841 = vpop.xlane.xlu0 %840
          %v842 = vadd.f32 %v720, %v721
          %v843 = vadd.f32 %v842, %v722
          %844 = vadd.xlane.f32.xlu0 %v843
          %v845 = vpop.xlane.xlu0 %844
          %v846 = vadd.f32 %v723, %v724
          %v847 = vadd.f32 %v846, %v725
          %848 = vadd.xlane.f32.xlu0 %v847
          %v849 = vpop.xlane.xlu0 %848
          %v850 = vadd.f32 %v726, %v727
          %v851 = vadd.f32 %v850, %v728
          %852 = vadd.xlane.f32.xlu0 %v851
          %v853 = vpop.xlane.xlu0 %852
          %v854 = vadd.f32 %v729, %v730
          %v855 = vadd.f32 %v854, %v731
          %856 = vadd.xlane.f32.xlu0 %v855
          %v857 = vpop.xlane.xlu0 %856
          %v858 = vadd.f32 %v732, %v733
          %v859 = vadd.f32 %v858, %v734
          %860 = vadd.xlane.f32.xlu0 %v859
          %v861 = vpop.xlane.xlu0 %860
          %v862 = vadd.f32 %v735, %v736
          %v863 = vadd.f32 %v862, %v737
          %864 = vadd.xlane.f32.xlu0 %v863
          %v865 = vpop.xlane.xlu0 %864
          %v866 = vmul.f32 %v741, %v513
          %v867 = vmul.f32 %v745, %v513
          %v868 = vmul.f32 %v749, %v513
          %v869 = vmul.f32 %v753, %v513
          %v870 = vmul.f32 %v757, %v513
          %v871 = vmul.f32 %v761, %v513
          %v872 = vmul.f32 %v765, %v513
          %v873 = vmul.f32 %v769, %v513
          %v874 = vmul.f32 %v773, %v513
          %v875 = vmul.f32 %v777, %v513
          %v876 = vmul.f32 %v781, %v513
          %v877 = vmul.f32 %v785, %v513
          %v878 = vmul.f32 %v789, %v513
          %v879 = vmul.f32 %v793, %v513
          %v880 = vmul.f32 %v797, %v513
          %v881 = vmul.f32 %v801, %v513
          %v882 = vmul.f32 %v805, %v513
          %v883 = vmul.f32 %v809, %v513
          %v884 = vmul.f32 %v813, %v513
          %v885 = vmul.f32 %v817, %v513
          %v886 = vmul.f32 %v821, %v513
          %v887 = vmul.f32 %v825, %v513
          %v888 = vmul.f32 %v829, %v513
          %v889 = vmul.f32 %v833, %v513
          %v890 = vmul.f32 %v837, %v513
          %v891 = vmul.f32 %v841, %v513
          %v892 = vmul.f32 %v845, %v513
          %v893 = vmul.f32 %v849, %v513
          %v894 = vmul.f32 %v853, %v513
          %v895 = vmul.f32 %v857, %v513
          %v896 = vmul.f32 %v861, %v513
          %v897 = vmul.f32 %v865, %v513
          %v898 = vadd.f32 %v866, 1e-08
          %v899 = vadd.f32 %v867, 1e-08
          %v900 = vadd.f32 %v868, 1e-08
          %v901 = vadd.f32 %v869, 1e-08
          %v902 = vadd.f32 %v870, 1e-08
          %v903 = vadd.f32 %v871, 1e-08
          %v904 = vadd.f32 %v872, 1e-08
          %v905 = vadd.f32 %v873, 1e-08
          %v906 = vadd.f32 %v874, 1e-08
          %v907 = vadd.f32 %v875, 1e-08
          %v908 = vadd.f32 %v876, 1e-08
          %v909 = vadd.f32 %v877, 1e-08
          %v910 = vadd.f32 %v878, 1e-08
          %v911 = vadd.f32 %v879, 1e-08
          %v912 = vadd.f32 %v880, 1e-08
          %v913 = vadd.f32 %v881, 1e-08
          %v914 = vadd.f32 %v882, 1e-08
          %v915 = vadd.f32 %v883, 1e-08
          %v916 = vadd.f32 %v884, 1e-08
          %v917 = vadd.f32 %v885, 1e-08
          %v918 = vadd.f32 %v886, 1e-08
          %v919 = vadd.f32 %v887, 1e-08
          %v920 = vadd.f32 %v888, 1e-08
          %v921 = vadd.f32 %v889, 1e-08
          %v922 = vadd.f32 %v890, 1e-08
          %v923 = vadd.f32 %v891, 1e-08
          %v924 = vadd.f32 %v892, 1e-08
          %v925 = vadd.f32 %v893, 1e-08
          %v926 = vadd.f32 %v894, 1e-08
          %v927 = vadd.f32 %v895, 1e-08
          %v928 = vadd.f32 %v896, 1e-08
          %v929 = vadd.f32 %v897, 1e-08
          %v930 = vrsqrt.pop %v898
          %v931 = vrsqrt.pop %v899
          %v932 = vrsqrt.pop %v900
          %v933 = vrsqrt.pop %v901
          %v934 = vrsqrt.pop %v902
          %v935 = vrsqrt.pop %v903
          %v936 = vrsqrt.pop %v904
          %v937 = vrsqrt.pop %v905
          %v938 = vrsqrt.pop %v906
          %v939 = vrsqrt.pop %v907
          %v940 = vrsqrt.pop %v908
          %v941 = vrsqrt.pop %v909
          %v942 = vrsqrt.pop %v910
          %v943 = vrsqrt.pop %v911
          %v944 = vrsqrt.pop %v912
          %v945 = vrsqrt.pop %v913
          %v946 = vrsqrt.pop %v914
          %v947 = vrsqrt.pop %v915
          %v948 = vrsqrt.pop %v916
          %v949 = vrsqrt.pop %v917
          %v950 = vrsqrt.pop %v918
          %v951 = vrsqrt.pop %v919
          %v952 = vrsqrt.pop %v920
          %v953 = vrsqrt.pop %v921
          %v954 = vrsqrt.pop %v922
          %v955 = vrsqrt.pop %v923
          %v956 = vrsqrt.pop %v924
          %v957 = vrsqrt.pop %v925
          %v958 = vrsqrt.pop %v926
          %v959 = vrsqrt.pop %v927
          %v960 = vrsqrt.pop %v928
          %v961 = vrsqrt.pop %v929
          %v962 = vmul.f32 %v546, %v930
          %v963 = vmul.f32 %v547, %v930
          %v964 = vmul.f32 %v548, %v930
          %v965 = vmul.f32 %v549, %v931
          %v966 = vmul.f32 %v550, %v931
          %v967 = vmul.f32 %v551, %v931
          %v968 = vmul.f32 %v552, %v932
          %v969 = vmul.f32 %v553, %v932
          %v970 = vmul.f32 %v554, %v932
          %v971 = vmul.f32 %v555, %v933
          %v972 = vmul.f32 %v556, %v933
          %v973 = vmul.f32 %v557, %v933
          %v974 = vmul.f32 %v558, %v934
          %v975 = vmul.f32 %v559, %v934
          %v976 = vmul.f32 %v560, %v934
          %v977 = vmul.f32 %v561, %v935
          %v978 = vmul.f32 %v562, %v935
          %v979 = vmul.f32 %v563, %v935
          %v980 = vmul.f32 %v564, %v936
          %v981 = vmul.f32 %v565, %v936
          %v982 = vmul.f32 %v566, %v936
          %v983 = vmul.f32 %v567, %v937
          %v984 = vmul.f32 %v568, %v937
          %v985 = vmul.f32 %v569, %v937
          %v986 = vmul.f32 %v570, %v938
          %v987 = vmul.f32 %v571, %v938
          %v988 = vmul.f32 %v572, %v938
          %v989 = vmul.f32 %v573, %v939
          %v990 = vmul.f32 %v574, %v939
          %v991 = vmul.f32 %v575, %v939
          %v992 = vmul.f32 %v576, %v940
          %v993 = vmul.f32 %v577, %v940
          %v994 = vmul.f32 %v578, %v940
          %v995 = vmul.f32 %v579, %v941
          %v996 = vmul.f32 %v580, %v941
          %v997 = vmul.f32 %v581, %v941
          %v998 = vmul.f32 %v582, %v942
          %v999 = vmul.f32 %v583, %v942
          %v1000 = vmul.f32 %v584, %v942
          %v1001 = vmul.f32 %v585, %v943
          %v1002 = vmul.f32 %v586, %v943
          %v1003 = vmul.f32 %v587, %v943
          %v1004 = vmul.f32 %v588, %v944
          %v1005 = vmul.f32 %v589, %v944
          %v1006 = vmul.f32 %v590, %v944
          %v1007 = vmul.f32 %v591, %v945
          %v1008 = vmul.f32 %v592, %v945
          %v1009 = vmul.f32 %v593, %v945
          %v1010 = vmul.f32 %v594, %v946
          %v1011 = vmul.f32 %v595, %v946
          %v1012 = vmul.f32 %v596, %v946
          %v1013 = vmul.f32 %v597, %v947
          %v1014 = vmul.f32 %v598, %v947
          %v1015 = vmul.f32 %v599, %v947
          %v1016 = vmul.f32 %v600, %v948
          %v1017 = vmul.f32 %v601, %v948
          %v1018 = vmul.f32 %v602, %v948
          %v1019 = vmul.f32 %v603, %v949
          %v1020 = vmul.f32 %v604, %v949
          %v1021 = vmul.f32 %v605, %v949
          %v1022 = vmul.f32 %v606, %v950
          %v1023 = vmul.f32 %v607, %v950
          %v1024 = vmul.f32 %v608, %v950
          %v1025 = vmul.f32 %v609, %v951
          %v1026 = vmul.f32 %v610, %v951
          %v1027 = vmul.f32 %v611, %v951
          %v1028 = vmul.f32 %v612, %v952
          %v1029 = vmul.f32 %v613, %v952
          %v1030 = vmul.f32 %v614, %v952
          %v1031 = vmul.f32 %v615, %v953
          %v1032 = vmul.f32 %v616, %v953
          %v1033 = vmul.f32 %v617, %v953
          %v1034 = vmul.f32 %v618, %v954
          %v1035 = vmul.f32 %v619, %v954
          %v1036 = vmul.f32 %v620, %v954
          %v1037 = vmul.f32 %v621, %v955
          %v1038 = vmul.f32 %v622, %v955
          %v1039 = vmul.f32 %v623, %v955
          %v1040 = vmul.f32 %v624, %v956
          %v1041 = vmul.f32 %v625, %v956
          %v1042 = vmul.f32 %v626, %v956
          %v1043 = vmul.f32 %v627, %v957
          %v1044 = vmul.f32 %v628, %v957
          %v1045 = vmul.f32 %v629, %v957
          %v1046 = vmul.f32 %v630, %v958
          %v1047 = vmul.f32 %v631, %v958
          %v1048 = vmul.f32 %v632, %v958
          %v1049 = vmul.f32 %v633, %v959
          %v1050 = vmul.f32 %v634, %v959
          %v1051 = vmul.f32 %v635, %v959
          %v1052 = vmul.f32 %v636, %v960
          %v1053 = vmul.f32 %v637, %v960
          %v1054 = vmul.f32 %v638, %v960
          %v1055 = vmul.f32 %v639, %v961
          %v1056 = vmul.f32 %v640, %v961
          %v1057 = vmul.f32 %v641, %v961
          %v1058 = vpack.c.bf16 %v965, %v962
          %v1059 = vpack.c.bf16 %v966, %v963
          %v1060 = vpack.c.bf16 %v967, %v964
          %v1061 = vpack.c.bf16 %v971, %v968
          %v1062 = vpack.c.bf16 %v972, %v969
          %v1063 = vpack.c.bf16 %v973, %v970
          %v1064 = vpack.c.bf16 %v977, %v974
          %v1065 = vpack.c.bf16 %v978, %v975
          %v1066 = vpack.c.bf16 %v979, %v976
          %v1067 = vpack.c.bf16 %v983, %v980
          %v1068 = vpack.c.bf16 %v984, %v981
          %v1069 = vpack.c.bf16 %v985, %v982
          %v1070 = vpack.c.bf16 %v989, %v986
          %v1071 = vpack.c.bf16 %v990, %v987
          %v1072 = vpack.c.bf16 %v991, %v988
          %v1073 = vpack.c.bf16 %v995, %v992
          %v1074 = vpack.c.bf16 %v996, %v993
          %v1075 = vpack.c.bf16 %v997, %v994
          %v1076 = vpack.c.bf16 %v1001, %v998
          %v1077 = vpack.c.bf16 %v1002, %v999
          %v1078 = vpack.c.bf16 %v1003, %v1000
          %v1079 = vpack.c.bf16 %v1007, %v1004
          %v1080 = vpack.c.bf16 %v1008, %v1005
          %v1081 = vpack.c.bf16 %v1009, %v1006
          %v1082 = vpack.c.bf16 %v1013, %v1010
          %v1083 = vpack.c.bf16 %v1014, %v1011
          %v1084 = vpack.c.bf16 %v1015, %v1012
          %v1085 = vpack.c.bf16 %v1019, %v1016
          %v1086 = vpack.c.bf16 %v1020, %v1017
          %v1087 = vpack.c.bf16 %v1021, %v1018
          %v1088 = vpack.c.bf16 %v1025, %v1022
          %v1089 = vpack.c.bf16 %v1026, %v1023
          %v1090 = vpack.c.bf16 %v1027, %v1024
          %v1091 = vpack.c.bf16 %v1031, %v1028
          %v1092 = vpack.c.bf16 %v1032, %v1029
          %v1093 = vpack.c.bf16 %v1033, %v1030
          %v1094 = vpack.c.bf16 %v1037, %v1034
          %v1095 = vpack.c.bf16 %v1038, %v1035
          %v1096 = vpack.c.bf16 %v1039, %v1036
          %v1097 = vpack.c.bf16 %v1043, %v1040
          %v1098 = vpack.c.bf16 %v1044, %v1041
          %v1099 = vpack.c.bf16 %v1045, %v1042
          %v1100 = vpack.c.bf16 %v1049, %v1046
          %v1101 = vpack.c.bf16 %v1050, %v1047
          %v1102 = vpack.c.bf16 %v1051, %v1048
          %v1103 = vpack.c.bf16 %v1055, %v1052
          %v1104 = vpack.c.bf16 %v1056, %v1053
          %v1105 = vpack.c.bf16 %v1057, %v1054
          %1106 = vst [vmem:[#allocation2] sm:$0xff] %v1058
          %1107 = vst [vmem:[#allocation2 + $0x8] sm:$0xff] %v1059
          %1108 = vst [vmem:[#allocation2 + $0x10] sm:$0xff] %v1060
          %1109 = vst [vmem:[#allocation2 + $0x18] sm:$0xff] %v1061
          %1110 = vst [vmem:[#allocation2 + $0x20] sm:$0xff] %v1062
          %1111 = vst [vmem:[#allocation2 + $0x28] sm:$0xff] %v1063
          %1112 = vst [vmem:[#allocation2 + $0x30] sm:$0xff] %v1064
          %1113 = vst [vmem:[#allocation2 + $0x38] sm:$0xff] %v1065
          %1114 = vst [vmem:[#allocation2 + $0x40] sm:$0xff] %v1066
          %1115 = vst [vmem:[#allocation2 + $0x48] sm:$0xff] %v1067
          %1116 = vst [vmem:[#allocation2 + $0x50] sm:$0xff] %v1068
          %1117 = vst [vmem:[#allocation2 + $0x58] sm:$0xff] %v1069
          %1118 = vst [vmem:[#allocation2 + $0x60] sm:$0xff] %v1070
          %1119 = vst [vmem:[#allocation2 + $0x68] sm:$0xff] %v1071
          %1120 = vst [vmem:[#allocation2 + $0x70] sm:$0xff] %v1072
          %1121 = vst [vmem:[#allocation2 + $0x78] sm:$0xff] %v1073
          %1122 = vst [vmem:[#allocation2 + $0x80] sm:$0xff] %v1074
          %1123 = vst [vmem:[#allocation2 + $0x88] sm:$0xff] %v1075
          %1124 = vst [vmem:[#allocation2 + $0x90] sm:$0xff] %v1076
          %1125 = vst [vmem:[#allocation2 + $0x98] sm:$0xff] %v1077
          %1126 = vst [vmem:[#allocation2 + $0xa0] sm:$0xff] %v1078
          %1127 = vst [vmem:[#allocation2 + $0xa8] sm:$0xff] %v1079
          %1128 = vst [vmem:[#allocation2 + $0xb0] sm:$0xff] %v1080
          %1129 = vst [vmem:[#allocation2 + $0xb8] sm:$0xff] %v1081
          %1130 = vst [vmem:[#allocation2 + $0xc0] sm:$0xff] %v1082
          %1131 = vst [vmem:[#allocation2 + $0xc8] sm:$0xff] %v1083
          %1132 = vst [vmem:[#allocation2 + $0xd0] sm:$0xff] %v1084
          %1133 = vst [vmem:[#allocation2 + $0xd8] sm:$0xff] %v1085
          %1134 = vst [vmem:[#allocation2 + $0xe0] sm:$0xff] %v1086
          %1135 = vst [vmem:[#allocation2 + $0xe8] sm:$0xff] %v1087
          %1136 = vst [vmem:[#allocation2 + $0xf0] sm:$0xff] %v1088
          %1137 = vst [vmem:[#allocation2 + $0xf8] sm:$0xff] %v1089
          %1138 = vst [vmem:[#allocation2 + $0x100] sm:$0xff] %v1090
          %1139 = vst [vmem:[#allocation2 + $0x108] sm:$0xff] %v1091
          %1140 = vst [vmem:[#allocation2 + $0x110] sm:$0xff] %v1092
          %1141 = vst [vmem:[#allocation2 + $0x118] sm:$0xff] %v1093
          %1142 = vst [vmem:[#allocation2 + $0x120] sm:$0xff] %v1094
          %1143 = vst [vmem:[#allocation2 + $0x128] sm:$0xff] %v1095
          %1144 = vst [vmem:[#allocation2 + $0x130] sm:$0xff] %v1096
          %1145 = vst [vmem:[#allocation2 + $0x138] sm:$0xff] %v1097
          %1146 = vst [vmem:[#allocation2 + $0x140] sm:$0xff] %v1098
          %1147 = vst [vmem:[#allocation2 + $0x148] sm:$0xff] %v1099
          %1148 = vst [vmem:[#allocation2 + $0x150] sm:$0xff] %v1100
          %1149 = vst [vmem:[#allocation2 + $0x158] sm:$0xff] %v1101
          %1150 = vst [vmem:[#allocation2 + $0x160] sm:$0xff] %v1102
          %1151 = vst [vmem:[#allocation2 + $0x168] sm:$0xff] %v1103
          %1152 = vst [vmem:[#allocation2 + $0x170] sm:$0xff] %v1104
          %1153 = vst [vmem:[#allocation2 + $0x178] sm:$0xff] %v1105
          %1154 = vst [vmem:[#allocation3] sm:$0xff] 0.0
          %1155 = vst [vmem:[#allocation3 + $0x8] sm:$0xff] 0.0
          %1156 = vst [vmem:[#allocation3 + $0x10] sm:$0xff] 0.0
          %1157 = vst [vmem:[#allocation3 + $0x18] sm:$0xff] 0.0
          %1158 = vst [vmem:[#allocation3 + $0x20] sm:$0xff] 0.0
          %1159 = vst [vmem:[#allocation3 + $0x28] sm:$0xff] 0.0
          %1160 = vst [vmem:[#allocation3 + $0x30] sm:$0xff] 0.0
          %1161 = vst [vmem:[#allocation3 + $0x38] sm:$0xff] 0.0
          %1162 = vst [vmem:[#allocation3 + $0x40] sm:$0xff] 0.0
          %1163 = vst [vmem:[#allocation3 + $0x48] sm:$0xff] 0.0
          %1164 = vst [vmem:[#allocation3 + $0x50] sm:$0xff] 0.0
          %1165 = vst [vmem:[#allocation3 + $0x58] sm:$0xff] 0.0
          %1166 = vst [vmem:[#allocation3 + $0x60] sm:$0xff] 0.0
          %1167 = vst [vmem:[#allocation3 + $0x68] sm:$0xff] 0.0
          %1168 = vst [vmem:[#allocation3 + $0x70] sm:$0xff] 0.0
          %1169 = vst [vmem:[#allocation3 + $0x78] sm:$0xff] 0.0
          %1170 = vst [vmem:[#allocation3 + $0x80] sm:$0xff] 0.0
          %1171 = vst [vmem:[#allocation3 + $0x88] sm:$0xff] 0.0
          %1172 = vst [vmem:[#allocation3 + $0x90] sm:$0xff] 0.0
          %1173 = vst [vmem:[#allocation3 + $0x98] sm:$0xff] 0.0
          %1174 = vst [vmem:[#allocation3 + $0xa0] sm:$0xff] 0.0
          %1175 = vst [vmem:[#allocation3 + $0xa8] sm:$0xff] 0.0
          %1176 = vst [vmem:[#allocation3 + $0xb0] sm:$0xff] 0.0
          %1177 = vst [vmem:[#allocation3 + $0xb8] sm:$0xff] 0.0
          %1178 = vst [vmem:[#allocation3 + $0xc0] sm:$0xff] 0.0
          %1179 = vst [vmem:[#allocation3 + $0xc8] sm:$0xff] 0.0
          %1180 = vst [vmem:[#allocation3 + $0xd0] sm:$0xff] 0.0
          %1181 = vst [vmem:[#allocation3 + $0xd8] sm:$0xff] 0.0
          %1182 = vst [vmem:[#allocation3 + $0xe0] sm:$0xff] 0.0
          %1183 = vst [vmem:[#allocation3 + $0xe8] sm:$0xff] 0.0
          %1184 = vst [vmem:[#allocation3 + $0xf0] sm:$0xff] 0.0
          %1185 = vst [vmem:[#allocation3 + $0xf8] sm:$0xff] 0.0
          %1186 = vst [vmem:[#allocation3 + $0x100] sm:$0xff] 0.0
          %1187 = vst [vmem:[#allocation3 + $0x108] sm:$0xff] 0.0
          %1188 = vst [vmem:[#allocation3 + $0x110] sm:$0xff] 0.0
          %1189 = vst [vmem:[#allocation3 + $0x118] sm:$0xff] 0.0
          %1190 = vst [vmem:[#allocation3 + $0x120] sm:$0xff] 0.0
          %1191 = vst [vmem:[#allocation3 + $0x128] sm:$0xff] 0.0
          %1192 = vst [vmem:[#allocation3 + $0x130] sm:$0xff] 0.0
          %1193 = vst [vmem:[#allocation3 + $0x138] sm:$0xff] 0.0
          %1194 = vst [vmem:[#allocation3 + $0x140] sm:$0xff] 0.0
          %1195 = vst [vmem:[#allocation3 + $0x148] sm:$0xff] 0.0
          %1196 = vst [vmem:[#allocation3 + $0x150] sm:$0xff] 0.0
          %1197 = vst [vmem:[#allocation3 + $0x158] sm:$0xff] 0.0
          %1198 = vst [vmem:[#allocation3 + $0x160] sm:$0xff] 0.0
          %1199 = vst [vmem:[#allocation3 + $0x168] sm:$0xff] 0.0
          %1200 = vst [vmem:[#allocation3 + $0x170] sm:$0xff] 0.0
          %1201 = vst [vmem:[#allocation3 + $0x178] sm:$0xff] 0.0
          %1202 = vst [vmem:[#allocation3 + $0x180] sm:$0xff] 0.0
          %1203 = vst [vmem:[#allocation3 + $0x188] sm:$0xff] 0.0
          %1204 = vst [vmem:[#allocation3 + $0x190] sm:$0xff] 0.0
          %1205 = vst [vmem:[#allocation3 + $0x198] sm:$0xff] 0.0
          %1206 = vst [vmem:[#allocation3 + $0x1a0] sm:$0xff] 0.0
          %1207 = vst [vmem:[#allocation3 + $0x1a8] sm:$0xff] 0.0
          %1208 = vst [vmem:[#allocation3 + $0x1b0] sm:$0xff] 0.0
          %1209 = vst [vmem:[#allocation3 + $0x1b8] sm:$0xff] 0.0
          %1210 = vst [vmem:[#allocation3 + $0x1c0] sm:$0xff] 0.0
          %1211 = vst [vmem:[#allocation3 + $0x1c8] sm:$0xff] 0.0
          %1212 = vst [vmem:[#allocation3 + $0x1d0] sm:$0xff] 0.0
          %1213 = vst [vmem:[#allocation3 + $0x1d8] sm:$0xff] 0.0
          %1214 = vst [vmem:[#allocation3 + $0x1e0] sm:$0xff] 0.0
          %1215 = vst [vmem:[#allocation3 + $0x1e8] sm:$0xff] 0.0
          %1216 = vst [vmem:[#allocation3 + $0x1f0] sm:$0xff] 0.0
          %1217 = vst [vmem:[#allocation3 + $0x1f8] sm:$0xff] 0.0
          %1218 = vst [vmem:[#allocation3 + $0x200] sm:$0xff] 0.0
          %1219 = vst [vmem:[#allocation3 + $0x208] sm:$0xff] 0.0
          %1220 = vst [vmem:[#allocation3 + $0x210] sm:$0xff] 0.0
          %1221 = vst [vmem:[#allocation3 + $0x218] sm:$0xff] 0.0
          %1222 = vst [vmem:[#allocation3 + $0x220] sm:$0xff] 0.0
          %1223 = vst [vmem:[#allocation3 + $0x228] sm:$0xff] 0.0
          %1224 = vst [vmem:[#allocation3 + $0x230] sm:$0xff] 0.0
          %1225 = vst [vmem:[#allocation3 + $0x238] sm:$0xff] 0.0
          %1226 = vst [vmem:[#allocation3 + $0x240] sm:$0xff] 0.0
          %1227 = vst [vmem:[#allocation3 + $0x248] sm:$0xff] 0.0
          %1228 = vst [vmem:[#allocation3 + $0x250] sm:$0xff] 0.0
          %1229 = vst [vmem:[#allocation3 + $0x258] sm:$0xff] 0.0
          %1230 = vst [vmem:[#allocation3 + $0x260] sm:$0xff] 0.0
          %1231 = vst [vmem:[#allocation3 + $0x268] sm:$0xff] 0.0
          %1232 = vst [vmem:[#allocation3 + $0x270] sm:$0xff] 0.0
          %1233 = vst [vmem:[#allocation3 + $0x278] sm:$0xff] 0.0
          %1234 = vst [vmem:[#allocation3 + $0x280] sm:$0xff] 0.0
          %1235 = vst [vmem:[#allocation3 + $0x288] sm:$0xff] 0.0
          %1236 = vst [vmem:[#allocation3 + $0x290] sm:$0xff] 0.0
          %1237 = vst [vmem:[#allocation3 + $0x298] sm:$0xff] 0.0
          %1238 = vst [vmem:[#allocation3 + $0x2a0] sm:$0xff] 0.0
          %1239 = vst [vmem:[#allocation3 + $0x2a8] sm:$0xff] 0.0
          %1240 = vst [vmem:[#allocation3 + $0x2b0] sm:$0xff] 0.0
          %1241 = vst [vmem:[#allocation3 + $0x2b8] sm:$0xff] 0.0
          %1242 = vst [vmem:[#allocation3 + $0x2c0] sm:$0xff] 0.0
          %1243 = vst [vmem:[#allocation3 + $0x2c8] sm:$0xff] 0.0
          %1244 = vst [vmem:[#allocation3 + $0x2d0] sm:$0xff] 0.0
          %1245 = vst [vmem:[#allocation3 + $0x2d8] sm:$0xff] 0.0
          %1246 = vst [vmem:[#allocation3 + $0x2e0] sm:$0xff] 0.0
          %1247 = vst [vmem:[#allocation3 + $0x2e8] sm:$0xff] 0.0
          %1248 = vst [vmem:[#allocation3 + $0x2f0] sm:$0xff] 0.0
          %1249 = vst [vmem:[#allocation3 + $0x2f8] sm:$0xff] 0.0
        $region48: #{tpu_custom_call.1} parent=31 // pred_fallthru
          _
        %v1250 = vld [vmem:[#allocation2] sm:$0xff]
        %v1251 = vld [vmem:[#allocation2 + $0x8] sm:$0xff]
        %v1252 = vld [vmem:[#allocation2 + $0x10] sm:$0xff]
        %v1253 = vld [vmem:[#allocation2 + $0x18] sm:$0xff]
        %v1254 = vld [vmem:[#allocation2 + $0x20] sm:$0xff]
        %v1255 = vld [vmem:[#allocation2 + $0x28] sm:$0xff]
        %v1256 = vld [vmem:[#allocation2 + $0x30] sm:$0xff]
        %v1257 = vld [vmem:[#allocation2 + $0x38] sm:$0xff]
        %v1258 = vld [vmem:[#allocation2 + $0x40] sm:$0xff]
        %v1259 = vld [vmem:[#allocation2 + $0x48] sm:$0xff]
        %v1260 = vld [vmem:[#allocation2 + $0x50] sm:$0xff]
        %v1261 = vld [vmem:[#allocation2 + $0x58] sm:$0xff]
        %v1262 = vld [vmem:[#allocation2 + $0x60] sm:$0xff]
        %v1263 = vld [vmem:[#allocation2 + $0x68] sm:$0xff]
        %v1264 = vld [vmem:[#allocation2 + $0x70] sm:$0xff]
        %v1265 = vld [vmem:[#allocation2 + $0x78] sm:$0xff]
        %v1266 = vld [vmem:[#allocation2 + $0x80] sm:$0xff]
        %v1267 = vld [vmem:[#allocation2 + $0x88] sm:$0xff]
        %v1268 = vld [vmem:[#allocation2 + $0x90] sm:$0xff]
        %v1269 = vld [vmem:[#allocation2 + $0x98] sm:$0xff]
        %v1270 = vld [vmem:[#allocation2 + $0xa0] sm:$0xff]
        %v1271 = vld [vmem:[#allocation2 + $0xa8] sm:$0xff]
        %v1272 = vld [vmem:[#allocation2 + $0xb0] sm:$0xff]
        %v1273 = vld [vmem:[#allocation2 + $0xb8] sm:$0xff]
        %v1274 = vld [vmem:[#allocation2 + $0xc0] sm:$0xff]
        %v1275 = vld [vmem:[#allocation2 + $0xc8] sm:$0xff]
        %v1276 = vld [vmem:[#allocation2 + $0xd0] sm:$0xff]
        %v1277 = vld [vmem:[#allocation2 + $0xd8] sm:$0xff]
        %v1278 = vld [vmem:[#allocation2 + $0xe0] sm:$0xff]
        %v1279 = vld [vmem:[#allocation2 + $0xe8] sm:$0xff]
        %v1280 = vld [vmem:[#allocation2 + $0xf0] sm:$0xff]
        %v1281 = vld [vmem:[#allocation2 + $0xf8] sm:$0xff]
        %v1282 = vld [vmem:[#allocation2 + $0x100] sm:$0xff]
        %v1283 = vld [vmem:[#allocation2 + $0x108] sm:$0xff]
        %v1284 = vld [vmem:[#allocation2 + $0x110] sm:$0xff]
        %v1285 = vld [vmem:[#allocation2 + $0x118] sm:$0xff]
        %v1286 = vld [vmem:[#allocation2 + $0x120] sm:$0xff]
        %v1287 = vld [vmem:[#allocation2 + $0x128] sm:$0xff]
        %v1288 = vld [vmem:[#allocation2 + $0x130] sm:$0xff]
        %v1289 = vld [vmem:[#allocation2 + $0x138] sm:$0xff]
        %v1290 = vld [vmem:[#allocation2 + $0x140] sm:$0xff]
        %v1291 = vld [vmem:[#allocation2 + $0x148] sm:$0xff]
        %v1292 = vld [vmem:[#allocation2 + $0x150] sm:$0xff]
        %v1293 = vld [vmem:[#allocation2 + $0x158] sm:$0xff]
        %v1294 = vld [vmem:[#allocation2 + $0x160] sm:$0xff]
        %v1295 = vld [vmem:[#allocation2 + $0x168] sm:$0xff]
        %v1296 = vld [vmem:[#allocation2 + $0x170] sm:$0xff]
        %v1297 = vld [vmem:[#allocation2 + $0x178] sm:$0xff]
        %v1298 = vld [vmem:[%s238] sm:$0xff]
        %v1299 = vld [vmem:[%s238 + $0x8] sm:$0xff]
        %v1300 = vld [vmem:[%s238 + $0x10] sm:$0xff]
        %v1301 = vld [vmem:[%s238 + $0x18] sm:$0xff]
        %v1302 = vld [vmem:[%s238 + $0x20] sm:$0xff]
        %v1303 = vld [vmem:[%s238 + $0x28] sm:$0xff]
        %v1304 = vld [vmem:[%s238 + $0x30] sm:$0xff]
        %v1305 = vld [vmem:[%s238 + $0x38] sm:$0xff]
        %v1306 = vld [vmem:[%s238 + $0x40] sm:$0xff]
        %v1307 = vld [vmem:[%s238 + $0x48] sm:$0xff]
        %v1308 = vld [vmem:[%s238 + $0x50] sm:$0xff]
        %v1309 = vld [vmem:[%s238 + $0x58] sm:$0xff]
        %v1310 = vld [vmem:[%s238 + $0x60] sm:$0xff]
        %v1311 = vld [vmem:[%s238 + $0x68] sm:$0xff]
        %v1312 = vld [vmem:[%s238 + $0x70] sm:$0xff]
        %v1313 = vld [vmem:[%s238 + $0x78] sm:$0xff]
        %v1314 = vld [vmem:[%s238 + $0x80] sm:$0xff]
        %v1315 = vld [vmem:[%s238 + $0x88] sm:$0xff]
        %v1316 = vld [vmem:[%s238 + $0x90] sm:$0xff]
        %v1317 = vld [vmem:[%s238 + $0x98] sm:$0xff]
        %v1318 = vld [vmem:[%s238 + $0xa0] sm:$0xff]
        %v1319 = vld [vmem:[%s238 + $0xa8] sm:$0xff]
        %v1320 = vld [vmem:[%s238 + $0xb0] sm:$0xff]
        %v1321 = vld [vmem:[%s238 + $0xb8] sm:$0xff]
        %v1322 = vld [vmem:[%s238 + $0xc0] sm:$0xff]
        %v1323 = vld [vmem:[%s238 + $0xc8] sm:$0xff]
        %v1324 = vld [vmem:[%s238 + $0xd0] sm:$0xff]
        %v1325 = vld [vmem:[%s238 + $0xd8] sm:$0xff]
        %v1326 = vld [vmem:[%s238 + $0xe0] sm:$0xff]
        %v1327 = vld [vmem:[%s238 + $0xe8] sm:$0xff]
        %v1328 = vld [vmem:[%s238 + $0xf0] sm:$0xff]
        %v1329 = vld [vmem:[%s238 + $0xf8] sm:$0xff]
        %v1330 = vld [vmem:[%s238 + $0x100] sm:$0xff]
        %v1331 = vld [vmem:[%s238 + $0x108] sm:$0xff]
        %v1332 = vld [vmem:[%s238 + $0x110] sm:$0xff]
        %v1333 = vld [vmem:[%s238 + $0x118] sm:$0xff]
        %v1334 = vld [vmem:[%s238 + $0x120] sm:$0xff]
        %v1335 = vld [vmem:[%s238 + $0x128] sm:$0xff]
        %v1336 = vld [vmem:[%s238 + $0x130] sm:$0xff]
        %v1337 = vld [vmem:[%s238 + $0x138] sm:$0xff]
        %v1338 = vld [vmem:[%s238 + $0x140] sm:$0xff]
        %v1339 = vld [vmem:[%s238 + $0x148] sm:$0xff]
        %v1340 = vld [vmem:[%s238 + $0x150] sm:$0xff]
        %v1341 = vld [vmem:[%s238 + $0x158] sm:$0xff]
        %v1342 = vld [vmem:[%s238 + $0x160] sm:$0xff]
        %v1343 = vld [vmem:[%s238 + $0x168] sm:$0xff]
        %v1344 = vld [vmem:[%s238 + $0x170] sm:$0xff]
        %v1345 = vld [vmem:[%s238 + $0x178] sm:$0xff]
        %v1346 = vld [vmem:[%s238 + $0x180] sm:$0xff]
        %v1347 = vld [vmem:[%s238 + $0x188] sm:$0xff]
        %v1348 = vld [vmem:[%s238 + $0x190] sm:$0xff]
        %v1349 = vld [vmem:[%s238 + $0x198] sm:$0xff]
        %v1350 = vld [vmem:[%s238 + $0x1a0] sm:$0xff]
        %v1351 = vld [vmem:[%s238 + $0x1a8] sm:$0xff]
        %v1352 = vld [vmem:[%s238 + $0x1b0] sm:$0xff]
        %v1353 = vld [vmem:[%s238 + $0x1b8] sm:$0xff]
        %v1354 = vld [vmem:[%s238 + $0x1c0] sm:$0xff]
        %v1355 = vld [vmem:[%s238 + $0x1c8] sm:$0xff]
        %v1356 = vld [vmem:[%s238 + $0x1d0] sm:$0xff]
        %v1357 = vld [vmem:[%s238 + $0x1d8] sm:$0xff]
        %v1358 = vld [vmem:[%s238 + $0x1e0] sm:$0xff]
        %v1359 = vld [vmem:[%s238 + $0x1e8] sm:$0xff]
        %v1360 = vld [vmem:[%s238 + $0x1f0] sm:$0xff]
        %v1361 = vld [vmem:[%s238 + $0x1f8] sm:$0xff]
        %v1362 = vld [vmem:[%s238 + $0x200] sm:$0xff]
        %v1363 = vld [vmem:[%s238 + $0x208] sm:$0xff]
        %v1364 = vld [vmem:[%s238 + $0x210] sm:$0xff]
        %v1365 = vld [vmem:[%s238 + $0x218] sm:$0xff]
        %v1366 = vld [vmem:[%s238 + $0x220] sm:$0xff]
        %v1367 = vld [vmem:[%s238 + $0x228] sm:$0xff]
        %v1368 = vld [vmem:[%s238 + $0x230] sm:$0xff]
        %v1369 = vld [vmem:[%s238 + $0x238] sm:$0xff]
        %v1370 = vld [vmem:[%s238 + $0x240] sm:$0xff]
        %v1371 = vld [vmem:[%s238 + $0x248] sm:$0xff]
        %v1372 = vld [vmem:[%s238 + $0x250] sm:$0xff]
        %v1373 = vld [vmem:[%s238 + $0x258] sm:$0xff]
        %v1374 = vld [vmem:[%s238 + $0x260] sm:$0xff]
        %v1375 = vld [vmem:[%s238 + $0x268] sm:$0xff]
        %v1376 = vld [vmem:[%s238 + $0x270] sm:$0xff]
        %v1377 = vld [vmem:[%s238 + $0x278] sm:$0xff]
        %v1378 = vld [vmem:[%s238 + $0x280] sm:$0xff]
        %v1379 = vld [vmem:[%s238 + $0x288] sm:$0xff]
        %v1380 = vld [vmem:[%s238 + $0x290] sm:$0xff]
        %v1381 = vld [vmem:[%s238 + $0x298] sm:$0xff]
        %v1382 = vld [vmem:[%s238 + $0x2a0] sm:$0xff]
        %v1383 = vld [vmem:[%s238 + $0x2a8] sm:$0xff]
        %v1384 = vld [vmem:[%s238 + $0x2b0] sm:$0xff]
        %v1385 = vld [vmem:[%s238 + $0x2b8] sm:$0xff]
        %v1386 = vld [vmem:[%s238 + $0x2c0] sm:$0xff]
        %v1387 = vld [vmem:[%s238 + $0x2c8] sm:$0xff]
        %v1388 = vld [vmem:[%s238 + $0x2d0] sm:$0xff]
        %v1389 = vld [vmem:[%s238 + $0x2d8] sm:$0xff]
        %v1390 = vld [vmem:[%s238 + $0x2e0] sm:$0xff]
        %v1391 = vld [vmem:[%s238 + $0x2e8] sm:$0xff]
        %v1392 = vld [vmem:[%s238 + $0x2f0] sm:$0xff]
        %v1393 = vld [vmem:[%s238 + $0x2f8] sm:$0xff]
        %v1490 = vunpack.c.l.b16 %v1298
        %v1491 = vunpack.c.h.b16 %v1298
        %v1492 = vunpack.c.l.b16 %v1299
        %v1493 = vunpack.c.h.b16 %v1299
        %v1494 = vunpack.c.l.b16 %v1300
        %v1495 = vunpack.c.h.b16 %v1300
        %v1496 = vunpack.c.l.b16 %v1301
        %v1497 = vunpack.c.h.b16 %v1301
        %v1498 = vunpack.c.l.b16 %v1302
        %v1499 = vunpack.c.h.b16 %v1302
        %v1500 = vunpack.c.l.b16 %v1303
        %v1501 = vunpack.c.h.b16 %v1303
        %v1502 = vunpack.c.l.b16 %v1304
        %v1503 = vunpack.c.h.b16 %v1304
        %v1504 = vunpack.c.l.b16 %v1305
        %v1505 = vunpack.c.h.b16 %v1305
        %v1506 = vunpack.c.l.b16 %v1306
        %v1507 = vunpack.c.h.b16 %v1306
        %v1508 = vunpack.c.l.b16 %v1307
        %v1509 = vunpack.c.h.b16 %v1307
        %v1510 = vunpack.c.l.b16 %v1308
        %v1511 = vunpack.c.h.b16 %v1308
        %v1512 = vunpack.c.l.b16 %v1309
        %v1513 = vunpack.c.h.b16 %v1309
        %v1514 = vunpack.c.l.b16 %v1310
        %v1515 = vunpack.c.h.b16 %v1310
        %v1516 = vunpack.c.l.b16 %v1311
        %v1517 = vunpack.c.h.b16 %v1311
        %v1518 = vunpack.c.l.b16 %v1312
        %v1519 = vunpack.c.h.b16 %v1312
        %v1520 = vunpack.c.l.b16 %v1313
        %v1521 = vunpack.c.h.b16 %v1313
        %v1522 = vunpack.c.l.b16 %v1314
        %v1523 = vunpack.c.h.b16 %v1314
        %v1524 = vunpack.c.l.b16 %v1315
        %v1525 = vunpack.c.h.b16 %v1315
        %v1526 = vunpack.c.l.b16 %v1316
        %v1527 = vunpack.c.h.b16 %v1316
        %v1528 = vunpack.c.l.b16 %v1317
        %v1529 = vunpack.c.h.b16 %v1317
        %v1530 = vunpack.c.l.b16 %v1318
        %v1531 = vunpack.c.h.b16 %v1318
        %v1532 = vunpack.c.l.b16 %v1319
        %v1533 = vunpack.c.h.b16 %v1319
        %v1534 = vunpack.c.l.b16 %v1320
        %v1535 = vunpack.c.h.b16 %v1320
        %v1536 = vunpack.c.l.b16 %v1321
        %v1537 = vunpack.c.h.b16 %v1321
        %v1538 = vunpack.c.l.b16 %v1322
        %v1539 = vunpack.c.h.b16 %v1322
        %v1540 = vunpack.c.l.b16 %v1323
        %v1541 = vunpack.c.h.b16 %v1323
        %v1542 = vunpack.c.l.b16 %v1324
        %v1543 = vunpack.c.h.b16 %v1324
        %v1544 = vunpack.c.l.b16 %v1325
        %v1545 = vunpack.c.h.b16 %v1325
        %v1546 = vunpack.c.l.b16 %v1326
        %v1547 = vunpack.c.h.b16 %v1326
        %v1548 = vunpack.c.l.b16 %v1327
        %v1549 = vunpack.c.h.b16 %v1327
        %v1550 = vunpack.c.l.b16 %v1328
        %v1551 = vunpack.c.h.b16 %v1328
        %v1552 = vunpack.c.l.b16 %v1329
        %v1553 = vunpack.c.h.b16 %v1329
        %v1554 = vunpack.c.l.b16 %v1330
        %v1555 = vunpack.c.h.b16 %v1330
        %v1556 = vunpack.c.l.b16 %v1331
        %v1557 = vunpack.c.h.b16 %v1331
        %v1558 = vunpack.c.l.b16 %v1332
        %v1559 = vunpack.c.h.b16 %v1332
        %v1560 = vunpack.c.l.b16 %v1333
        %v1561 = vunpack.c.h.b16 %v1333
        %v1562 = vunpack.c.l.b16 %v1334
        %v1563 = vunpack.c.h.b16 %v1334
        %v1564 = vunpack.c.l.b16 %v1335
        %v1565 = vunpack.c.h.b16 %v1335
        %v1566 = vunpack.c.l.b16 %v1336
        %v1567 = vunpack.c.h.b16 %v1336
        %v1568 = vunpack.c.l.b16 %v1337
        %v1569 = vunpack.c.h.b16 %v1337
        %v1570 = vunpack.c.l.b16 %v1338
        %v1571 = vunpack.c.h.b16 %v1338
        %v1572 = vunpack.c.l.b16 %v1339
        %v1573 = vunpack.c.h.b16 %v1339
        %v1574 = vunpack.c.l.b16 %v1340
        %v1575 = vunpack.c.h.b16 %v1340
        %v1576 = vunpack.c.l.b16 %v1341
        %v1577 = vunpack.c.h.b16 %v1341
        %v1578 = vunpack.c.l.b16 %v1342
        %v1579 = vunpack.c.h.b16 %v1342
        %v1580 = vunpack.c.l.b16 %v1343
        %v1581 = vunpack.c.h.b16 %v1343
        %v1582 = vunpack.c.l.b16 %v1344
        %v1583 = vunpack.c.h.b16 %v1344
        %v1584 = vunpack.c.l.b16 %v1345
        %v1585 = vunpack.c.h.b16 %v1345
        %v1586 = vunpack.c.l.b16 %v1346
        %v1587 = vunpack.c.h.b16 %v1346
        %v1588 = vunpack.c.l.b16 %v1347
        %v1589 = vunpack.c.h.b16 %v1347
        %v1590 = vunpack.c.l.b16 %v1348
        %v1591 = vunpack.c.h.b16 %v1348
        %v1592 = vunpack.c.l.b16 %v1349
        %v1593 = vunpack.c.h.b16 %v1349
        %v1594 = vunpack.c.l.b16 %v1350
        %v1595 = vunpack.c.h.b16 %v1350
        %v1596 = vunpack.c.l.b16 %v1351
        %v1597 = vunpack.c.h.b16 %v1351
        %v1598 = vunpack.c.l.b16 %v1352
        %v1599 = vunpack.c.h.b16 %v1352
        %v1600 = vunpack.c.l.b16 %v1353
        %v1601 = vunpack.c.h.b16 %v1353
        %v1602 = vunpack.c.l.b16 %v1354
        %v1603 = vunpack.c.h.b16 %v1354
        %v1604 = vunpack.c.l.b16 %v1355
        %v1605 = vunpack.c.h.b16 %v1355
        %v1606 = vunpack.c.l.b16 %v1356
        %v1607 = vunpack.c.h.b16 %v1356
        %v1608 = vunpack.c.l.b16 %v1357
        %v1609 = vunpack.c.h.b16 %v1357
        %v1610 = vunpack.c.l.b16 %v1358
        %v1611 = vunpack.c.h.b16 %v1358
        %v1612 = vunpack.c.l.b16 %v1359
        %v1613 = vunpack.c.h.b16 %v1359
        %v1614 = vunpack.c.l.b16 %v1360
        %v1615 = vunpack.c.h.b16 %v1360
        %v1616 = vunpack.c.l.b16 %v1361
        %v1617 = vunpack.c.h.b16 %v1361
        %v1618 = vunpack.c.l.b16 %v1362
        %v1619 = vunpack.c.h.b16 %v1362
        %v1620 = vunpack.c.l.b16 %v1363
        %v1621 = vunpack.c.h.b16 %v1363
        %v1622 = vunpack.c.l.b16 %v1364
        %v1623 = vunpack.c.h.b16 %v1364
        %v1624 = vunpack.c.l.b16 %v1365
        %v1625 = vunpack.c.h.b16 %v1365
        %v1626 = vunpack.c.l.b16 %v1366
        %v1627 = vunpack.c.h.b16 %v1366
        %v1628 = vunpack.c.l.b16 %v1367
        %v1629 = vunpack.c.h.b16 %v1367
        %v1630 = vunpack.c.l.b16 %v1368
        %v1631 = vunpack.c.h.b16 %v1368
        %v1632 = vunpack.c.l.b16 %v1369
        %v1633 = vunpack.c.h.b16 %v1369
        %v1634 = vunpack.c.l.b16 %v1370
        %v1635 = vunpack.c.h.b16 %v1370
        %v1636 = vunpack.c.l.b16 %v1371
        %v1637 = vunpack.c.h.b16 %v1371
        %v1638 = vunpack.c.l.b16 %v1372
        %v1639 = vunpack.c.h.b16 %v1372
        %v1640 = vunpack.c.l.b16 %v1373
        %v1641 = vunpack.c.h.b16 %v1373
        %v1642 = vunpack.c.l.b16 %v1374
        %v1643 = vunpack.c.h.b16 %v1374
        %v1644 = vunpack.c.l.b16 %v1375
        %v1645 = vunpack.c.h.b16 %v1375
        %v1646 = vunpack.c.l.b16 %v1376
        %v1647 = vunpack.c.h.b16 %v1376
        %v1648 = vunpack.c.l.b16 %v1377
        %v1649 = vunpack.c.h.b16 %v1377
        %v1650 = vunpack.c.l.b16 %v1378
        %v1651 = vunpack.c.h.b16 %v1378
        %v1652 = vunpack.c.l.b16 %v1379
        %v1653 = vunpack.c.h.b16 %v1379
        %v1654 = vunpack.c.l.b16 %v1380
        %v1655 = vunpack.c.h.b16 %v1380
        %v1656 = vunpack.c.l.b16 %v1381
        %v1657 = vunpack.c.h.b16 %v1381
        %v1658 = vunpack.c.l.b16 %v1382
        %v1659 = vunpack.c.h.b16 %v1382
        %v1660 = vunpack.c.l.b16 %v1383
        %v1661 = vunpack.c.h.b16 %v1383
        %v1662 = vunpack.c.l.b16 %v1384
        %v1663 = vunpack.c.h.b16 %v1384
        %v1664 = vunpack.c.l.b16 %v1385
        %v1665 = vunpack.c.h.b16 %v1385
        %v1666 = vunpack.c.l.b16 %v1386
        %v1667 = vunpack.c.h.b16 %v1386
        %v1668 = vunpack.c.l.b16 %v1387
        %v1669 = vunpack.c.h.b16 %v1387
        %v1670 = vunpack.c.l.b16 %v1388
        %v1671 = vunpack.c.h.b16 %v1388
        %v1672 = vunpack.c.l.b16 %v1389
        %v1673 = vunpack.c.h.b16 %v1389
        %v1674 = vunpack.c.l.b16 %v1390
        %v1675 = vunpack.c.h.b16 %v1390
        %v1676 = vunpack.c.l.b16 %v1391
        %v1677 = vunpack.c.h.b16 %v1391
        %v1678 = vunpack.c.l.b16 %v1392
        %v1679 = vunpack.c.h.b16 %v1392
        %v1680 = vunpack.c.l.b16 %v1393
        %v1681 = vunpack.c.h.b16 %v1393
        %v1682 = vpack.c.b16 %v1494, %v1490
        %v1683 = vpack.c.b16 %v1495, %v1491
        %v1684 = vpack.c.b16 %v1496, %v1492
        %v1685 = vpack.c.b16 %v1497, %v1493
        %v1686 = vpack.c.b16 %v1502, %v1498
        %v1687 = vpack.c.b16 %v1503, %v1499
        %v1688 = vpack.c.b16 %v1504, %v1500
        %v1689 = vpack.c.b16 %v1505, %v1501
        %v1690 = vpack.c.b16 %v1510, %v1506
        %v1691 = vpack.c.b16 %v1511, %v1507
        %v1692 = vpack.c.b16 %v1512, %v1508
        %v1693 = vpack.c.b16 %v1513, %v1509
        %v1694 = vpack.c.b16 %v1518, %v1514
        %v1695 = vpack.c.b16 %v1519, %v1515
        %v1696 = vpack.c.b16 %v1520, %v1516
        %v1697 = vpack.c.b16 %v1521, %v1517
        %v1698 = vpack.c.b16 %v1526, %v1522
        %v1699 = vpack.c.b16 %v1527, %v1523
        %v1700 = vpack.c.b16 %v1528, %v1524
        %v1701 = vpack.c.b16 %v1529, %v1525
        %v1702 = vpack.c.b16 %v1534, %v1530
        %v1703 = vpack.c.b16 %v1535, %v1531
        %v1704 = vpack.c.b16 %v1536, %v1532
        %v1705 = vpack.c.b16 %v1537, %v1533
        %v1706 = vpack.c.b16 %v1542, %v1538
        %v1707 = vpack.c.b16 %v1543, %v1539
        %v1708 = vpack.c.b16 %v1544, %v1540
        %v1709 = vpack.c.b16 %v1545, %v1541
        %v1710 = vpack.c.b16 %v1550, %v1546
        %v1711 = vpack.c.b16 %v1551, %v1547
        %v1712 = vpack.c.b16 %v1552, %v1548
        %v1713 = vpack.c.b16 %v1553, %v1549
        %v1714 = vpack.c.b16 %v1558, %v1554
        %v1715 = vpack.c.b16 %v1559, %v1555
        %v1716 = vpack.c.b16 %v1560, %v1556
        %v1717 = vpack.c.b16 %v1561, %v1557
        %v1718 = vpack.c.b16 %v1566, %v1562
        %v1719 = vpack.c.b16 %v1567, %v1563
        %v1720 = vpack.c.b16 %v1568, %v1564
        %v1721 = vpack.c.b16 %v1569, %v1565
        %v1722 = vpack.c.b16 %v1574, %v1570
        %v1723 = vpack.c.b16 %v1575, %v1571
        %v1724 = vpack.c.b16 %v1576, %v1572
        %v1725 = vpack.c.b16 %v1577, %v1573
        %v1726 = vpack.c.b16 %v1582, %v1578
        %v1727 = vpack.c.b16 %v1583, %v1579
        %v1728 = vpack.c.b16 %v1584, %v1580
        %v1729 = vpack.c.b16 %v1585, %v1581
        %v1730 = vpack.c.b16 %v1590, %v1586
        %v1731 = vpack.c.b16 %v1591, %v1587
        %v1732 = vpack.c.b16 %v1592, %v1588
        %v1733 = vpack.c.b16 %v1593, %v1589
        %v1734 = vpack.c.b16 %v1598, %v1594
        %v1735 = vpack.c.b16 %v1599, %v1595
        %v1736 = vpack.c.b16 %v1600, %v1596
        %v1737 = vpack.c.b16 %v1601, %v1597
        %v1738 = vpack.c.b16 %v1606, %v1602
        %v1739 = vpack.c.b16 %v1607, %v1603
        %v1740 = vpack.c.b16 %v1608, %v1604
        %v1741 = vpack.c.b16 %v1609, %v1605
        %v1742 = vpack.c.b16 %v1614, %v1610
        %v1743 = vpack.c.b16 %v1615, %v1611
        %v1744 = vpack.c.b16 %v1616, %v1612
        %v1745 = vpack.c.b16 %v1617, %v1613
        %v1746 = vpack.c.b16 %v1622, %v1618
        %v1747 = vpack.c.b16 %v1623, %v1619
        %v1748 = vpack.c.b16 %v1624, %v1620
        %v1749 = vpack.c.b16 %v1625, %v1621
        %v1750 = vpack.c.b16 %v1630, %v1626
        %v1751 = vpack.c.b16 %v1631, %v1627
        %v1752 = vpack.c.b16 %v1632, %v1628
        %v1753 = vpack.c.b16 %v1633, %v1629
        %v1754 = vpack.c.b16 %v1638, %v1634
        %v1755 = vpack.c.b16 %v1639, %v1635
        %v1756 = vpack.c.b16 %v1640, %v1636
        %v1757 = vpack.c.b16 %v1641, %v1637
        %v1758 = vpack.c.b16 %v1646, %v1642
        %v1759 = vpack.c.b16 %v1647, %v1643
        %v1760 = vpack.c.b16 %v1648, %v1644
        %v1761 = vpack.c.b16 %v1649, %v1645
        %v1762 = vpack.c.b16 %v1654, %v1650
        %v1763 = vpack.c.b16 %v1655, %v1651
        %v1764 = vpack.c.b16 %v1656, %v1652
        %v1765 = vpack.c.b16 %v1657, %v1653
        %v1766 = vpack.c.b16 %v1662, %v1658
        %v1767 = vpack.c.b16 %v1663, %v1659
        %v1768 = vpack.c.b16 %v1664, %v1660
        %v1769 = vpack.c.b16 %v1665, %v1661
        %v1770 = vpack.c.b16 %v1670, %v1666
        %v1771 = vpack.c.b16 %v1671, %v1667
        %v1772 = vpack.c.b16 %v1672, %v1668
        %v1773 = vpack.c.b16 %v1673, %v1669
        %v1774 = vpack.c.b16 %v1678, %v1674
        %v1775 = vpack.c.b16 %v1679, %v1675
        %v1776 = vpack.c.b16 %v1680, %v1676
        %v1777 = vpack.c.b16 %v1681, %v1677
        %1874 = vmatprep.subr.bf16.mxu0 %v1683
        %1875 = vmatpush1.bf16.msra.mxu0 %v1682
        %1876 = vmatprep.subr.bf16.mxu0 %v1687
        %1877 = vmatpush1.bf16.msra.mxu0 %v1686
        %1878 = vmatprep.subr.bf16.mxu0 %v1691
        %1879 = vmatpush1.bf16.msra.mxu0 %v1690
        %1880 = vmatprep.subr.bf16.mxu0 %v1695
        %1881 = vmatpush1.bf16.msra.mxu0 %v1694
        %1882 = vmatprep.subr.bf16.mxu0 %v1699
        %1883 = vmatpush1.bf16.msra.mxu0 %v1698
        %1884 = vmatprep.subr.bf16.mxu0 %v1703
        %1885 = vmatpush1.bf16.msra.mxu0 %v1702
        %1886 = vmatprep.subr.bf16.mxu0 %v1707
        %1887 = vmatpush1.bf16.msra.mxu0 %v1706
        %1888 = vmatprep.subr.bf16.mxu0 %v1711
        %1889 = vmatpush1.bf16.msra.mxu0 %v1710
        %1890 = vmatprep.subr.bf16.mxu0 %v1715
        %1891 = vmatpush1.bf16.msra.mxu0 %v1714
        %1892 = vmatprep.subr.bf16.mxu0 %v1719
        %1893 = vmatpush1.bf16.msra.mxu0 %v1718
        %1894 = vmatprep.subr.bf16.mxu0 %v1723
        %1895 = vmatpush1.bf16.msra.mxu0 %v1722
        %1896 = vmatprep.subr.bf16.mxu0 %v1727
        %1897 = vmatpush1.bf16.msra.mxu0 %v1726
        %1898 = vmatprep.subr.bf16.mxu0 %v1731
        %1899 = vmatpush1.bf16.msra.mxu0 %v1730
        %1900 = vmatprep.subr.bf16.mxu0 %v1735
        %1901 = vmatpush1.bf16.msra.mxu0 %v1734
        %1902 = vmatprep.subr.bf16.mxu0 %v1739
        %1903 = vmatpush1.bf16.msra.mxu0 %v1738
        %1904 = vmatprep.subr.bf16.mxu0 %v1743
        %1905 = vmatpush1.bf16.msra.mxu0 %v1742
        %1906 = vmatprep.mubr.bf16.mxu0 %v1251
        %1907 = vmatmul.mubr.bf16.gmra.mrb[0].mxu0 %v1250
        %v1908 = vpop.f32.mrb[0].mxu0
        %v1909 = vadd.f32 0.0, %v1908
        %v1910 = vpop.f32.mrb[0].mxu0
        %v1911 = vadd.f32 0.0, %v1910
        %v1912 = vpop.f32.mrb[0].mxu0
        %v1913 = vadd.f32 0.0, %v1912
        %v1914 = vpop.f32.mrb[0].mxu0
        %v1915 = vadd.f32 0.0, %v1914
        %1916 = vmatprep.mubr.bf16.mxu0 %v1254
        %1917 = vmatmul.mubr.bf16.gmra.mrb[0].mxu0 %v1253
        %v1918 = vpop.f32.mrb[0].mxu0
        %v1919 = vadd.f32 0.0, %v1918
        %v1920 = vpop.f32.mrb[0].mxu0
        %v1921 = vadd.f32 0.0, %v1920
        %v1922 = vpop.f32.mrb[0].mxu0
        %v1923 = vadd.f32 0.0, %v1922
        %v1924 = vpop.f32.mrb[0].mxu0
        %v1925 = vadd.f32 0.0, %v1924
        %1926 = vmatprep.mubr.bf16.mxu0 %v1257
        %1927 = vmatmul.mubr.bf16.gmra.mrb[0].mxu0 %v1256
        %v1928 = vpop.f32.mrb[0].mxu0
        %v1929 = vadd.f32 0.0, %v1928
        %v1930 = vpop.f32.mrb[0].mxu0
        %v1931 = vadd.f32 0.0, %v1930
        %v1932 = vpop.f32.mrb[0].mxu0
        %v1933 = vadd.f32 0.0, %v1932
        %v1934 = vpop.f32.mrb[0].mxu0
        %v1935 = vadd.f32 0.0, %v1934
        %1936 = vmatprep.mubr.bf16.mxu0 %v1260
        %1937 = vmatmul.mubr.bf16.gmra.mrb[0].mxu0 %v1259
        %v1938 = vpop.f32.mrb[0].mxu0
        %v1939 = vadd.f32 0.0, %v1938
        %v1940 = vpop.f32.mrb[0].mxu0
        %v1941 = vadd.f32 0.0, %v1940
        %v1942 = vpop.f32.mrb[0].mxu0
        %v1943 = vadd.f32 0.0, %v1942
        %v1944 = vpop.f32.mrb[0].mxu0
        %v1945 = vadd.f32 0.0, %v1944
        %1946 = vmatprep.mubr.bf16.mxu0 %v1263
        %1947 = vmatmul.mubr.bf16.gmra.mrb[0].mxu0 %v1262
        %v1948 = vpop.f32.mrb[0].mxu0
        %v1949 = vadd.f32 0.0, %v1948
        %v1950 = vpop.f32.mrb[0].mxu0
        %v1951 = vadd.f32 0.0, %v1950
        %v1952 = vpop.f32.mrb[0].mxu0
        %v1953 = vadd.f32 0.0, %v1952
        %v1954 = vpop.f32.mrb[0].mxu0
        %v1955 = vadd.f32 0.0, %v1954
        %1956 = vmatprep.mubr.bf16.mxu0 %v1266
        %1957 = vmatmul.mubr.bf16.gmra.mrb[0].mxu0 %v1265
        %v1958 = vpop.f32.mrb[0].mxu0
        %v1959 = vadd.f32 0.0, %v1958
        %v1960 = vpop.f32.mrb[0].mxu0
        %v1961 = vadd.f32 0.0, %v1960
        %v1962 = vpop.f32.mrb[0].mxu0
        %v1963 = vadd.f32 0.0, %v1962
        %v1964 = vpop.f32.mrb[0].mxu0
        %v1965 = vadd.f32 0.0, %v1964
        %1966 = vmatprep.mubr.bf16.mxu0 %v1269
        %1967 = vmatmul.mubr.bf16.gmra.mrb[0].mxu0 %v1268
        %v1968 = vpop.f32.mrb[0].mxu0
        %v1969 = vadd.f32 0.0, %v1968
        %v1970 = vpop.f32.mrb[0].mxu0
        %v1971 = vadd.f32 0.0, %v1970
        %v1972 = vpop.f32.mrb[0].mxu0
        %v1973 = vadd.f32 0.0, %v1972
        %v1974 = vpop.f32.mrb[0].mxu0
        %v1975 = vadd.f32 0.0, %v1974
        %1976 = vmatprep.mubr.bf16.mxu0 %v1272
        %1977 = vmatmul.mubr.bf16.gmra.mrb[0].mxu0 %v1271
        %v1978 = vpop.f32.mrb[0].mxu0
        %v1979 = vadd.f32 0.0, %v1978
        %v1980 = vpop.f32.mrb[0].mxu0
        %v1981 = vadd.f32 0.0, %v1980
        %v1982 = vpop.f32.mrb[0].mxu0
        %v1983 = vadd.f32 0.0, %v1982
        %v1984 = vpop.f32.mrb[0].mxu0
        %v1985 = vadd.f32 0.0, %v1984
        %1986 = vmatprep.mubr.bf16.mxu0 %v1275
        %1987 = vmatmul.mubr.bf16.gmra.mrb[0].mxu0 %v1274
        %v1988 = vpop.f32.mrb[0].mxu0
        %v1989 = vadd.f32 0.0, %v1988
        %v1990 = vpop.f32.mrb[0].mxu0
        %v1991 = vadd.f32 0.0, %v1990
        %v1992 = vpop.f32.mrb[0].mxu0
        %v1993 = vadd.f32 0.0, %v1992
        %v1994 = vpop.f32.mrb[0].mxu0
        %v1995 = vadd.f32 0.0, %v1994
        %1996 = vmatprep.mubr.bf16.mxu0 %v1278
        %1997 = vmatmul.mubr.bf16.gmra.mrb[0].mxu0 %v1277
        %v1998 = vpop.f32.mrb[0].mxu0
        %v1999 = vadd.f32 0.0, %v1998
        %v2000 = vpop.f32.mrb[0].mxu0
        %v2001 = vadd.f32 0.0, %v2000
        %v2002 = vpop.f32.mrb[0].mxu0
        %v2003 = vadd.f32 0.0, %v2002
        %v2004 = vpop.f32.mrb[0].mxu0
        %v2005 = vadd.f32 0.0, %v2004
        %2006 = vmatprep.mubr.bf16.mxu0 %v1281
        %2007 = vmatmul.mubr.bf16.gmra.mrb[0].mxu0 %v1280
        %v2008 = vpop.f32.mrb[0].mxu0
        %v2009 = vadd.f32 0.0, %v2008
        %v2010 = vpop.f32.mrb[0].mxu0
        %v2011 = vadd.f32 0.0, %v2010
        %v2012 = vpop.f32.mrb[0].mxu0
        %v2013 = vadd.f32 0.0, %v2012
        %v2014 = vpop.f32.mrb[0].mxu0
        %v2015 = vadd.f32 0.0, %v2014
        %2016 = vmatprep.mubr.bf16.mxu0 %v1284
        %2017 = vmatmul.mubr.bf16.gmra.mrb[0].mxu0 %v1283
        %v2018 = vpop.f32.mrb[0].mxu0
        %v2019 = vadd.f32 0.0, %v2018
        %v2020 = vpop.f32.mrb[0].mxu0
        %v2021 = vadd.f32 0.0, %v2020
        %v2022 = vpop.f32.mrb[0].mxu0
        %v2023 = vadd.f32 0.0, %v2022
        %v2024 = vpop.f32.mrb[0].mxu0
        %v2025 = vadd.f32 0.0, %v2024
        %2026 = vmatprep.mubr.bf16.mxu0 %v1287
        %2027 = vmatmul.mubr.bf16.gmra.mrb[0].mxu0 %v1286
        %v2028 = vpop.f32.mrb[0].mxu0
        %v2029 = vadd.f32 0.0, %v2028
        %v2030 = vpop.f32.mrb[0].mxu0
        %v2031 = vadd.f32 0.0, %v2030
        %v2032 = vpop.f32.mrb[0].mxu0
        %v2033 = vadd.f32 0.0, %v2032
        %v2034 = vpop.f32.mrb[0].mxu0
        %v2035 = vadd.f32 0.0, %v2034
        %2036 = vmatprep.mubr.bf16.mxu0 %v1290
        %2037 = vmatmul.mubr.bf16.gmra.mrb[0].mxu0 %v1289
        %v2038 = vpop.f32.mrb[0].mxu0
        %v2039 = vadd.f32 0.0, %v2038
        %v2040 = vpop.f32.mrb[0].mxu0
        %v2041 = vadd.f32 0.0, %v2040
        %v2042 = vpop.f32.mrb[0].mxu0
        %v2043 = vadd.f32 0.0, %v2042
        %v2044 = vpop.f32.mrb[0].mxu0
        %v2045 = vadd.f32 0.0, %v2044
        %2046 = vmatprep.mubr.bf16.mxu0 %v1293
        %2047 = vmatmul.mubr.bf16.gmra.mrb[0].mxu0 %v1292
        %v2048 = vpop.f32.mrb[0].mxu0
        %v2049 = vadd.f32 0.0, %v2048
        %v2050 = vpop.f32.mrb[0].mxu0
        %v2051 = vadd.f32 0.0, %v2050
        %v2052 = vpop.f32.mrb[0].mxu0
        %v2053 = vadd.f32 0.0, %v2052
        %v2054 = vpop.f32.mrb[0].mxu0
        %v2055 = vadd.f32 0.0, %v2054
        %2056 = vmatprep.mubr.bf16.mxu0 %v1296
        %2057 = vmatmul.mubr.bf16.gmra.mrb[0].mxu0 %v1295
        %v2058 = vpop.f32.mrb[0].mxu0
        %v2059 = vadd.f32 0.0, %v2058
        %v2060 = vpop.f32.mrb[0].mxu0
        %v2061 = vadd.f32 0.0, %v2060
        %v2062 = vpop.f32.mrb[0].mxu0
        %v2063 = vadd.f32 0.0, %v2062
        %v2064 = vpop.f32.mrb[0].mxu0
        %v2065 = vadd.f32 0.0, %v2064
        %2066 = vdwg.mxu0
        %2067 = vmatprep.subr.bf16.mxu0 %v1747
        %2068 = vmatpush1.bf16.msra.mxu0 %v1746
        %2069 = vmatprep.subr.bf16.mxu0 %v1751
        %2070 = vmatpush1.bf16.msra.mxu0 %v1750
        %2071 = vmatprep.subr.bf16.mxu0 %v1755
        %2072 = vmatpush1.bf16.msra.mxu0 %v1754
        %2073 = vmatprep.subr.bf16.mxu0 %v1759
        %2074 = vmatpush1.bf16.msra.mxu0 %v1758
        %2075 = vmatprep.subr.bf16.mxu0 %v1763
        %2076 = vmatpush1.bf16.msra.mxu0 %v1762
        %2077 = vmatprep.subr.bf16.mxu0 %v1767
        %2078 = vmatpush1.bf16.msra.mxu0 %v1766
        %2079 = vmatprep.subr.bf16.mxu0 %v1771
        %2080 = vmatpush1.bf16.msra.mxu0 %v1770
        %2081 = vmatprep.subr.bf16.mxu0 %v1775
        %2082 = vmatpush1.bf16.msra.mxu0 %v1774
        %2083 = vmatprep.subr.bf16.mxu0 0
        %2084 = vmatpush1.bf16.msra.mxu0 0
        %2085 = vmatprep.subr.bf16.mxu0 0
        %2086 = vmatpush1.bf16.msra.mxu0 0
        %2087 = vmatprep.subr.bf16.mxu0 0
        %2088 = vmatpush1.bf16.msra.mxu0 0
        %2089 = vmatprep.subr.bf16.mxu0 0
        %2090 = vmatpush1.bf16.msra.mxu0 0
        %2091 = vmatprep.subr.bf16.mxu0 0
        %2092 = vmatpush1.bf16.msra.mxu0 0
        %2093 = vmatprep.subr.bf16.mxu0 0
        %2094 = vmatpush1.bf16.msra.mxu0 0
        %2095 = vmatprep.subr.bf16.mxu0 0
        %2096 = vmatpush1.bf16.msra.mxu0 0
        %2097 = vmatprep.subr.bf16.mxu0 0
        %2098 = vmatpush1.bf16.msra.mxu0 0
        %2099 = vmatprep.mubr.bf16.mxu0 0
        %2100 = vmatmul.mubr.bf16.gmra.mrb[0].mxu0 %v1252
        %v2101 = vpop.f32.mrb[0].mxu0
        %v2102 = vadd.f32 %v1909, %v2101
        %v2103 = vpop.f32.mrb[0].mxu0
        %v2104 = vadd.f32 %v1911, %v2103
        %v2105 = vpop.f32.mrb[0].mxu0
        %v2106 = vadd.f32 %v1913, %v2105
        %v2107 = vpop.f32.mrb[0].mxu0
        %v2108 = vadd.f32 %v1915, %v2107
        %2109 = vmatprep.mubr.bf16.mxu0 0
        %2110 = vmatmul.mubr.bf16.gmra.mrb[0].mxu0 %v1255
        %v2111 = vpop.f32.mrb[0].mxu0
        %v2112 = vadd.f32 %v1919, %v2111
        %v2113 = vpop.f32.mrb[0].mxu0
        %v2114 = vadd.f32 %v1921, %v2113
        %v2115 = vpop.f32.mrb[0].mxu0
        %v2116 = vadd.f32 %v1923, %v2115
        %v2117 = vpop.f32.mrb[0].mxu0
        %v2118 = vadd.f32 %v1925, %v2117
        %2119 = vmatprep.mubr.bf16.mxu0 0
        %2120 = vmatmul.mubr.bf16.gmra.mrb[0].mxu0 %v1258
        %v2121 = vpop.f32.mrb[0].mxu0
        %v2122 = vadd.f32 %v1929, %v2121
        %v2123 = vpop.f32.mrb[0].mxu0
        %v2124 = vadd.f32 %v1931, %v2123
        %v2125 = vpop.f32.mrb[0].mxu0
        %v2126 = vadd.f32 %v1933, %v2125
        %v2127 = vpop.f32.mrb[0].mxu0
        %v2128 = vadd.f32 %v1935, %v2127
        %2129 = vmatprep.mubr.bf16.mxu0 0
        %2130 = vmatmul.mubr.bf16.gmra.mrb[0].mxu0 %v1261
        %v2131 = vpop.f32.mrb[0].mxu0
        %v2132 = vadd.f32 %v1939, %v2131
        %v2133 = vpop.f32.mrb[0].mxu0
        %v2134 = vadd.f32 %v1941, %v2133
        %v2135 = vpop.f32.mrb[0].mxu0
        %v2136 = vadd.f32 %v1943, %v2135
        %v2137 = vpop.f32.mrb[0].mxu0
        %v2138 = vadd.f32 %v1945, %v2137
        %2139 = vmatprep.mubr.bf16.mxu0 0
        %2140 = vmatmul.mubr.bf16.gmra.mrb[0].mxu0 %v1264
        %v2141 = vpop.f32.mrb[0].mxu0
        %v2142 = vadd.f32 %v1949, %v2141
        %v2143 = vpop.f32.mrb[0].mxu0
        %v2144 = vadd.f32 %v1951, %v2143
        %v2145 = vpop.f32.mrb[0].mxu0
        %v2146 = vadd.f32 %v1953, %v2145
        %v2147 = vpop.f32.mrb[0].mxu0
        %v2148 = vadd.f32 %v1955, %v2147
        %2149 = vmatprep.mubr.bf16.mxu0 0
        %2150 = vmatmul.mubr.bf16.gmra.mrb[0].mxu0 %v1267
        %v2151 = vpop.f32.mrb[0].mxu0
        %v2152 = vadd.f32 %v1959, %v2151
        %v2153 = vpop.f32.mrb[0].mxu0
        %v2154 = vadd.f32 %v1961, %v2153
        %v2155 = vpop.f32.mrb[0].mxu0
        %v2156 = vadd.f32 %v1963, %v2155
        %v2157 = vpop.f32.mrb[0].mxu0
        %v2158 = vadd.f32 %v1965, %v2157
        %2159 = vmatprep.mubr.bf16.mxu0 0
        %2160 = vmatmul.mubr.bf16.gmra.mrb[0].mxu0 %v1270
        %v2161 = vpop.f32.mrb[0].mxu0
        %v2162 = vadd.f32 %v1969, %v2161
        %v2163 = vpop.f32.mrb[0].mxu0
        %v2164 = vadd.f32 %v1971, %v2163
        %v2165 = vpop.f32.mrb[0].mxu0
        %v2166 = vadd.f32 %v1973, %v2165
        %v2167 = vpop.f32.mrb[0].mxu0
        %v2168 = vadd.f32 %v1975, %v2167
        %2169 = vmatprep.mubr.bf16.mxu0 0
        %2170 = vmatmul.mubr.bf16.gmra.mrb[0].mxu0 %v1273
        %v2171 = vpop.f32.mrb[0].mxu0
        %v2172 = vadd.f32 %v1979, %v2171
        %v2173 = vpop.f32.mrb[0].mxu0
        %v2174 = vadd.f32 %v1981, %v2173
        %v2175 = vpop.f32.mrb[0].mxu0
        %v2176 = vadd.f32 %v1983, %v2175
        %v2177 = vpop.f32.mrb[0].mxu0
        %v2178 = vadd.f32 %v1985, %v2177
        %2179 = vmatprep.mubr.bf16.mxu0 0
        %2180 = vmatmul.mubr.bf16.gmra.mrb[0].mxu0 %v1276
        %v2181 = vpop.f32.mrb[0].mxu0
        %v2182 = vadd.f32 %v1989, %v2181
        %v2183 = vpop.f32.mrb[0].mxu0
        %v2184 = vadd.f32 %v1991, %v2183
        %v2185 = vpop.f32.mrb[0].mxu0
        %v2186 = vadd.f32 %v1993, %v2185
        %v2187 = vpop.f32.mrb[0].mxu0
        %v2188 = vadd.f32 %v1995, %v2187
        %2189 = vmatprep.mubr.bf16.mxu0 0
        %2190 = vmatmul.mubr.bf16.gmra.mrb[0].mxu0 %v1279
        %v2191 = vpop.f32.mrb[0].mxu0
        %v2192 = vadd.f32 %v1999, %v2191
        %v2193 = vpop.f32.mrb[0].mxu0
        %v2194 = vadd.f32 %v2001, %v2193
        %v2195 = vpop.f32.mrb[0].mxu0
        %v2196 = vadd.f32 %v2003, %v2195
        %v2197 = vpop.f32.mrb[0].mxu0
        %v2198 = vadd.f32 %v2005, %v2197
        %2199 = vmatprep.mubr.bf16.mxu0 0
        %2200 = vmatmul.mubr.bf16.gmra.mrb[0].mxu0 %v1282
        %v2201 = vpop.f32.mrb[0].mxu0
        %v2202 = vadd.f32 %v2009, %v2201
        %v2203 = vpop.f32.mrb[0].mxu0
        %v2204 = vadd.f32 %v2011, %v2203
        %v2205 = vpop.f32.mrb[0].mxu0
        %v2206 = vadd.f32 %v2013, %v2205
        %v2207 = vpop.f32.mrb[0].mxu0
        %v2208 = vadd.f32 %v2015, %v2207
        %2209 = vmatprep.mubr.bf16.mxu0 0
        %2210 = vmatmul.mubr.bf16.gmra.mrb[0].mxu0 %v1285
        %v2211 = vpop.f32.mrb[0].mxu0
        %v2212 = vadd.f32 %v2019, %v2211
        %v2213 = vpop.f32.mrb[0].mxu0
        %v2214 = vadd.f32 %v2021, %v2213
        %v2215 = vpop.f32.mrb[0].mxu0
        %v2216 = vadd.f32 %v2023, %v2215
        %v2217 = vpop.f32.mrb[0].mxu0
        %v2218 = vadd.f32 %v2025, %v2217
        %2219 = vmatprep.mubr.bf16.mxu0 0
        %2220 = vmatmul.mubr.bf16.gmra.mrb[0].mxu0 %v1288
        %v2221 = vpop.f32.mrb[0].mxu0
        %v2222 = vadd.f32 %v2029, %v2221
        %v2223 = vpop.f32.mrb[0].mxu0
        %v2224 = vadd.f32 %v2031, %v2223
        %v2225 = vpop.f32.mrb[0].mxu0
        %v2226 = vadd.f32 %v2033, %v2225
        %v2227 = vpop.f32.mrb[0].mxu0
        %v2228 = vadd.f32 %v2035, %v2227
        %2229 = vmatprep.mubr.bf16.mxu0 0
        %2230 = vmatmul.mubr.bf16.gmra.mrb[0].mxu0 %v1291
        %v2231 = vpop.f32.mrb[0].mxu0
        %v2232 = vadd.f32 %v2039, %v2231
        %v2233 = vpop.f32.mrb[0].mxu0
        %v2234 = vadd.f32 %v2041, %v2233
        %v2235 = vpop.f32.mrb[0].mxu0
        %v2236 = vadd.f32 %v2043, %v2235
        %v2237 = vpop.f32.mrb[0].mxu0
        %v2238 = vadd.f32 %v2045, %v2237
        %2239 = vmatprep.mubr.bf16.mxu0 0
        %2240 = vmatmul.mubr.bf16.gmra.mrb[0].mxu0 %v1294
        %v2241 = vpop.f32.mrb[0].mxu0
        %v2242 = vadd.f32 %v2049, %v2241
        %v2243 = vpop.f32.mrb[0].mxu0
        %v2244 = vadd.f32 %v2051, %v2243
        %v2245 = vpop.f32.mrb[0].mxu0
        %v2246 = vadd.f32 %v2053, %v2245
        %v2247 = vpop.f32.mrb[0].mxu0
        %v2248 = vadd.f32 %v2055, %v2247
        %2249 = vmatprep.mubr.bf16.mxu0 0
        %2250 = vmatmul.mubr.bf16.gmra.mrb[0].mxu0 %v1297
        %v2251 = vpop.f32.mrb[0].mxu0
        %v2252 = vadd.f32 %v2059, %v2251
        %v2253 = vpop.f32.mrb[0].mxu0
        %v2254 = vadd.f32 %v2061, %v2253
        %v2255 = vpop.f32.mrb[0].mxu0
        %v2256 = vadd.f32 %v2063, %v2255
        %v2257 = vpop.f32.mrb[0].mxu0
        %v2258 = vadd.f32 %v2065, %v2257
        %2259 = vdwg.mxu0
        %2260 = vmatprep.subr.bf16.mxu0 %v1685
        %2261 = vmatpush1.bf16.msra.mxu0 %v1684
        %2262 = vmatprep.subr.bf16.mxu0 %v1689
        %2263 = vmatpush1.bf16.msra.mxu0 %v1688
        %2264 = vmatprep.subr.bf16.mxu0 %v1693
        %2265 = vmatpush1.bf16.msra.mxu0 %v1692
        %2266 = vmatprep.subr.bf16.mxu0 %v1697
        %2267 = vmatpush1.bf16.msra.mxu0 %v1696
        %2268 = vmatprep.subr.bf16.mxu0 %v1701
        %2269 = vmatpush1.bf16.msra.mxu0 %v1700
        %2270 = vmatprep.subr.bf16.mxu0 %v1705
        %2271 = vmatpush1.bf16.msra.mxu0 %v1704
        %2272 = vmatprep.subr.bf16.mxu0 %v1709
        %2273 = vmatpush1.bf16.msra.mxu0 %v1708
        %2274 = vmatprep.subr.bf16.mxu0 %v1713
        %2275 = vmatpush1.bf16.msra.mxu0 %v1712
        %2276 = vmatprep.subr.bf16.mxu0 %v1717
        %2277 = vmatpush1.bf16.msra.mxu0 %v1716
        %2278 = vmatprep.subr.bf16.mxu0 %v1721
        %2279 = vmatpush1.bf16.msra.mxu0 %v1720
        %2280 = vmatprep.subr.bf16.mxu0 %v1725
        %2281 = vmatpush1.bf16.msra.mxu0 %v1724
        %2282 = vmatprep.subr.bf16.mxu0 %v1729
        %2283 = vmatpush1.bf16.msra.mxu0 %v1728
        %2284 = vmatprep.subr.bf16.mxu0 %v1733
        %2285 = vmatpush1.bf16.msra.mxu0 %v1732
        %2286 = vmatprep.subr.bf16.mxu0 %v1737
        %2287 = vmatpush1.bf16.msra.mxu0 %v1736
        %2288 = vmatprep.subr.bf16.mxu0 %v1741
        %2289 = vmatpush1.bf16.msra.mxu0 %v1740
        %2290 = vmatprep.subr.bf16.mxu0 %v1745
        %2291 = vmatpush1.bf16.msra.mxu0 %v1744
        %2292 = vmatprep.mubr.bf16.mxu0 %v1251
        %2293 = vmatmul.mubr.bf16.gmra.mrb[0].mxu0 %v1250
        %v2294 = vpop.f32.mrb[0].mxu0
        %v2295 = vadd.f32 0.0, %v2294
        %v2296 = vpop.f32.mrb[0].mxu0
        %v2297 = vadd.f32 0.0, %v2296
        %v2298 = vpop.f32.mrb[0].mxu0
        %v2299 = vadd.f32 0.0, %v2298
        %v2300 = vpop.f32.mrb[0].mxu0
        %v2301 = vadd.f32 0.0, %v2300
        %2302 = vmatprep.mubr.bf16.mxu0 %v1254
        %2303 = vmatmul.mubr.bf16.gmra.mrb[0].mxu0 %v1253
        %v2304 = vpop.f32.mrb[0].mxu0
        %v2305 = vadd.f32 0.0, %v2304
        %v2306 = vpop.f32.mrb[0].mxu0
        %v2307 = vadd.f32 0.0, %v2306
        %v2308 = vpop.f32.mrb[0].mxu0
        %v2309 = vadd.f32 0.0, %v2308
        %v2310 = vpop.f32.mrb[0].mxu0
        %v2311 = vadd.f32 0.0, %v2310
        %2312 = vmatprep.mubr.bf16.mxu0 %v1257
        %2313 = vmatmul.mubr.bf16.gmra.mrb[0].mxu0 %v1256
        %v2314 = vpop.f32.mrb[0].mxu0
        %v2315 = vadd.f32 0.0, %v2314
        %v2316 = vpop.f32.mrb[0].mxu0
        %v2317 = vadd.f32 0.0, %v2316
        %v2318 = vpop.f32.mrb[0].mxu0
        %v2319 = vadd.f32 0.0, %v2318
        %v2320 = vpop.f32.mrb[0].mxu0
        %v2321 = vadd.f32 0.0, %v2320
        %2322 = vmatprep.mubr.bf16.mxu0 %v1260
        %2323 = vmatmul.mubr.bf16.gmra.mrb[0].mxu0 %v1259
        %v2324 = vpop.f32.mrb[0].mxu0
        %v2325 = vadd.f32 0.0, %v2324
        %v2326 = vpop.f32.mrb[0].mxu0
        %v2327 = vadd.f32 0.0, %v2326
        %v2328 = vpop.f32.mrb[0].mxu0
        %v2329 = vadd.f32 0.0, %v2328
        %v2330 = vpop.f32.mrb[0].mxu0
        %v2331 = vadd.f32 0.0, %v2330
        %2332 = vmatprep.mubr.bf16.mxu0 %v1263
        %2333 = vmatmul.mubr.bf16.gmra.mrb[0].mxu0 %v1262
        %v2334 = vpop.f32.mrb[0].mxu0
        %v2335 = vadd.f32 0.0, %v2334
        %v2336 = vpop.f32.mrb[0].mxu0
        %v2337 = vadd.f32 0.0, %v2336
        %v2338 = vpop.f32.mrb[0].mxu0
        %v2339 = vadd.f32 0.0, %v2338
        %v2340 = vpop.f32.mrb[0].mxu0
        %v2341 = vadd.f32 0.0, %v2340
        %2342 = vmatprep.mubr.bf16.mxu0 %v1266
        %2343 = vmatmul.mubr.bf16.gmra.mrb[0].mxu0 %v1265
        %v2344 = vpop.f32.mrb[0].mxu0
        %v2345 = vadd.f32 0.0, %v2344
        %v2346 = vpop.f32.mrb[0].mxu0
        %v2347 = vadd.f32 0.0, %v2346
        %v2348 = vpop.f32.mrb[0].mxu0
        %v2349 = vadd.f32 0.0, %v2348
        %v2350 = vpop.f32.mrb[0].mxu0
        %v2351 = vadd.f32 0.0, %v2350
        %2352 = vmatprep.mubr.bf16.mxu0 %v1269
        %2353 = vmatmul.mubr.bf16.gmra.mrb[0].mxu0 %v1268
        %v2354 = vpop.f32.mrb[0].mxu0
        %v2355 = vadd.f32 0.0, %v2354
        %v2356 = vpop.f32.mrb[0].mxu0
        %v2357 = vadd.f32 0.0, %v2356
        %v2358 = vpop.f32.mrb[0].mxu0
        %v2359 = vadd.f32 0.0, %v2358
        %v2360 = vpop.f32.mrb[0].mxu0
        %v2361 = vadd.f32 0.0, %v2360
        %2362 = vmatprep.mubr.bf16.mxu0 %v1272
        %2363 = vmatmul.mubr.bf16.gmra.mrb[0].mxu0 %v1271
        %v2364 = vpop.f32.mrb[0].mxu0
        %v2365 = vadd.f32 0.0, %v2364
        %v2366 = vpop.f32.mrb[0].mxu0
        %v2367 = vadd.f32 0.0, %v2366
        %v2368 = vpop.f32.mrb[0].mxu0
        %v2369 = vadd.f32 0.0, %v2368
        %v2370 = vpop.f32.mrb[0].mxu0
        %v2371 = vadd.f32 0.0, %v2370
        %2372 = vmatprep.mubr.bf16.mxu0 %v1275
        %2373 = vmatmul.mubr.bf16.gmra.mrb[0].mxu0 %v1274
        %v2374 = vpop.f32.mrb[0].mxu0
        %v2375 = vadd.f32 0.0, %v2374
        %v2376 = vpop.f32.mrb[0].mxu0
        %v2377 = vadd.f32 0.0, %v2376
        %v2378 = vpop.f32.mrb[0].mxu0
        %v2379 = vadd.f32 0.0, %v2378
        %v2380 = vpop.f32.mrb[0].mxu0
        %v2381 = vadd.f32 0.0, %v2380
        %2382 = vmatprep.mubr.bf16.mxu0 %v1278
        %2383 = vmatmul.mubr.bf16.gmra.mrb[0].mxu0 %v1277
        %v2384 = vpop.f32.mrb[0].mxu0
        %v2385 = vadd.f32 0.0, %v2384
        %v2386 = vpop.f32.mrb[0].mxu0
        %v2387 = vadd.f32 0.0, %v2386
        %v2388 = vpop.f32.mrb[0].mxu0
        %v2389 = vadd.f32 0.0, %v2388
        %v2390 = vpop.f32.mrb[0].mxu0
        %v2391 = vadd.f32 0.0, %v2390
        %2392 = vmatprep.mubr.bf16.mxu0 %v1281
        %2393 = vmatmul.mubr.bf16.gmra.mrb[0].mxu0 %v1280
        %v2394 = vpop.f32.mrb[0].mxu0
        %v2395 = vadd.f32 0.0, %v2394
        %v2396 = vpop.f32.mrb[0].mxu0
        %v2397 = vadd.f32 0.0, %v2396
        %v2398 = vpop.f32.mrb[0].mxu0
        %v2399 = vadd.f32 0.0, %v2398
        %v2400 = vpop.f32.mrb[0].mxu0
        %v2401 = vadd.f32 0.0, %v2400
        %2402 = vmatprep.mubr.bf16.mxu0 %v1284
        %2403 = vmatmul.mubr.bf16.gmra.mrb[0].mxu0 %v1283
        %v2404 = vpop.f32.mrb[0].mxu0
        %v2405 = vadd.f32 0.0, %v2404
        %v2406 = vpop.f32.mrb[0].mxu0
        %v2407 = vadd.f32 0.0, %v2406
        %v2408 = vpop.f32.mrb[0].mxu0
        %v2409 = vadd.f32 0.0, %v2408
        %v2410 = vpop.f32.mrb[0].mxu0
        %v2411 = vadd.f32 0.0, %v2410
        %2412 = vmatprep.mubr.bf16.mxu0 %v1287
        %2413 = vmatmul.mubr.bf16.gmra.mrb[0].mxu0 %v1286
        %v2414 = vpop.f32.mrb[0].mxu0
        %v2415 = vadd.f32 0.0, %v2414
        %v2416 = vpop.f32.mrb[0].mxu0
        %v2417 = vadd.f32 0.0, %v2416
        %v2418 = vpop.f32.mrb[0].mxu0
        %v2419 = vadd.f32 0.0, %v2418
        %v2420 = vpop.f32.mrb[0].mxu0
        %v2421 = vadd.f32 0.0, %v2420
        %2422 = vmatprep.mubr.bf16.mxu0 %v1290
        %2423 = vmatmul.mubr.bf16.gmra.mrb[0].mxu0 %v1289
        %v2424 = vpop.f32.mrb[0].mxu0
        %v2425 = vadd.f32 0.0, %v2424
        %v2426 = vpop.f32.mrb[0].mxu0
        %v2427 = vadd.f32 0.0, %v2426
        %v2428 = vpop.f32.mrb[0].mxu0
        %v2429 = vadd.f32 0.0, %v2428
        %v2430 = vpop.f32.mrb[0].mxu0
        %v2431 = vadd.f32 0.0, %v2430
        %2432 = vmatprep.mubr.bf16.mxu0 %v1293
        %2433 = vmatmul.mubr.bf16.gmra.mrb[0].mxu0 %v1292
        %v2434 = vpop.f32.mrb[0].mxu0
        %v2435 = vadd.f32 0.0, %v2434
        %v2436 = vpop.f32.mrb[0].mxu0
        %v2437 = vadd.f32 0.0, %v2436
        %v2438 = vpop.f32.mrb[0].mxu0
        %v2439 = vadd.f32 0.0, %v2438
        %v2440 = vpop.f32.mrb[0].mxu0
        %v2441 = vadd.f32 0.0, %v2440
        %2442 = vmatprep.mubr.bf16.mxu0 %v1296
        %2443 = vmatmul.mubr.bf16.gmra.mrb[0].mxu0 %v1295
        %v2444 = vpop.f32.mrb[0].mxu0
        %v2445 = vadd.f32 0.0, %v2444
        %v2446 = vpop.f32.mrb[0].mxu0
        %v2447 = vadd.f32 0.0, %v2446
        %v2448 = vpop.f32.mrb[0].mxu0
        %v2449 = vadd.f32 0.0, %v2448
        %v2450 = vpop.f32.mrb[0].mxu0
        %v2451 = vadd.f32 0.0, %v2450
        %2452 = vdwg.mxu0
        %2453 = vmatprep.subr.bf16.mxu0 %v1749
        %2454 = vmatpush1.bf16.msra.mxu0 %v1748
        %2455 = vmatprep.subr.bf16.mxu0 %v1753
        %2456 = vmatpush1.bf16.msra.mxu0 %v1752
        %2457 = vmatprep.subr.bf16.mxu0 %v1757
        %2458 = vmatpush1.bf16.msra.mxu0 %v1756
        %2459 = vmatprep.subr.bf16.mxu0 %v1761
        %2460 = vmatpush1.bf16.msra.mxu0 %v1760
        %2461 = vmatprep.subr.bf16.mxu0 %v1765
        %2462 = vmatpush1.bf16.msra.mxu0 %v1764
        %2463 = vmatprep.subr.bf16.mxu0 %v1769
        %2464 = vmatpush1.bf16.msra.mxu0 %v1768
        %2465 = vmatprep.subr.bf16.mxu0 %v1773
        %2466 = vmatpush1.bf16.msra.mxu0 %v1772
        %2467 = vmatprep.subr.bf16.mxu0 %v1777
        %2468 = vmatpush1.bf16.msra.mxu0 %v1776
        %2469 = vmatprep.subr.bf16.mxu0 0
        %2470 = vmatpush1.bf16.msra.mxu0 0
        %2471 = vmatprep.subr.bf16.mxu0 0
        %2472 = vmatpush1.bf16.msra.mxu0 0
        %2473 = vmatprep.subr.bf16.mxu0 0
        %2474 = vmatpush1.bf16.msra.mxu0 0
        %2475 = vmatprep.subr.bf16.mxu0 0
        %2476 = vmatpush1.bf16.msra.mxu0 0
        %2477 = vmatprep.subr.bf16.mxu0 0
        %2478 = vmatpush1.bf16.msra.mxu0 0
        %2479 = vmatprep.subr.bf16.mxu0 0
        %2480 = vmatpush1.bf16.msra.mxu0 0
        %2481 = vmatprep.subr.bf16.mxu0 0
        %2482 = vmatpush1.bf16.msra.mxu0 0
        %2483 = vmatprep.subr.bf16.mxu0 0
        %2484 = vmatpush1.bf16.msra.mxu0 0
        %2485 = vmatprep.mubr.bf16.mxu0 0
        %2486 = vmatmul.mubr.bf16.gmra.mrb[0].mxu0 %v1252
        %v2487 = vpop.f32.mrb[0].mxu0
        %v2488 = vadd.f32 %v2295, %v2487
        %v2489 = vpop.f32.mrb[0].mxu0
        %v2490 = vadd.f32 %v2297, %v2489
        %v2491 = vpop.f32.mrb[0].mxu0
        %v2492 = vadd.f32 %v2299, %v2491
        %v2493 = vpop.f32.mrb[0].mxu0
        %v2494 = vadd.f32 %v2301, %v2493
        %2495 = vmatprep.mubr.bf16.mxu0 0
        %2496 = vmatmul.mubr.bf16.gmra.mrb[0].mxu0 %v1255
        %v2497 = vpop.f32.mrb[0].mxu0
        %v2498 = vadd.f32 %v2305, %v2497
        %v2499 = vpop.f32.mrb[0].mxu0
        %v2500 = vadd.f32 %v2307, %v2499
        %v2501 = vpop.f32.mrb[0].mxu0
        %v2502 = vadd.f32 %v2309, %v2501
        %v2503 = vpop.f32.mrb[0].mxu0
        %v2504 = vadd.f32 %v2311, %v2503
        %2505 = vmatprep.mubr.bf16.mxu0 0
        %2506 = vmatmul.mubr.bf16.gmra.mrb[0].mxu0 %v1258
        %v2507 = vpop.f32.mrb[0].mxu0
        %v2508 = vadd.f32 %v2315, %v2507
        %v2509 = vpop.f32.mrb[0].mxu0
        %v2510 = vadd.f32 %v2317, %v2509
        %v2511 = vpop.f32.mrb[0].mxu0
        %v2512 = vadd.f32 %v2319, %v2511
        %v2513 = vpop.f32.mrb[0].mxu0
        %v2514 = vadd.f32 %v2321, %v2513
        %2515 = vmatprep.mubr.bf16.mxu0 0
        %2516 = vmatmul.mubr.bf16.gmra.mrb[0].mxu0 %v1261
        %v2517 = vpop.f32.mrb[0].mxu0
        %v2518 = vadd.f32 %v2325, %v2517
        %v2519 = vpop.f32.mrb[0].mxu0
        %v2520 = vadd.f32 %v2327, %v2519
        %v2521 = vpop.f32.mrb[0].mxu0
        %v2522 = vadd.f32 %v2329, %v2521
        %v2523 = vpop.f32.mrb[0].mxu0
        %v2524 = vadd.f32 %v2331, %v2523
        %2525 = vmatprep.mubr.bf16.mxu0 0
        %2526 = vmatmul.mubr.bf16.gmra.mrb[0].mxu0 %v1264
        %v2527 = vpop.f32.mrb[0].mxu0
        %v2528 = vadd.f32 %v2335, %v2527
        %v2529 = vpop.f32.mrb[0].mxu0
        %v2530 = vadd.f32 %v2337, %v2529
        %v2531 = vpop.f32.mrb[0].mxu0
        %v2532 = vadd.f32 %v2339, %v2531
        %v2533 = vpop.f32.mrb[0].mxu0
        %v2534 = vadd.f32 %v2341, %v2533
        %2535 = vmatprep.mubr.bf16.mxu0 0
        %2536 = vmatmul.mubr.bf16.gmra.mrb[0].mxu0 %v1267
        %v2537 = vpop.f32.mrb[0].mxu0
        %v2538 = vadd.f32 %v2345, %v2537
        %v2539 = vpop.f32.mrb[0].mxu0
        %v2540 = vadd.f32 %v2347, %v2539
        %v2541 = vpop.f32.mrb[0].mxu0
        %v2542 = vadd.f32 %v2349, %v2541
        %v2543 = vpop.f32.mrb[0].mxu0
        %v2544 = vadd.f32 %v2351, %v2543
        %2545 = vmatprep.mubr.bf16.mxu0 0
        %2546 = vmatmul.mubr.bf16.gmra.mrb[0].mxu0 %v1270
        %v2547 = vpop.f32.mrb[0].mxu0
        %v2548 = vadd.f32 %v2355, %v2547
        %v2549 = vpop.f32.mrb[0].mxu0
        %v2550 = vadd.f32 %v2357, %v2549
        %v2551 = vpop.f32.mrb[0].mxu0
        %v2552 = vadd.f32 %v2359, %v2551
        %v2553 = vpop.f32.mrb[0].mxu0
        %v2554 = vadd.f32 %v2361, %v2553
        %2555 = vmatprep.mubr.bf16.mxu0 0
        %2556 = vmatmul.mubr.bf16.gmra.mrb[0].mxu0 %v1273
        %v2557 = vpop.f32.mrb[0].mxu0
        %v2558 = vadd.f32 %v2365, %v2557
        %v2559 = vpop.f32.mrb[0].mxu0
        %v2560 = vadd.f32 %v2367, %v2559
        %v2561 = vpop.f32.mrb[0].mxu0
        %v2562 = vadd.f32 %v2369, %v2561
        %v2563 = vpop.f32.mrb[0].mxu0
        %v2564 = vadd.f32 %v2371, %v2563
        %2565 = vmatprep.mubr.bf16.mxu0 0
        %2566 = vmatmul.mubr.bf16.gmra.mrb[0].mxu0 %v1276
        %v2567 = vpop.f32.mrb[0].mxu0
        %v2568 = vadd.f32 %v2375, %v2567
        %v2569 = vpop.f32.mrb[0].mxu0
        %v2570 = vadd.f32 %v2377, %v2569
        %v2571 = vpop.f32.mrb[0].mxu0
        %v2572 = vadd.f32 %v2379, %v2571
        %v2573 = vpop.f32.mrb[0].mxu0
        %v2574 = vadd.f32 %v2381, %v2573
        %2575 = vmatprep.mubr.bf16.mxu0 0
        %2576 = vmatmul.mubr.bf16.gmra.mrb[0].mxu0 %v1279
        %v2577 = vpop.f32.mrb[0].mxu0
        %v2578 = vadd.f32 %v2385, %v2577
        %v2579 = vpop.f32.mrb[0].mxu0
        %v2580 = vadd.f32 %v2387, %v2579
        %v2581 = vpop.f32.mrb[0].mxu0
        %v2582 = vadd.f32 %v2389, %v2581
        %v2583 = vpop.f32.mrb[0].mxu0
        %v2584 = vadd.f32 %v2391, %v2583
        %2585 = vmatprep.mubr.bf16.mxu0 0
        %2586 = vmatmul.mubr.bf16.gmra.mrb[0].mxu0 %v1282
        %v2587 = vpop.f32.mrb[0].mxu0
        %v2588 = vadd.f32 %v2395, %v2587
        %v2589 = vpop.f32.mrb[0].mxu0
        %v2590 = vadd.f32 %v2397, %v2589
        %v2591 = vpop.f32.mrb[0].mxu0
        %v2592 = vadd.f32 %v2399, %v2591
        %v2593 = vpop.f32.mrb[0].mxu0
        %v2594 = vadd.f32 %v2401, %v2593
        %2595 = vmatprep.mubr.bf16.mxu0 0
        %2596 = vmatmul.mubr.bf16.gmra.mrb[0].mxu0 %v1285
        %v2597 = vpop.f32.mrb[0].mxu0
        %v2598 = vadd.f32 %v2405, %v2597
        %v2599 = vpop.f32.mrb[0].mxu0
        %v2600 = vadd.f32 %v2407, %v2599
        %v2601 = vpop.f32.mrb[0].mxu0
        %v2602 = vadd.f32 %v2409, %v2601
        %v2603 = vpop.f32.mrb[0].mxu0
        %v2604 = vadd.f32 %v2411, %v2603
        %2605 = vmatprep.mubr.bf16.mxu0 0
        %2606 = vmatmul.mubr.bf16.gmra.mrb[0].mxu0 %v1288
        %v2607 = vpop.f32.mrb[0].mxu0
        %v2608 = vadd.f32 %v2415, %v2607
        %v2609 = vpop.f32.mrb[0].mxu0
        %v2610 = vadd.f32 %v2417, %v2609
        %v2611 = vpop.f32.mrb[0].mxu0
        %v2612 = vadd.f32 %v2419, %v2611
        %v2613 = vpop.f32.mrb[0].mxu0
        %v2614 = vadd.f32 %v2421, %v2613
        %2615 = vmatprep.mubr.bf16.mxu0 0
        %2616 = vmatmul.mubr.bf16.gmra.mrb[0].mxu0 %v1291
        %v2617 = vpop.f32.mrb[0].mxu0
        %v2618 = vadd.f32 %v2425, %v2617
        %v2619 = vpop.f32.mrb[0].mxu0
        %v2620 = vadd.f32 %v2427, %v2619
        %v2621 = vpop.f32.mrb[0].mxu0
        %v2622 = vadd.f32 %v2429, %v2621
        %v2623 = vpop.f32.mrb[0].mxu0
        %v2624 = vadd.f32 %v2431, %v2623
        %2625 = vmatprep.mubr.bf16.mxu0 0
        %2626 = vmatmul.mubr.bf16.gmra.mrb[0].mxu0 %v1294
        %v2627 = vpop.f32.mrb[0].mxu0
        %v2628 = vadd.f32 %v2435, %v2627
        %v2629 = vpop.f32.mrb[0].mxu0
        %v2630 = vadd.f32 %v2437, %v2629
        %v2631 = vpop.f32.mrb[0].mxu0
        %v2632 = vadd.f32 %v2439, %v2631
        %v2633 = vpop.f32.mrb[0].mxu0
        %v2634 = vadd.f32 %v2441, %v2633
        %2635 = vmatprep.mubr.bf16.mxu0 0
        %2636 = vmatmul.mubr.bf16.gmra.mrb[0].mxu0 %v1297
        %v2637 = vpop.f32.mrb[0].mxu0
        %v2638 = vadd.f32 %v2445, %v2637
        %v2639 = vpop.f32.mrb[0].mxu0
        %v2640 = vadd.f32 %v2447, %v2639
        %v2641 = vpop.f32.mrb[0].mxu0
        %v2642 = vadd.f32 %v2449, %v2641
        %v2643 = vpop.f32.mrb[0].mxu0
        %v2644 = vadd.f32 %v2451, %v2643
        %2645 = vdwg.mxu0
        %v2646 = vmul.f32 %v2102, 0.5
        %v2647 = vmul.f32 %v2104, 0.5
        %v2648 = vmul.f32 %v2488, 0.5
        %v2649 = vmul.f32 %v2490, 0.5
        %v2650 = vmul.f32 %v2106, 0.5
        %v2651 = vmul.f32 %v2108, 0.5
        %v2652 = vmul.f32 %v2492, 0.5
        %v2653 = vmul.f32 %v2494, 0.5
        %v2654 = vmul.f32 %v2112, 0.5
        %v2655 = vmul.f32 %v2114, 0.5
        %v2656 = vmul.f32 %v2498, 0.5
        %v2657 = vmul.f32 %v2500, 0.5
        %v2658 = vmul.f32 %v2116, 0.5
        %v2659 = vmul.f32 %v2118, 0.5
        %v2660 = vmul.f32 %v2502, 0.5
        %v2661 = vmul.f32 %v2504, 0.5
        %v2662 = vmul.f32 %v2122, 0.5
        %v2663 = vmul.f32 %v2124, 0.5
        %v2664 = vmul.f32 %v2508, 0.5
        %v2665 = vmul.f32 %v2510, 0.5
        %v2666 = vmul.f32 %v2126, 0.5
        %v2667 = vmul.f32 %v2128, 0.5
        %v2668 = vmul.f32 %v2512, 0.5
        %v2669 = vmul.f32 %v2514, 0.5
        %v2670 = vmul.f32 %v2132, 0.5
        %v2671 = vmul.f32 %v2134, 0.5
        %v2672 = vmul.f32 %v2518, 0.5
        %v2673 = vmul.f32 %v2520, 0.5
        %v2674 = vmul.f32 %v2136, 0.5
        %v2675 = vmul.f32 %v2138, 0.5
        %v2676 = vmul.f32 %v2522, 0.5
        %v2677 = vmul.f32 %v2524, 0.5
        %v2678 = vmul.f32 %v2142, 0.5
        %v2679 = vmul.f32 %v2144, 0.5
        %v2680 = vmul.f32 %v2528, 0.5
        %v2681 = vmul.f32 %v2530, 0.5
        %v2682 = vmul.f32 %v2146, 0.5
        %v2683 = vmul.f32 %v2148, 0.5
        %v2684 = vmul.f32 %v2532, 0.5
        %v2685 = vmul.f32 %v2534, 0.5
        %v2686 = vmul.f32 %v2152, 0.5
        %v2687 = vmul.f32 %v2154, 0.5
        %v2688 = vmul.f32 %v2538, 0.5
        %v2689 = vmul.f32 %v2540, 0.5
        %v2690 = vmul.f32 %v2156, 0.5
        %v2691 = vmul.f32 %v2158, 0.5
        %v2692 = vmul.f32 %v2542, 0.5
        %v2693 = vmul.f32 %v2544, 0.5
        %v2694 = vmul.f32 %v2162, 0.5
        %v2695 = vmul.f32 %v2164, 0.5
        %v2696 = vmul.f32 %v2548, 0.5
        %v2697 = vmul.f32 %v2550, 0.5
        %v2698 = vmul.f32 %v2166, 0.5
        %v2699 = vmul.f32 %v2168, 0.5
        %v2700 = vmul.f32 %v2552, 0.5
        %v2701 = vmul.f32 %v2554, 0.5
        %v2702 = vmul.f32 %v2172, 0.5
        %v2703 = vmul.f32 %v2174, 0.5
        %v2704 = vmul.f32 %v2558, 0.5
        %v2705 = vmul.f32 %v2560, 0.5
        %v2706 = vmul.f32 %v2176, 0.5
        %v2707 = vmul.f32 %v2178, 0.5
        %v2708 = vmul.f32 %v2562, 0.5
        %v2709 = vmul.f32 %v2564, 0.5
        %v2710 = vmul.f32 %v2182, 0.5
        %v2711 = vmul.f32 %v2184, 0.5
        %v2712 = vmul.f32 %v2568, 0.5
        %v2713 = vmul.f32 %v2570, 0.5
        %v2714 = vmul.f32 %v2186, 0.5
        %v2715 = vmul.f32 %v2188, 0.5
        %v2716 = vmul.f32 %v2572, 0.5
        %v2717 = vmul.f32 %v2574, 0.5
        %v2718 = vmul.f32 %v2192, 0.5
        %v2719 = vmul.f32 %v2194, 0.5
        %v2720 = vmul.f32 %v2578, 0.5
        %v2721 = vmul.f32 %v2580, 0.5
        %v2722 = vmul.f32 %v2196, 0.5
        %v2723 = vmul.f32 %v2198, 0.5
        %v2724 = vmul.f32 %v2582, 0.5
        %v2725 = vmul.f32 %v2584, 0.5
        %v2726 = vmul.f32 %v2202, 0.5
        %v2727 = vmul.f32 %v2204, 0.5
        %v2728 = vmul.f32 %v2588, 0.5
        %v2729 = vmul.f32 %v2590, 0.5
        %v2730 = vmul.f32 %v2206, 0.5
        %v2731 = vmul.f32 %v2208, 0.5
        %v2732 = vmul.f32 %v2592, 0.5
        %v2733 = vmul.f32 %v2594, 0.5
        %v2734 = vmul.f32 %v2212, 0.5
        %v2735 = vmul.f32 %v2214, 0.5
        %v2736 = vmul.f32 %v2598, 0.5
        %v2737 = vmul.f32 %v2600, 0.5
        %v2738 = vmul.f32 %v2216, 0.5
        %v2739 = vmul.f32 %v2218, 0.5
        %v2740 = vmul.f32 %v2602, 0.5
        %v2741 = vmul.f32 %v2604, 0.5
        %v2742 = vmul.f32 %v2222, 0.5
        %v2743 = vmul.f32 %v2224, 0.5
        %v2744 = vmul.f32 %v2608, 0.5
        %v2745 = vmul.f32 %v2610, 0.5
        %v2746 = vmul.f32 %v2226, 0.5
        %v2747 = vmul.f32 %v2228, 0.5
        %v2748 = vmul.f32 %v2612, 0.5
        %v2749 = vmul.f32 %v2614, 0.5
        %v2750 = vmul.f32 %v2232, 0.5
        %v2751 = vmul.f32 %v2234, 0.5
        %v2752 = vmul.f32 %v2618, 0.5
        %v2753 = vmul.f32 %v2620, 0.5
        %v2754 = vmul.f32 %v2236, 0.5
        %v2755 = vmul.f32 %v2238, 0.5
        %v2756 = vmul.f32 %v2622, 0.5
        %v2757 = vmul.f32 %v2624, 0.5
        %v2758 = vmul.f32 %v2242, 0.5
        %v2759 = vmul.f32 %v2244, 0.5
        %v2760 = vmul.f32 %v2628, 0.5
        %v2761 = vmul.f32 %v2630, 0.5
        %v2762 = vmul.f32 %v2246, 0.5
        %v2763 = vmul.f32 %v2248, 0.5
        %v2764 = vmul.f32 %v2632, 0.5
        %v2765 = vmul.f32 %v2634, 0.5
        %v2766 = vmul.f32 %v2252, 0.5
        %v2767 = vmul.f32 %v2254, 0.5
        %v2768 = vmul.f32 %v2638, 0.5
        %v2769 = vmul.f32 %v2640, 0.5
        %v2770 = vmul.f32 %v2256, 0.5
        %v2771 = vmul.f32 %v2258, 0.5
        %v2772 = vmul.f32 %v2642, 0.5
        %v2773 = vmul.f32 %v2644, 0.5
        %v2774 = vmul.f32 %v2102, 0.70710677
        %v2775 = vmul.f32 %v2104, 0.70710677
        %v2776 = vmul.f32 %v2488, 0.70710677
        %v2777 = vmul.f32 %v2490, 0.70710677
        %v2778 = vmul.f32 %v2106, 0.70710677
        %v2779 = vmul.f32 %v2108, 0.70710677
        %v2780 = vmul.f32 %v2492, 0.70710677
        %v2781 = vmul.f32 %v2494, 0.70710677
        %v2782 = vmul.f32 %v2112, 0.70710677
        %v2783 = vmul.f32 %v2114, 0.70710677
        %v2784 = vmul.f32 %v2498, 0.70710677
        %v2785 = vmul.f32 %v2500, 0.70710677
        %v2786 = vmul.f32 %v2116, 0.70710677
        %v2787 = vmul.f32 %v2118, 0.70710677
        %v2788 = vmul.f32 %v2502, 0.70710677
        %v2789 = vmul.f32 %v2504, 0.70710677
        %v2790 = vmul.f32 %v2122, 0.70710677
        %v2791 = vmul.f32 %v2124, 0.70710677
        %v2792 = vmul.f32 %v2508, 0.70710677
        %v2793 = vmul.f32 %v2510, 0.70710677
        %v2794 = vmul.f32 %v2126, 0.70710677
        %v2795 = vmul.f32 %v2128, 0.70710677
        %v2796 = vmul.f32 %v2512, 0.70710677
        %v2797 = vmul.f32 %v2514, 0.70710677
        %v2798 = vmul.f32 %v2132, 0.70710677
        %v2799 = vmul.f32 %v2134, 0.70710677
        %v2800 = vmul.f32 %v2518, 0.70710677
        %v2801 = vmul.f32 %v2520, 0.70710677
        %v2802 = vmul.f32 %v2136, 0.70710677
        %v2803 = vmul.f32 %v2138, 0.70710677
        %v2804 = vmul.f32 %v2522, 0.70710677
        %v2805 = vmul.f32 %v2524, 0.70710677
        %v2806 = vmul.f32 %v2142, 0.70710677
        %v2807 = vmul.f32 %v2144, 0.70710677
        %v2808 = vmul.f32 %v2528, 0.70710677
        %v2809 = vmul.f32 %v2530, 0.70710677
        %v2810 = vmul.f32 %v2146, 0.70710677
        %v2811 = vmul.f32 %v2148, 0.70710677
        %v2812 = vmul.f32 %v2532, 0.70710677
        %v2813 = vmul.f32 %v2534, 0.70710677
        %v2814 = vmul.f32 %v2152, 0.70710677
        %v2815 = vmul.f32 %v2154, 0.70710677
        %v2816 = vmul.f32 %v2538, 0.70710677
        %v2817 = vmul.f32 %v2540, 0.70710677
        %v2818 = vmul.f32 %v2156, 0.70710677
        %v2819 = vmul.f32 %v2158, 0.70710677
        %v2820 = vmul.f32 %v2542, 0.70710677
        %v2821 = vmul.f32 %v2544, 0.70710677
        %v2822 = vmul.f32 %v2162, 0.70710677
        %v2823 = vmul.f32 %v2164, 0.70710677
        %v2824 = vmul.f32 %v2548, 0.70710677
        %v2825 = vmul.f32 %v2550, 0.70710677
        %v2826 = vmul.f32 %v2166, 0.70710677
        %v2827 = vmul.f32 %v2168, 0.70710677
        %v2828 = vmul.f32 %v2552, 0.70710677
        %v2829 = vmul.f32 %v2554, 0.70710677
        %v2830 = vmul.f32 %v2172, 0.70710677
        %v2831 = vmul.f32 %v2174, 0.70710677
        %v2832 = vmul.f32 %v2558, 0.70710677
        %v2833 = vmul.f32 %v2560, 0.70710677
        %v2834 = vmul.f32 %v2176, 0.70710677
        %v2835 = vmul.f32 %v2178, 0.70710677
        %v2836 = vmul.f32 %v2562, 0.70710677
        %v2837 = vmul.f32 %v2564, 0.70710677
        %v2838 = vmul.f32 %v2182, 0.70710677
        %v2839 = vmul.f32 %v2184, 0.70710677
        %v2840 = vmul.f32 %v2568, 0.70710677
        %v2841 = vmul.f32 %v2570, 0.70710677
        %v2842 = vmul.f32 %v2186, 0.70710677
        %v2843 = vmul.f32 %v2188, 0.70710677
        %v2844 = vmul.f32 %v2572, 0.70710677
        %v2845 = vmul.f32 %v2574, 0.70710677
        %v2846 = vmul.f32 %v2192, 0.70710677
        %v2847 = vmul.f32 %v2194, 0.70710677
        %v2848 = vmul.f32 %v2578, 0.70710677
        %v2849 = vmul.f32 %v2580, 0.70710677
        %v2850 = vmul.f32 %v2196, 0.70710677
        %v2851 = vmul.f32 %v2198, 0.70710677
        %v2852 = vmul.f32 %v2582, 0.70710677
        %v2853 = vmul.f32 %v2584, 0.70710677
        %v2854 = vmul.f32 %v2202, 0.70710677
        %v2855 = vmul.f32 %v2204, 0.70710677
        %v2856 = vmul.f32 %v2588, 0.70710677
        %v2857 = vmul.f32 %v2590, 0.70710677
        %v2858 = vmul.f32 %v2206, 0.70710677
        %v2859 = vmul.f32 %v2208, 0.70710677
        %v2860 = vmul.f32 %v2592, 0.70710677
        %v2861 = vmul.f32 %v2594, 0.70710677
        %v2862 = vmul.f32 %v2212, 0.70710677
        %v2863 = vmul.f32 %v2214, 0.70710677
        %v2864 = vmul.f32 %v2598, 0.70710677
        %v2865 = vmul.f32 %v2600, 0.70710677
        %v2866 = vmul.f32 %v2216, 0.70710677
        %v2867 = vmul.f32 %v2218, 0.70710677
        %v2868 = vmul.f32 %v2602, 0.70710677
        %v2869 = vmul.f32 %v2604, 0.70710677
        %v2870 = vmul.f32 %v2222, 0.70710677
        %v2871 = vmul.f32 %v2224, 0.70710677
        %v2872 = vmul.f32 %v2608, 0.70710677
        %v2873 = vmul.f32 %v2610, 0.70710677
        %v2874 = vmul.f32 %v2226, 0.70710677
        %v2875 = vmul.f32 %v2228, 0.70710677
        %v2876 = vmul.f32 %v2612, 0.70710677
        %v2877 = vmul.f32 %v2614, 0.70710677
        %v2878 = vmul.f32 %v2232, 0.70710677
        %v2879 = vmul.f32 %v2234, 0.70710677
        %v2880 = vmul.f32 %v2618, 0.70710677
        %v2881 = vmul.f32 %v2620, 0.70710677
        %v2882 = vmul.f32 %v2236, 0.70710677
        %v2883 = vmul.f32 %v2238, 0.70710677
        %v2884 = vmul.f32 %v2622, 0.70710677
        %v2885 = vmul.f32 %v2624, 0.70710677
        %v2886 = vmul.f32 %v2242, 0.70710677
        %v2887 = vmul.f32 %v2244, 0.70710677
        %v2888 = vmul.f32 %v2628, 0.70710677
        %v2889 = vmul.f32 %v2630, 0.70710677
        %v2890 = vmul.f32 %v2246, 0.70710677
        %v2891 = vmul.f32 %v2248, 0.70710677
        %v2892 = vmul.f32 %v2632, 0.70710677
        %v2893 = vmul.f32 %v2634, 0.70710677
        %v2894 = vmul.f32 %v2252, 0.70710677
        %v2895 = vmul.f32 %v2254, 0.70710677
        %v2896 = vmul.f32 %v2638, 0.70710677
        %v2897 = vmul.f32 %v2640, 0.70710677
        %v2898 = vmul.f32 %v2256, 0.70710677
        %v2899 = vmul.f32 %v2258, 0.70710677
        %v2900 = vmul.f32 %v2642, 0.70710677
        %v2901 = vmul.f32 %v2644, 0.70710677
        %v2902 = verf.f32.pop %v2774
        %v2903 = verf.f32.pop %v2775
        %v2904 = verf.f32.pop %v2776
        %v2905 = verf.f32.pop %v2777
        %v2906 = verf.f32.pop %v2778
        %v2907 = verf.f32.pop %v2779
        %v2908 = verf.f32.pop %v2780
        %v2909 = verf.f32.pop %v2781
        %v2910 = verf.f32.pop %v2782
        %v2911 = verf.f32.pop %v2783
        %v2912 = verf.f32.pop %v2784
        %v2913 = verf.f32.pop %v2785
        %v2914 = verf.f32.pop %v2786
        %v2915 = verf.f32.pop %v2787
        %v2916 = verf.f32.pop %v2788
        %v2917 = verf.f32.pop %v2789
        %v2918 = verf.f32.pop %v2790
        %v2919 = verf.f32.pop %v2791
        %v2920 = verf.f32.pop %v2792
        %v2921 = verf.f32.pop %v2793
        %v2922 = verf.f32.pop %v2794
        %v2923 = verf.f32.pop %v2795
        %v2924 = verf.f32.pop %v2796
        %v2925 = verf.f32.pop %v2797
        %v2926 = verf.f32.pop %v2798
        %v2927 = verf.f32.pop %v2799
        %v2928 = verf.f32.pop %v2800
        %v2929 = verf.f32.pop %v2801
        %v2930 = verf.f32.pop %v2802
        %v2931 = verf.f32.pop %v2803
        %v2932 = verf.f32.pop %v2804
        %v2933 = verf.f32.pop %v2805
        %v2934 = verf.f32.pop %v2806
        %v2935 = verf.f32.pop %v2807
        %v2936 = verf.f32.pop %v2808
        %v2937 = verf.f32.pop %v2809
        %v2938 = verf.f32.pop %v2810
        %v2939 = verf.f32.pop %v2811
        %v2940 = verf.f32.pop %v2812
        %v2941 = verf.f32.pop %v2813
        %v2942 = verf.f32.pop %v2814
        %v2943 = verf.f32.pop %v2815
        %v2944 = verf.f32.pop %v2816
        %v2945 = verf.f32.pop %v2817
        %v2946 = verf.f32.pop %v2818
        %v2947 = verf.f32.pop %v2819
        %v2948 = verf.f32.pop %v2820
        %v2949 = verf.f32.pop %v2821
        %v2950 = verf.f32.pop %v2822
        %v2951 = verf.f32.pop %v2823
        %v2952 = verf.f32.pop %v2824
        %v2953 = verf.f32.pop %v2825
        %v2954 = verf.f32.pop %v2826
        %v2955 = verf.f32.pop %v2827
        %v2956 = verf.f32.pop %v2828
        %v2957 = verf.f32.pop %v2829
        %v2958 = verf.f32.pop %v2830
        %v2959 = verf.f32.pop %v2831
        %v2960 = verf.f32.pop %v2832
        %v2961 = verf.f32.pop %v2833
        %v2962 = verf.f32.pop %v2834
        %v2963 = verf.f32.pop %v2835
        %v2964 = verf.f32.pop %v2836
        %v2965 = verf.f32.pop %v2837
        %v2966 = verf.f32.pop %v2838
        %v2967 = verf.f32.pop %v2839
        %v2968 = verf.f32.pop %v2840
        %v2969 = verf.f32.pop %v2841
        %v2970 = verf.f32.pop %v2842
        %v2971 = verf.f32.pop %v2843
        %v2972 = verf.f32.pop %v2844
        %v2973 = verf.f32.pop %v2845
        %v2974 = verf.f32.pop %v2846
        %v2975 = verf.f32.pop %v2847
        %v2976 = verf.f32.pop %v2848
        %v2977 = verf.f32.pop %v2849
        %v2978 = verf.f32.pop %v2850
        %v2979 = verf.f32.pop %v2851
        %v2980 = verf.f32.pop %v2852
        %v2981 = verf.f32.pop %v2853
        %v2982 = verf.f32.pop %v2854
        %v2983 = verf.f32.pop %v2855
        %v2984 = verf.f32.pop %v2856
        %v2985 = verf.f32.pop %v2857
        %v2986 = verf.f32.pop %v2858
        %v2987 = verf.f32.pop %v2859
        %v2988 = verf.f32.pop %v2860
        %v2989 = verf.f32.pop %v2861
        %v2990 = verf.f32.pop %v2862
        %v2991 = verf.f32.pop %v2863
        %v2992 = verf.f32.pop %v2864
        %v2993 = verf.f32.pop %v2865
        %v2994 = verf.f32.pop %v2866
        %v2995 = verf.f32.pop %v2867
        %v2996 = verf.f32.pop %v2868
        %v2997 = verf.f32.pop %v2869
        %v2998 = verf.f32.pop %v2870
        %v2999 = verf.f32.pop %v2871
        %v3000 = verf.f32.pop %v2872
        %v3001 = verf.f32.pop %v2873
        %v3002 = verf.f32.pop %v2874
        %v3003 = verf.f32.pop %v2875
        %v3004 = verf.f32.pop %v2876
        %v3005 = verf.f32.pop %v2877
        %v3006 = verf.f32.pop %v2878
        %v3007 = verf.f32.pop %v2879
        %v3008 = verf.f32.pop %v2880
        %v3009 = verf.f32.pop %v2881
        %v3010 = verf.f32.pop %v2882
        %v3011 = verf.f32.pop %v2883
        %v3012 = verf.f32.pop %v2884
        %v3013 = verf.f32.pop %v2885
        %v3014 = verf.f32.pop %v2886
        %v3015 = verf.f32.pop %v2887
        %v3016 = verf.f32.pop %v2888
        %v3017 = verf.f32.pop %v2889
        %v3018 = verf.f32.pop %v2890
        %v3019 = verf.f32.pop %v2891
        %v3020 = verf.f32.pop %v2892
        %v3021 = verf.f32.pop %v2893
        %v3022 = verf.f32.pop %v2894
        %v3023 = verf.f32.pop %v2895
        %v3024 = verf.f32.pop %v2896
        %v3025 = verf.f32.pop %v2897
        %v3026 = verf.f32.pop %v2898
        %v3027 = verf.f32.pop %v2899
        %v3028 = verf.f32.pop %v2900
        %v3029 = verf.f32.pop %v2901
        %v3030 = vadd.f32 %v2902, 1.0
        %v3031 = vadd.f32 %v2903, 1.0
        %v3032 = vadd.f32 %v2904, 1.0
        %v3033 = vadd.f32 %v2905, 1.0
        %v3034 = vadd.f32 %v2906, 1.0
        %v3035 = vadd.f32 %v2907, 1.0
        %v3036 = vadd.f32 %v2908, 1.0
        %v3037 = vadd.f32 %v2909, 1.0
        %v3038 = vadd.f32 %v2910, 1.0
        %v3039 = vadd.f32 %v2911, 1.0
        %v3040 = vadd.f32 %v2912, 1.0
        %v3041 = vadd.f32 %v2913, 1.0
        %v3042 = vadd.f32 %v2914, 1.0
        %v3043 = vadd.f32 %v2915, 1.0
        %v3044 = vadd.f32 %v2916, 1.0
        %v3045 = vadd.f32 %v2917, 1.0
        %v3046 = vadd.f32 %v2918, 1.0
        %v3047 = vadd.f32 %v2919, 1.0
        %v3048 = vadd.f32 %v2920, 1.0
        %v3049 = vadd.f32 %v2921, 1.0
        %v3050 = vadd.f32 %v2922, 1.0
        %v3051 = vadd.f32 %v2923, 1.0
        %v3052 = vadd.f32 %v2924, 1.0
        %v3053 = vadd.f32 %v2925, 1.0
        %v3054 = vadd.f32 %v2926, 1.0
        %v3055 = vadd.f32 %v2927, 1.0
        %v3056 = vadd.f32 %v2928, 1.0
        %v3057 = vadd.f32 %v2929, 1.0
        %v3058 = vadd.f32 %v2930, 1.0
        %v3059 = vadd.f32 %v2931, 1.0
        %v3060 = vadd.f32 %v2932, 1.0
        %v3061 = vadd.f32 %v2933, 1.0
        %v3062 = vadd.f32 %v2934, 1.0
        %v3063 = vadd.f32 %v2935, 1.0
        %v3064 = vadd.f32 %v2936, 1.0
        %v3065 = vadd.f32 %v2937, 1.0
        %v3066 = vadd.f32 %v2938, 1.0
        %v3067 = vadd.f32 %v2939, 1.0
        %v3068 = vadd.f32 %v2940, 1.0
        %v3069 = vadd.f32 %v2941, 1.0
        %v3070 = vadd.f32 %v2942, 1.0
        %v3071 = vadd.f32 %v2943, 1.0
        %v3072 = vadd.f32 %v2944, 1.0
        %v3073 = vadd.f32 %v2945, 1.0
        %v3074 = vadd.f32 %v2946, 1.0
        %v3075 = vadd.f32 %v2947, 1.0
        %v3076 = vadd.f32 %v2948, 1.0
        %v3077 = vadd.f32 %v2949, 1.0
        %v3078 = vadd.f32 %v2950, 1.0
        %v3079 = vadd.f32 %v2951, 1.0
        %v3080 = vadd.f32 %v2952, 1.0
        %v3081 = vadd.f32 %v2953, 1.0
        %v3082 = vadd.f32 %v2954, 1.0
        %v3083 = vadd.f32 %v2955, 1.0
        %v3084 = vadd.f32 %v2956, 1.0
        %v3085 = vadd.f32 %v2957, 1.0
        %v3086 = vadd.f32 %v2958, 1.0
        %v3087 = vadd.f32 %v2959, 1.0
        %v3088 = vadd.f32 %v2960, 1.0
        %v3089 = vadd.f32 %v2961, 1.0
        %v3090 = vadd.f32 %v2962, 1.0
        %v3091 = vadd.f32 %v2963, 1.0
        %v3092 = vadd.f32 %v2964, 1.0
        %v3093 = vadd.f32 %v2965, 1.0
        %v3094 = vadd.f32 %v2966, 1.0
        %v3095 = vadd.f32 %v2967, 1.0
        %v3096 = vadd.f32 %v2968, 1.0
        %v3097 = vadd.f32 %v2969, 1.0
        %v3098 = vadd.f32 %v2970, 1.0
        %v3099 = vadd.f32 %v2971, 1.0
        %v3100 = vadd.f32 %v2972, 1.0
        %v3101 = vadd.f32 %v2973, 1.0
        %v3102 = vadd.f32 %v2974, 1.0
        %v3103 = vadd.f32 %v2975, 1.0
        %v3104 = vadd.f32 %v2976, 1.0
        %v3105 = vadd.f32 %v2977, 1.0
        %v3106 = vadd.f32 %v2978, 1.0
        %v3107 = vadd.f32 %v2979, 1.0
        %v3108 = vadd.f32 %v2980, 1.0
        %v3109 = vadd.f32 %v2981, 1.0
        %v3110 = vadd.f32 %v2982, 1.0
        %v3111 = vadd.f32 %v2983, 1.0
        %v3112 = vadd.f32 %v2984, 1.0
        %v3113 = vadd.f32 %v2985, 1.0
        %v3114 = vadd.f32 %v2986, 1.0
        %v3115 = vadd.f32 %v2987, 1.0
        %v3116 = vadd.f32 %v2988, 1.0
        %v3117 = vadd.f32 %v2989, 1.0
        %v3118 = vadd.f32 %v2990, 1.0
        %v3119 = vadd.f32 %v2991, 1.0
        %v3120 = vadd.f32 %v2992, 1.0
        %v3121 = vadd.f32 %v2993, 1.0
        %v3122 = vadd.f32 %v2994, 1.0
        %v3123 = vadd.f32 %v2995, 1.0
        %v3124 = vadd.f32 %v2996, 1.0
        %v3125 = vadd.f32 %v2997, 1.0
        %v3126 = vadd.f32 %v2998, 1.0
        %v3127 = vadd.f32 %v2999, 1.0
        %v3128 = vadd.f32 %v3000, 1.0
        %v3129 = vadd.f32 %v3001, 1.0
        %v3130 = vadd.f32 %v3002, 1.0
        %v3131 = vadd.f32 %v3003, 1.0
        %v3132 = vadd.f32 %v3004, 1.0
        %v3133 = vadd.f32 %v3005, 1.0
        %v3134 = vadd.f32 %v3006, 1.0
        %v3135 = vadd.f32 %v3007, 1.0
        %v3136 = vadd.f32 %v3008, 1.0
        %v3137 = vadd.f32 %v3009, 1.0
        %v3138 = vadd.f32 %v3010, 1.0
        %v3139 = vadd.f32 %v3011, 1.0
        %v3140 = vadd.f32 %v3012, 1.0
        %v3141 = vadd.f32 %v3013, 1.0
        %v3142 = vadd.f32 %v3014, 1.0
        %v3143 = vadd.f32 %v3015, 1.0
        %v3144 = vadd.f32 %v3016, 1.0
        %v3145 = vadd.f32 %v3017, 1.0
        %v3146 = vadd.f32 %v3018, 1.0
        %v3147 = vadd.f32 %v3019, 1.0
        %v3148 = vadd.f32 %v3020, 1.0
        %v3149 = vadd.f32 %v3021, 1.0
        %v3150 = vadd.f32 %v3022, 1.0
        %v3151 = vadd.f32 %v3023, 1.0
        %v3152 = vadd.f32 %v3024, 1.0
        %v3153 = vadd.f32 %v3025, 1.0
        %v3154 = vadd.f32 %v3026, 1.0
        %v3155 = vadd.f32 %v3027, 1.0
        %v3156 = vadd.f32 %v3028, 1.0
        %v3157 = vadd.f32 %v3029, 1.0
        %v3158 = vmul.f32 %v2646, %v3030
        %v3159 = vmul.f32 %v2647, %v3031
        %v3160 = vmul.f32 %v2648, %v3032
        %v3161 = vmul.f32 %v2649, %v3033
        %v3162 = vmul.f32 %v2650, %v3034
        %v3163 = vmul.f32 %v2651, %v3035
        %v3164 = vmul.f32 %v2652, %v3036
        %v3165 = vmul.f32 %v2653, %v3037
        %v3166 = vmul.f32 %v2654, %v3038
        %v3167 = vmul.f32 %v2655, %v3039
        %v3168 = vmul.f32 %v2656, %v3040
        %v3169 = vmul.f32 %v2657, %v3041
        %v3170 = vmul.f32 %v2658, %v3042
        %v3171 = vmul.f32 %v2659, %v3043
        %v3172 = vmul.f32 %v2660, %v3044
        %v3173 = vmul.f32 %v2661, %v3045
        %v3174 = vmul.f32 %v2662, %v3046
        %v3175 = vmul.f32 %v2663, %v3047
        %v3176 = vmul.f32 %v2664, %v3048
        %v3177 = vmul.f32 %v2665, %v3049
        %v3178 = vmul.f32 %v2666, %v3050
        %v3179 = vmul.f32 %v2667, %v3051
        %v3180 = vmul.f32 %v2668, %v3052
        %v3181 = vmul.f32 %v2669, %v3053
        %v3182 = vmul.f32 %v2670, %v3054
        %v3183 = vmul.f32 %v2671, %v3055
        %v3184 = vmul.f32 %v2672, %v3056
        %v3185 = vmul.f32 %v2673, %v3057
        %v3186 = vmul.f32 %v2674, %v3058
        %v3187 = vmul.f32 %v2675, %v3059
        %v3188 = vmul.f32 %v2676, %v3060
        %v3189 = vmul.f32 %v2677, %v3061
        %v3190 = vmul.f32 %v2678, %v3062
        %v3191 = vmul.f32 %v2679, %v3063
        %v3192 = vmul.f32 %v2680, %v3064
        %v3193 = vmul.f32 %v2681, %v3065
        %v3194 = vmul.f32 %v2682, %v3066
        %v3195 = vmul.f32 %v2683, %v3067
        %v3196 = vmul.f32 %v2684, %v3068
        %v3197 = vmul.f32 %v2685, %v3069
        %v3198 = vmul.f32 %v2686, %v3070
        %v3199 = vmul.f32 %v2687, %v3071
        %v3200 = vmul.f32 %v2688, %v3072
        %v3201 = vmul.f32 %v2689, %v3073
        %v3202 = vmul.f32 %v2690, %v3074
        %v3203 = vmul.f32 %v2691, %v3075
        %v3204 = vmul.f32 %v2692, %v3076
        %v3205 = vmul.f32 %v2693, %v3077
        %v3206 = vmul.f32 %v2694, %v3078
        %v3207 = vmul.f32 %v2695, %v3079
        %v3208 = vmul.f32 %v2696, %v3080
        %v3209 = vmul.f32 %v2697, %v3081
        %v3210 = vmul.f32 %v2698, %v3082
        %v3211 = vmul.f32 %v2699, %v3083
        %v3212 = vmul.f32 %v2700, %v3084
        %v3213 = vmul.f32 %v2701, %v3085
        %v3214 = vmul.f32 %v2702, %v3086
        %v3215 = vmul.f32 %v2703, %v3087
        %v3216 = vmul.f32 %v2704, %v3088
        %v3217 = vmul.f32 %v2705, %v3089
        %v3218 = vmul.f32 %v2706, %v3090
        %v3219 = vmul.f32 %v2707, %v3091
        %v3220 = vmul.f32 %v2708, %v3092
        %v3221 = vmul.f32 %v2709, %v3093
        %v3222 = vmul.f32 %v2710, %v3094
        %v3223 = vmul.f32 %v2711, %v3095
        %v3224 = vmul.f32 %v2712, %v3096
        %v3225 = vmul.f32 %v2713, %v3097
        %v3226 = vmul.f32 %v2714, %v3098
        %v3227 = vmul.f32 %v2715, %v3099
        %v3228 = vmul.f32 %v2716, %v3100
        %v3229 = vmul.f32 %v2717, %v3101
        %v3230 = vmul.f32 %v2718, %v3102
        %v3231 = vmul.f32 %v2719, %v3103
        %v3232 = vmul.f32 %v2720, %v3104
        %v3233 = vmul.f32 %v2721, %v3105
        %v3234 = vmul.f32 %v2722, %v3106
        %v3235 = vmul.f32 %v2723, %v3107
        %v3236 = vmul.f32 %v2724, %v3108
        %v3237 = vmul.f32 %v2725, %v3109
        %v3238 = vmul.f32 %v2726, %v3110
        %v3239 = vmul.f32 %v2727, %v3111
        %v3240 = vmul.f32 %v2728, %v3112
        %v3241 = vmul.f32 %v2729, %v3113
        %v3242 = vmul.f32 %v2730, %v3114
        %v3243 = vmul.f32 %v2731, %v3115
        %v3244 = vmul.f32 %v2732, %v3116
        %v3245 = vmul.f32 %v2733, %v3117
        %v3246 = vmul.f32 %v2734, %v3118
        %v3247 = vmul.f32 %v2735, %v3119
        %v3248 = vmul.f32 %v2736, %v3120
        %v3249 = vmul.f32 %v2737, %v3121
        %v3250 = vmul.f32 %v2738, %v3122
        %v3251 = vmul.f32 %v2739, %v3123
        %v3252 = vmul.f32 %v2740, %v3124
        %v3253 = vmul.f32 %v2741, %v3125
        %v3254 = vmul.f32 %v2742, %v3126
        %v3255 = vmul.f32 %v2743, %v3127
        %v3256 = vmul.f32 %v2744, %v3128
        %v3257 = vmul.f32 %v2745, %v3129
        %v3258 = vmul.f32 %v2746, %v3130
        %v3259 = vmul.f32 %v2747, %v3131
        %v3260 = vmul.f32 %v2748, %v3132
        %v3261 = vmul.f32 %v2749, %v3133
        %v3262 = vmul.f32 %v2750, %v3134
        %v3263 = vmul.f32 %v2751, %v3135
        %v3264 = vmul.f32 %v2752, %v3136
        %v3265 = vmul.f32 %v2753, %v3137
        %v3266 = vmul.f32 %v2754, %v3138
        %v3267 = vmul.f32 %v2755, %v3139
        %v3268 = vmul.f32 %v2756, %v3140
        %v3269 = vmul.f32 %v2757, %v3141
        %v3270 = vmul.f32 %v2758, %v3142
        %v3271 = vmul.f32 %v2759, %v3143
        %v3272 = vmul.f32 %v2760, %v3144
        %v3273 = vmul.f32 %v2761, %v3145
        %v3274 = vmul.f32 %v2762, %v3146
        %v3275 = vmul.f32 %v2763, %v3147
        %v3276 = vmul.f32 %v2764, %v3148
        %v3277 = vmul.f32 %v2765, %v3149
        %v3278 = vmul.f32 %v2766, %v3150
        %v3279 = vmul.f32 %v2767, %v3151
        %v3280 = vmul.f32 %v2768, %v3152
        %v3281 = vmul.f32 %v2769, %v3153
        %v3282 = vmul.f32 %v2770, %v3154
        %v3283 = vmul.f32 %v2771, %v3155
        %v3284 = vmul.f32 %v2772, %v3156
        %v3285 = vmul.f32 %v2773, %v3157
        %v3286 = vld [vmem:[#allocation3] sm:$0xff]
        %v3287 = vld [vmem:[#allocation3 + $0x8] sm:$0xff]
        %v3288 = vld [vmem:[#allocation3 + $0x10] sm:$0xff]
        %v3289 = vld [vmem:[#allocation3 + $0x18] sm:$0xff]
        %v3290 = vld [vmem:[#allocation3 + $0x20] sm:$0xff]
        %v3291 = vld [vmem:[#allocation3 + $0x28] sm:$0xff]
        %v3292 = vld [vmem:[#allocation3 + $0x30] sm:$0xff]
        %v3293 = vld [vmem:[#allocation3 + $0x38] sm:$0xff]
        %v3294 = vld [vmem:[#allocation3 + $0x40] sm:$0xff]
        %v3295 = vld [vmem:[#allocation3 + $0x48] sm:$0xff]
        %v3296 = vld [vmem:[#allocation3 + $0x50] sm:$0xff]
        %v3297 = vld [vmem:[#allocation3 + $0x58] sm:$0xff]
        %v3298 = vld [vmem:[#allocation3 + $0x60] sm:$0xff]
        %v3299 = vld [vmem:[#allocation3 + $0x68] sm:$0xff]
        %v3300 = vld [vmem:[#allocation3 + $0x70] sm:$0xff]
        %v3301 = vld [vmem:[#allocation3 + $0x78] sm:$0xff]
        %v3302 = vld [vmem:[#allocation3 + $0x80] sm:$0xff]
        %v3303 = vld [vmem:[#allocation3 + $0x88] sm:$0xff]
        %v3304 = vld [vmem:[#allocation3 + $0x90] sm:$0xff]
        %v3305 = vld [vmem:[#allocation3 + $0x98] sm:$0xff]
        %v3306 = vld [vmem:[#allocation3 + $0xa0] sm:$0xff]
        %v3307 = vld [vmem:[#allocation3 + $0xa8] sm:$0xff]
        %v3308 = vld [vmem:[#allocation3 + $0xb0] sm:$0xff]
        %v3309 = vld [vmem:[#allocation3 + $0xb8] sm:$0xff]
        %v3310 = vld [vmem:[#allocation3 + $0xc0] sm:$0xff]
        %v3311 = vld [vmem:[#allocation3 + $0xc8] sm:$0xff]
        %v3312 = vld [vmem:[#allocation3 + $0xd0] sm:$0xff]
        %v3313 = vld [vmem:[#allocation3 + $0xd8] sm:$0xff]
        %v3314 = vld [vmem:[#allocation3 + $0xe0] sm:$0xff]
        %v3315 = vld [vmem:[#allocation3 + $0xe8] sm:$0xff]
        %v3316 = vld [vmem:[#allocation3 + $0xf0] sm:$0xff]
        %v3317 = vld [vmem:[#allocation3 + $0xf8] sm:$0xff]
        %v3318 = vld [vmem:[#allocation3 + $0x100] sm:$0xff]
        %v3319 = vld [vmem:[#allocation3 + $0x108] sm:$0xff]
        %v3320 = vld [vmem:[#allocation3 + $0x110] sm:$0xff]
        %v3321 = vld [vmem:[#allocation3 + $0x118] sm:$0xff]
        %v3322 = vld [vmem:[#allocation3 + $0x120] sm:$0xff]
        %v3323 = vld [vmem:[#allocation3 + $0x128] sm:$0xff]
        %v3324 = vld [vmem:[#allocation3 + $0x130] sm:$0xff]
        %v3325 = vld [vmem:[#allocation3 + $0x138] sm:$0xff]
        %v3326 = vld [vmem:[#allocation3 + $0x140] sm:$0xff]
        %v3327 = vld [vmem:[#allocation3 + $0x148] sm:$0xff]
        %v3328 = vld [vmem:[#allocation3 + $0x150] sm:$0xff]
        %v3329 = vld [vmem:[#allocation3 + $0x158] sm:$0xff]
        %v3330 = vld [vmem:[#allocation3 + $0x160] sm:$0xff]
        %v3331 = vld [vmem:[#allocation3 + $0x168] sm:$0xff]
        %v3332 = vld [vmem:[#allocation3 + $0x170] sm:$0xff]
        %v3333 = vld [vmem:[#allocation3 + $0x178] sm:$0xff]
        %v3334 = vld [vmem:[#allocation3 + $0x180] sm:$0xff]
        %v3335 = vld [vmem:[#allocation3 + $0x188] sm:$0xff]
        %v3336 = vld [vmem:[#allocation3 + $0x190] sm:$0xff]
        %v3337 = vld [vmem:[#allocation3 + $0x198] sm:$0xff]
        %v3338 = vld [vmem:[#allocation3 + $0x1a0] sm:$0xff]
        %v3339 = vld [vmem:[#allocation3 + $0x1a8] sm:$0xff]
        %v3340 = vld [vmem:[#allocation3 + $0x1b0] sm:$0xff]
        %v3341 = vld [vmem:[#allocation3 + $0x1b8] sm:$0xff]
        %v3342 = vld [vmem:[#allocation3 + $0x1c0] sm:$0xff]
        %v3343 = vld [vmem:[#allocation3 + $0x1c8] sm:$0xff]
        %v3344 = vld [vmem:[#allocation3 + $0x1d0] sm:$0xff]
        %v3345 = vld [vmem:[#allocation3 + $0x1d8] sm:$0xff]
        %v3346 = vld [vmem:[#allocation3 + $0x1e0] sm:$0xff]
        %v3347 = vld [vmem:[#allocation3 + $0x1e8] sm:$0xff]
        %v3348 = vld [vmem:[#allocation3 + $0x1f0] sm:$0xff]
        %v3349 = vld [vmem:[#allocation3 + $0x1f8] sm:$0xff]
        %v3350 = vld [vmem:[#allocation3 + $0x200] sm:$0xff]
        %v3351 = vld [vmem:[#allocation3 + $0x208] sm:$0xff]
        %v3352 = vld [vmem:[#allocation3 + $0x210] sm:$0xff]
        %v3353 = vld [vmem:[#allocation3 + $0x218] sm:$0xff]
        %v3354 = vld [vmem:[#allocation3 + $0x220] sm:$0xff]
        %v3355 = vld [vmem:[#allocation3 + $0x228] sm:$0xff]
        %v3356 = vld [vmem:[#allocation3 + $0x230] sm:$0xff]
        %v3357 = vld [vmem:[#allocation3 + $0x238] sm:$0xff]
        %v3358 = vld [vmem:[#allocation3 + $0x240] sm:$0xff]
        %v3359 = vld [vmem:[#allocation3 + $0x248] sm:$0xff]
        %v3360 = vld [vmem:[#allocation3 + $0x250] sm:$0xff]
        %v3361 = vld [vmem:[#allocation3 + $0x258] sm:$0xff]
        %v3362 = vld [vmem:[#allocation3 + $0x260] sm:$0xff]
        %v3363 = vld [vmem:[#allocation3 + $0x268] sm:$0xff]
        %v3364 = vld [vmem:[#allocation3 + $0x270] sm:$0xff]
        %v3365 = vld [vmem:[#allocation3 + $0x278] sm:$0xff]
        %v3366 = vld [vmem:[#allocation3 + $0x280] sm:$0xff]
        %v3367 = vld [vmem:[#allocation3 + $0x288] sm:$0xff]
        %v3368 = vld [vmem:[#allocation3 + $0x290] sm:$0xff]
        %v3369 = vld [vmem:[#allocation3 + $0x298] sm:$0xff]
        %v3370 = vld [vmem:[#allocation3 + $0x2a0] sm:$0xff]
        %v3371 = vld [vmem:[#allocation3 + $0x2a8] sm:$0xff]
        %v3372 = vld [vmem:[#allocation3 + $0x2b0] sm:$0xff]
        %v3373 = vld [vmem:[#allocation3 + $0x2b8] sm:$0xff]
        %v3374 = vld [vmem:[#allocation3 + $0x2c0] sm:$0xff]
        %v3375 = vld [vmem:[#allocation3 + $0x2c8] sm:$0xff]
        %v3376 = vld [vmem:[#allocation3 + $0x2d0] sm:$0xff]
        %v3377 = vld [vmem:[#allocation3 + $0x2d8] sm:$0xff]
        %v3378 = vld [vmem:[#allocation3 + $0x2e0] sm:$0xff]
        %v3379 = vld [vmem:[#allocation3 + $0x2e8] sm:$0xff]
        %v3380 = vld [vmem:[#allocation3 + $0x2f0] sm:$0xff]
        %v3381 = vld [vmem:[#allocation3 + $0x2f8] sm:$0xff]
        %v3382 = vpack.c.bf16 %v3162, %v3158
        %v3383 = vpack.c.bf16 %v3163, %v3159
        %v3384 = vpack.c.bf16 %v3164, %v3160
        %v3385 = vpack.c.bf16 %v3165, %v3161
        %v3386 = vpack.c.bf16 %v3170, %v3166
        %v3387 = vpack.c.bf16 %v3171, %v3167
        %v3388 = vpack.c.bf16 %v3172, %v3168
        %v3389 = vpack.c.bf16 %v3173, %v3169
        %v3390 = vpack.c.bf16 %v3178, %v3174
        %v3391 = vpack.c.bf16 %v3179, %v3175
        %v3392 = vpack.c.bf16 %v3180, %v3176
        %v3393 = vpack.c.bf16 %v3181, %v3177
        %v3394 = vpack.c.bf16 %v3186, %v3182
        %v3395 = vpack.c.bf16 %v3187, %v3183
        %v3396 = vpack.c.bf16 %v3188, %v3184
        %v3397 = vpack.c.bf16 %v3189, %v3185
        %v3398 = vpack.c.bf16 %v3194, %v3190
        %v3399 = vpack.c.bf16 %v3195, %v3191
        %v3400 = vpack.c.bf16 %v3196, %v3192
        %v3401 = vpack.c.bf16 %v3197, %v3193
        %v3402 = vpack.c.bf16 %v3202, %v3198
        %v3403 = vpack.c.bf16 %v3203, %v3199
        %v3404 = vpack.c.bf16 %v3204, %v3200
        %v3405 = vpack.c.bf16 %v3205, %v3201
        %v3406 = vpack.c.bf16 %v3210, %v3206
        %v3407 = vpack.c.bf16 %v3211, %v3207
        %v3408 = vpack.c.bf16 %v3212, %v3208
        %v3409 = vpack.c.bf16 %v3213, %v3209
        %v3410 = vpack.c.bf16 %v3218, %v3214
        %v3411 = vpack.c.bf16 %v3219, %v3215
        %v3412 = vpack.c.bf16 %v3220, %v3216
        %v3413 = vpack.c.bf16 %v3221, %v3217
        %v3414 = vpack.c.bf16 %v3226, %v3222
        %v3415 = vpack.c.bf16 %v3227, %v3223
        %v3416 = vpack.c.bf16 %v3228, %v3224
        %v3417 = vpack.c.bf16 %v3229, %v3225
        %v3418 = vpack.c.bf16 %v3234, %v3230
        %v3419 = vpack.c.bf16 %v3235, %v3231
        %v3420 = vpack.c.bf16 %v3236, %v3232
        %v3421 = vpack.c.bf16 %v3237, %v3233
        %v3422 = vpack.c.bf16 %v3242, %v3238
        %v3423 = vpack.c.bf16 %v3243, %v3239
        %v3424 = vpack.c.bf16 %v3244, %v3240
        %v3425 = vpack.c.bf16 %v3245, %v3241
        %v3426 = vpack.c.bf16 %v3250, %v3246
        %v3427 = vpack.c.bf16 %v3251, %v3247
        %v3428 = vpack.c.bf16 %v3252, %v3248
        %v3429 = vpack.c.bf16 %v3253, %v3249
        %v3430 = vpack.c.bf16 %v3258, %v3254
        %v3431 = vpack.c.bf16 %v3259, %v3255
        %v3432 = vpack.c.bf16 %v3260, %v3256
        %v3433 = vpack.c.bf16 %v3261, %v3257
        %v3434 = vpack.c.bf16 %v3266, %v3262
        %v3435 = vpack.c.bf16 %v3267, %v3263
        %v3436 = vpack.c.bf16 %v3268, %v3264
        %v3437 = vpack.c.bf16 %v3269, %v3265
        %v3438 = vpack.c.bf16 %v3274, %v3270
        %v3439 = vpack.c.bf16 %v3275, %v3271
        %v3440 = vpack.c.bf16 %v3276, %v3272
        %v3441 = vpack.c.bf16 %v3277, %v3273
        %v3442 = vpack.c.bf16 %v3282, %v3278
        %v3443 = vpack.c.bf16 %v3283, %v3279
        %v3444 = vpack.c.bf16 %v3284, %v3280
        %v3445 = vpack.c.bf16 %v3285, %v3281
        %v3446 = vld [vmem:[%s247] sm:$0xff]
        %v3447 = vld [vmem:[%s247 + $0x8] sm:$0xf]
        %v3448 = vld [vmem:[%s247 + $0xc] sm:$0xff]
        %v3449 = vld [vmem:[%s247 + $0x14] sm:$0xf]
        %v3450 = vld [vmem:[%s247 + $0x18] sm:$0xff]
        %v3451 = vld [vmem:[%s247 + $0x20] sm:$0xf]
        %v3452 = vld [vmem:[%s247 + $0x24] sm:$0xff]
        %v3453 = vld [vmem:[%s247 + $0x2c] sm:$0xf]
        %v3454 = vld [vmem:[%s247 + $0x30] sm:$0xff]
        %v3455 = vld [vmem:[%s247 + $0x38] sm:$0xf]
        %v3456 = vld [vmem:[%s247 + $0x3c] sm:$0xff]
        %v3457 = vld [vmem:[%s247 + $0x44] sm:$0xf]
        %v3458 = vld [vmem:[%s247 + $0x48] sm:$0xff]
        %v3459 = vld [vmem:[%s247 + $0x50] sm:$0xf]
        %v3460 = vld [vmem:[%s247 + $0x54] sm:$0xff]
        %v3461 = vld [vmem:[%s247 + $0x5c] sm:$0xf]
        %v3462 = vld [vmem:[%s247 + $0x60] sm:$0xff]
        %v3463 = vld [vmem:[%s247 + $0x68] sm:$0xf]
        %v3464 = vld [vmem:[%s247 + $0x6c] sm:$0xff]
        %v3465 = vld [vmem:[%s247 + $0x74] sm:$0xf]
        %v3466 = vld [vmem:[%s247 + $0x78] sm:$0xff]
        %v3467 = vld [vmem:[%s247 + $0x80] sm:$0xf]
        %v3468 = vld [vmem:[%s247 + $0x84] sm:$0xff]
        %v3469 = vld [vmem:[%s247 + $0x8c] sm:$0xf]
        %v3470 = vld [vmem:[%s247 + $0x90] sm:$0xff]
        %v3471 = vld [vmem:[%s247 + $0x98] sm:$0xf]
        %v3472 = vld [vmem:[%s247 + $0x9c] sm:$0xff]
        %v3473 = vld [vmem:[%s247 + $0xa4] sm:$0xf]
        %v3474 = vld [vmem:[%s247 + $0xa8] sm:$0xff]
        %v3475 = vld [vmem:[%s247 + $0xb0] sm:$0xf]
        %v3476 = vld [vmem:[%s247 + $0xb4] sm:$0xff]
        %v3477 = vld [vmem:[%s247 + $0xbc] sm:$0xf]
        %v3478 = vld [vmem:[%s247 + $0xc0] sm:$0xff]
        %v3479 = vld [vmem:[%s247 + $0xc8] sm:$0xf]
        %v3480 = vld [vmem:[%s247 + $0xcc] sm:$0xff]
        %v3481 = vld [vmem:[%s247 + $0xd4] sm:$0xf]
        %v3482 = vld [vmem:[%s247 + $0xd8] sm:$0xff]
        %v3483 = vld [vmem:[%s247 + $0xe0] sm:$0xf]
        %v3484 = vld [vmem:[%s247 + $0xe4] sm:$0xff]
        %v3485 = vld [vmem:[%s247 + $0xec] sm:$0xf]
        %v3486 = vld [vmem:[%s247 + $0xf0] sm:$0xff]
        %v3487 = vld [vmem:[%s247 + $0xf8] sm:$0xf]
        %v3488 = vld [vmem:[%s247 + $0xfc] sm:$0xff]
        %v3489 = vld [vmem:[%s247 + $0x104] sm:$0xf]
        %v3490 = vld [vmem:[%s247 + $0x108] sm:$0xff]
        %v3491 = vld [vmem:[%s247 + $0x110] sm:$0xf]
        %v3492 = vld [vmem:[%s247 + $0x114] sm:$0xff]
        %v3493 = vld [vmem:[%s247 + $0x11c] sm:$0xf]
        %v3494 = vld [vmem:[%s247 + $0x120] sm:$0xff]
        %v3495 = vld [vmem:[%s247 + $0x128] sm:$0xf]
        %v3496 = vld [vmem:[%s247 + $0x12c] sm:$0xff]
        %v3497 = vld [vmem:[%s247 + $0x134] sm:$0xf]
        %v3498 = vld [vmem:[%s247 + $0x138] sm:$0xff]
        %v3499 = vld [vmem:[%s247 + $0x140] sm:$0xf]
        %v3500 = vld [vmem:[%s247 + $0x144] sm:$0xff]
        %v3501 = vld [vmem:[%s247 + $0x14c] sm:$0xf]
        %v3502 = vld [vmem:[%s247 + $0x150] sm:$0xff]
        %v3503 = vld [vmem:[%s247 + $0x158] sm:$0xf]
        %v3504 = vld [vmem:[%s247 + $0x15c] sm:$0xff]
        %v3505 = vld [vmem:[%s247 + $0x164] sm:$0xf]
        %v3506 = vld [vmem:[%s247 + $0x168] sm:$0xff]
        %v3507 = vld [vmem:[%s247 + $0x170] sm:$0xf]
        %v3508 = vld [vmem:[%s247 + $0x174] sm:$0xff]
        %v3509 = vld [vmem:[%s247 + $0x17c] sm:$0xf]
        %v3510 = vld [vmem:[%s247 + $0x180] sm:$0xff]
        %v3511 = vld [vmem:[%s247 + $0x188] sm:$0xf]
        %v3512 = vld [vmem:[%s247 + $0x18c] sm:$0xff]
        %v3513 = vld [vmem:[%s247 + $0x194] sm:$0xf]
        %v3514 = vld [vmem:[%s247 + $0x198] sm:$0xff]
        %v3515 = vld [vmem:[%s247 + $0x1a0] sm:$0xf]
        %v3516 = vld [vmem:[%s247 + $0x1a4] sm:$0xff]
        %v3517 = vld [vmem:[%s247 + $0x1ac] sm:$0xf]
        %v3518 = vld [vmem:[%s247 + $0x1b0] sm:$0xff]
        %v3519 = vld [vmem:[%s247 + $0x1b8] sm:$0xf]
        %v3520 = vld [vmem:[%s247 + $0x1bc] sm:$0xff]
        %v3521 = vld [vmem:[%s247 + $0x1c4] sm:$0xf]
        %v3522 = vld [vmem:[%s247 + $0x1c8] sm:$0xff]
        %v3523 = vld [vmem:[%s247 + $0x1d0] sm:$0xf]
        %v3524 = vld [vmem:[%s247 + $0x1d4] sm:$0xff]
        %v3525 = vld [vmem:[%s247 + $0x1dc] sm:$0xf]
        %v3526 = vld [vmem:[%s247 + $0x1e0] sm:$0xff]
        %v3527 = vld [vmem:[%s247 + $0x1e8] sm:$0xf]
        %v3528 = vld [vmem:[%s247 + $0x1ec] sm:$0xff]
        %v3529 = vld [vmem:[%s247 + $0x1f4] sm:$0xf]
        %v3530 = vld [vmem:[%s247 + $0x1f8] sm:$0xff]
        %v3531 = vld [vmem:[%s247 + $0x200] sm:$0xf]
        %v3532 = vld [vmem:[%s247 + $0x204] sm:$0xff]
        %v3533 = vld [vmem:[%s247 + $0x20c] sm:$0xf]
        %v3534 = vld [vmem:[%s247 + $0x210] sm:$0xff]
        %v3535 = vld [vmem:[%s247 + $0x218] sm:$0xf]
        %v3536 = vld [vmem:[%s247 + $0x21c] sm:$0xff]
        %v3537 = vld [vmem:[%s247 + $0x224] sm:$0xf]
        %v3538 = vld [vmem:[%s247 + $0x228] sm:$0xff]
        %v3539 = vld [vmem:[%s247 + $0x230] sm:$0xf]
        %v3540 = vld [vmem:[%s247 + $0x234] sm:$0xff]
        %v3541 = vld [vmem:[%s247 + $0x23c] sm:$0xf]
        %v3542 = vld [vmem:[%s247 + $0x240] sm:$0xff]
        %v3543 = vld [vmem:[%s247 + $0x248] sm:$0xf]
        %v3544 = vld [vmem:[%s247 + $0x24c] sm:$0xff]
        %v3545 = vld [vmem:[%s247 + $0x254] sm:$0xf]
        %v3546 = vld [vmem:[%s247 + $0x258] sm:$0xff]
        %v3547 = vld [vmem:[%s247 + $0x260] sm:$0xf]
        %v3548 = vld [vmem:[%s247 + $0x264] sm:$0xff]
        %v3549 = vld [vmem:[%s247 + $0x26c] sm:$0xf]
        %v3550 = vld [vmem:[%s247 + $0x270] sm:$0xff]
        %v3551 = vld [vmem:[%s247 + $0x278] sm:$0xf]
        %v3552 = vld [vmem:[%s247 + $0x27c] sm:$0xff]
        %v3553 = vld [vmem:[%s247 + $0x284] sm:$0xf]
        %v3554 = vld [vmem:[%s247 + $0x288] sm:$0xff]
        %v3555 = vld [vmem:[%s247 + $0x290] sm:$0xf]
        %v3556 = vld [vmem:[%s247 + $0x294] sm:$0xff]
        %v3557 = vld [vmem:[%s247 + $0x29c] sm:$0xf]
        %v3558 = vld [vmem:[%s247 + $0x2a0] sm:$0xff]
        %v3559 = vld [vmem:[%s247 + $0x2a8] sm:$0xf]
        %v3560 = vld [vmem:[%s247 + $0x2ac] sm:$0xff]
        %v3561 = vld [vmem:[%s247 + $0x2b4] sm:$0xf]
        %v3562 = vld [vmem:[%s247 + $0x2b8] sm:$0xff]
        %v3563 = vld [vmem:[%s247 + $0x2c0] sm:$0xf]
        %v3564 = vld [vmem:[%s247 + $0x2c4] sm:$0xff]
        %v3565 = vld [vmem:[%s247 + $0x2cc] sm:$0xf]
        %v3566 = vld [vmem:[%s247 + $0x2d0] sm:$0xff]
        %v3567 = vld [vmem:[%s247 + $0x2d8] sm:$0xf]
        %v3568 = vld [vmem:[%s247 + $0x2dc] sm:$0xff]
        %v3569 = vld [vmem:[%s247 + $0x2e4] sm:$0xf]
        %v3570 = vld [vmem:[%s247 + $0x2e8] sm:$0xff]
        %v3571 = vld [vmem:[%s247 + $0x2f0] sm:$0xf]
        %v3572 = vld [vmem:[%s247 + $0x2f4] sm:$0xff]
        %v3573 = vld [vmem:[%s247 + $0x2fc] sm:$0xf]
        %v3702 = vunpack.c.l.b16 %v3446
        %v3703 = vunpack.c.h.b16 %v3446
        %v3704 = vunpack.c.l.b16 %v3447
        %v3705 = vunpack.c.l.b16 %v3448
        %v3706 = vunpack.c.h.b16 %v3448
        %v3707 = vunpack.c.l.b16 %v3449
        %v3708 = vunpack.c.l.b16 %v3450
        %v3709 = vunpack.c.h.b16 %v3450
        %v3710 = vunpack.c.l.b16 %v3451
        %v3711 = vunpack.c.l.b16 %v3452
        %v3712 = vunpack.c.h.b16 %v3452
        %v3713 = vunpack.c.l.b16 %v3453
        %v3714 = vunpack.c.l.b16 %v3454
        %v3715 = vunpack.c.h.b16 %v3454
        %v3716 = vunpack.c.l.b16 %v3455
        %v3717 = vunpack.c.l.b16 %v3456
        %v3718 = vunpack.c.h.b16 %v3456
        %v3719 = vunpack.c.l.b16 %v3457
        %v3720 = vunpack.c.l.b16 %v3458
        %v3721 = vunpack.c.h.b16 %v3458
        %v3722 = vunpack.c.l.b16 %v3459
        %v3723 = vunpack.c.l.b16 %v3460
        %v3724 = vunpack.c.h.b16 %v3460
        %v3725 = vunpack.c.l.b16 %v3461
        %v3726 = vunpack.c.l.b16 %v3462
        %v3727 = vunpack.c.h.b16 %v3462
        %v3728 = vunpack.c.l.b16 %v3463
        %v3729 = vunpack.c.l.b16 %v3464
        %v3730 = vunpack.c.h.b16 %v3464
        %v3731 = vunpack.c.l.b16 %v3465
        %v3732 = vunpack.c.l.b16 %v3466
        %v3733 = vunpack.c.h.b16 %v3466
        %v3734 = vunpack.c.l.b16 %v3467
        %v3735 = vunpack.c.l.b16 %v3468
        %v3736 = vunpack.c.h.b16 %v3468
        %v3737 = vunpack.c.l.b16 %v3469
        %v3738 = vunpack.c.l.b16 %v3470
        %v3739 = vunpack.c.h.b16 %v3470
        %v3740 = vunpack.c.l.b16 %v3471
        %v3741 = vunpack.c.l.b16 %v3472
        %v3742 = vunpack.c.h.b16 %v3472
        %v3743 = vunpack.c.l.b16 %v3473
        %v3744 = vunpack.c.l.b16 %v3474
        %v3745 = vunpack.c.h.b16 %v3474
        %v3746 = vunpack.c.l.b16 %v3475
        %v3747 = vunpack.c.l.b16 %v3476
        %v3748 = vunpack.c.h.b16 %v3476
        %v3749 = vunpack.c.l.b16 %v3477
        %v3750 = vunpack.c.l.b16 %v3478
        %v3751 = vunpack.c.h.b16 %v3478
        %v3752 = vunpack.c.l.b16 %v3479
        %v3753 = vunpack.c.l.b16 %v3480
        %v3754 = vunpack.c.h.b16 %v3480
        %v3755 = vunpack.c.l.b16 %v3481
        %v3756 = vunpack.c.l.b16 %v3482
        %v3757 = vunpack.c.h.b16 %v3482
        %v3758 = vunpack.c.l.b16 %v3483
        %v3759 = vunpack.c.l.b16 %v3484
        %v3760 = vunpack.c.h.b16 %v3484
        %v3761 = vunpack.c.l.b16 %v3485
        %v3762 = vunpack.c.l.b16 %v3486
        %v3763 = vunpack.c.h.b16 %v3486
        %v3764 = vunpack.c.l.b16 %v3487
        %v3765 = vunpack.c.l.b16 %v3488
        %v3766 = vunpack.c.h.b16 %v3488
        %v3767 = vunpack.c.l.b16 %v3489
        %v3768 = vunpack.c.l.b16 %v3490
        %v3769 = vunpack.c.h.b16 %v3490
        %v3770 = vunpack.c.l.b16 %v3491
        %v3771 = vunpack.c.l.b16 %v3492
        %v3772 = vunpack.c.h.b16 %v3492
        %v3773 = vunpack.c.l.b16 %v3493
        %v3774 = vunpack.c.l.b16 %v3494
        %v3775 = vunpack.c.h.b16 %v3494
        %v3776 = vunpack.c.l.b16 %v3495
        %v3777 = vunpack.c.l.b16 %v3496
        %v3778 = vunpack.c.h.b16 %v3496
        %v3779 = vunpack.c.l.b16 %v3497
        %v3780 = vunpack.c.l.b16 %v3498
        %v3781 = vunpack.c.h.b16 %v3498
        %v3782 = vunpack.c.l.b16 %v3499
        %v3783 = vunpack.c.l.b16 %v3500
        %v3784 = vunpack.c.h.b16 %v3500
        %v3785 = vunpack.c.l.b16 %v3501
        %v3786 = vunpack.c.l.b16 %v3502
        %v3787 = vunpack.c.h.b16 %v3502
        %v3788 = vunpack.c.l.b16 %v3503
        %v3789 = vunpack.c.l.b16 %v3504
        %v3790 = vunpack.c.h.b16 %v3504
        %v3791 = vunpack.c.l.b16 %v3505
        %v3792 = vunpack.c.l.b16 %v3506
        %v3793 = vunpack.c.h.b16 %v3506
        %v3794 = vunpack.c.l.b16 %v3507
        %v3795 = vunpack.c.l.b16 %v3508
        %v3796 = vunpack.c.h.b16 %v3508
        %v3797 = vunpack.c.l.b16 %v3509
        %v3798 = vunpack.c.l.b16 %v3510
        %v3799 = vunpack.c.h.b16 %v3510
        %v3800 = vunpack.c.l.b16 %v3511
        %v3801 = vunpack.c.l.b16 %v3512
        %v3802 = vunpack.c.h.b16 %v3512
        %v3803 = vunpack.c.l.b16 %v3513
        %v3804 = vunpack.c.l.b16 %v3514
        %v3805 = vunpack.c.h.b16 %v3514
        %v3806 = vunpack.c.l.b16 %v3515
        %v3807 = vunpack.c.l.b16 %v3516
        %v3808 = vunpack.c.h.b16 %v3516
        %v3809 = vunpack.c.l.b16 %v3517
        %v3810 = vunpack.c.l.b16 %v3518
        %v3811 = vunpack.c.h.b16 %v3518
        %v3812 = vunpack.c.l.b16 %v3519
        %v3813 = vunpack.c.l.b16 %v3520
        %v3814 = vunpack.c.h.b16 %v3520
        %v3815 = vunpack.c.l.b16 %v3521
        %v3816 = vunpack.c.l.b16 %v3522
        %v3817 = vunpack.c.h.b16 %v3522
        %v3818 = vunpack.c.l.b16 %v3523
        %v3819 = vunpack.c.l.b16 %v3524
        %v3820 = vunpack.c.h.b16 %v3524
        %v3821 = vunpack.c.l.b16 %v3525
        %v3822 = vunpack.c.l.b16 %v3526
        %v3823 = vunpack.c.h.b16 %v3526
        %v3824 = vunpack.c.l.b16 %v3527
        %v3825 = vunpack.c.l.b16 %v3528
        %v3826 = vunpack.c.h.b16 %v3528
        %v3827 = vunpack.c.l.b16 %v3529
        %v3828 = vunpack.c.l.b16 %v3530
        %v3829 = vunpack.c.h.b16 %v3530
        %v3830 = vunpack.c.l.b16 %v3531
        %v3831 = vunpack.c.l.b16 %v3532
        %v3832 = vunpack.c.h.b16 %v3532
        %v3833 = vunpack.c.l.b16 %v3533
        %v3834 = vunpack.c.l.b16 %v3534
        %v3835 = vunpack.c.h.b16 %v3534
        %v3836 = vunpack.c.l.b16 %v3535
        %v3837 = vunpack.c.l.b16 %v3536
        %v3838 = vunpack.c.h.b16 %v3536
        %v3839 = vunpack.c.l.b16 %v3537
        %v3840 = vunpack.c.l.b16 %v3538
        %v3841 = vunpack.c.h.b16 %v3538
        %v3842 = vunpack.c.l.b16 %v3539
        %v3843 = vunpack.c.l.b16 %v3540
        %v3844 = vunpack.c.h.b16 %v3540
        %v3845 = vunpack.c.l.b16 %v3541
        %v3846 = vunpack.c.l.b16 %v3542
        %v3847 = vunpack.c.h.b16 %v3542
        %v3848 = vunpack.c.l.b16 %v3543
        %v3849 = vunpack.c.l.b16 %v3544
        %v3850 = vunpack.c.h.b16 %v3544
        %v3851 = vunpack.c.l.b16 %v3545
        %v3852 = vunpack.c.l.b16 %v3546
        %v3853 = vunpack.c.h.b16 %v3546
        %v3854 = vunpack.c.l.b16 %v3547
        %v3855 = vunpack.c.l.b16 %v3548
        %v3856 = vunpack.c.h.b16 %v3548
        %v3857 = vunpack.c.l.b16 %v3549
        %v3858 = vunpack.c.l.b16 %v3550
        %v3859 = vunpack.c.h.b16 %v3550
        %v3860 = vunpack.c.l.b16 %v3551
        %v3861 = vunpack.c.l.b16 %v3552
        %v3862 = vunpack.c.h.b16 %v3552
        %v3863 = vunpack.c.l.b16 %v3553
        %v3864 = vunpack.c.l.b16 %v3554
        %v3865 = vunpack.c.h.b16 %v3554
        %v3866 = vunpack.c.l.b16 %v3555
        %v3867 = vunpack.c.l.b16 %v3556
        %v3868 = vunpack.c.h.b16 %v3556
        %v3869 = vunpack.c.l.b16 %v3557
        %v3870 = vunpack.c.l.b16 %v3558
        %v3871 = vunpack.c.h.b16 %v3558
        %v3872 = vunpack.c.l.b16 %v3559
        %v3873 = vunpack.c.l.b16 %v3560
        %v3874 = vunpack.c.h.b16 %v3560
        %v3875 = vunpack.c.l.b16 %v3561
        %v3876 = vunpack.c.l.b16 %v3562
        %v3877 = vunpack.c.h.b16 %v3562
        %v3878 = vunpack.c.l.b16 %v3563
        %v3879 = vunpack.c.l.b16 %v3564
        %v3880 = vunpack.c.h.b16 %v3564
        %v3881 = vunpack.c.l.b16 %v3565
        %v3882 = vunpack.c.l.b16 %v3566
        %v3883 = vunpack.c.h.b16 %v3566
        %v3884 = vunpack.c.l.b16 %v3567
        %v3885 = vunpack.c.l.b16 %v3568
        %v3886 = vunpack.c.h.b16 %v3568
        %v3887 = vunpack.c.l.b16 %v3569
        %v3888 = vunpack.c.l.b16 %v3570
        %v3889 = vunpack.c.h.b16 %v3570
        %v3890 = vunpack.c.l.b16 %v3571
        %v3891 = vunpack.c.l.b16 %v3572
        %v3892 = vunpack.c.h.b16 %v3572
        %v3893 = vunpack.c.l.b16 %v3573
        %v3894 = vpack.c.b16 %v3705, %v3702
        %v3895 = vpack.c.b16 %v3706, %v3703
        %v3896 = vpack.c.b16 %v3707, %v3704
        %v3897 = vpack.c.b16 %v3711, %v3708
        %v3898 = vpack.c.b16 %v3712, %v3709
        %v3899 = vpack.c.b16 %v3713, %v3710
        %v3900 = vpack.c.b16 %v3717, %v3714
        %v3901 = vpack.c.b16 %v3718, %v3715
        %v3902 = vpack.c.b16 %v3719, %v3716
        %v3903 = vpack.c.b16 %v3723, %v3720
        %v3904 = vpack.c.b16 %v3724, %v3721
        %v3905 = vpack.c.b16 %v3725, %v3722
        %v3906 = vpack.c.b16 %v3729, %v3726
        %v3907 = vpack.c.b16 %v3730, %v3727
        %v3908 = vpack.c.b16 %v3731, %v3728
        %v3909 = vpack.c.b16 %v3735, %v3732
        %v3910 = vpack.c.b16 %v3736, %v3733
        %v3911 = vpack.c.b16 %v3737, %v3734
        %v3912 = vpack.c.b16 %v3741, %v3738
        %v3913 = vpack.c.b16 %v3742, %v3739
        %v3914 = vpack.c.b16 %v3743, %v3740
        %v3915 = vpack.c.b16 %v3747, %v3744
        %v3916 = vpack.c.b16 %v3748, %v3745
        %v3917 = vpack.c.b16 %v3749, %v3746
        %v3918 = vpack.c.b16 %v3753, %v3750
        %v3919 = vpack.c.b16 %v3754, %v3751
        %v3920 = vpack.c.b16 %v3755, %v3752
        %v3921 = vpack.c.b16 %v3759, %v3756
        %v3922 = vpack.c.b16 %v3760, %v3757
        %v3923 = vpack.c.b16 %v3761, %v3758
        %v3924 = vpack.c.b16 %v3765, %v3762
        %v3925 = vpack.c.b16 %v3766, %v3763
        %v3926 = vpack.c.b16 %v3767, %v3764
        %v3927 = vpack.c.b16 %v3771, %v3768
        %v3928 = vpack.c.b16 %v3772, %v3769
        %v3929 = vpack.c.b16 %v3773, %v3770
        %v3930 = vpack.c.b16 %v3777, %v3774
        %v3931 = vpack.c.b16 %v3778, %v3775
        %v3932 = vpack.c.b16 %v3779, %v3776
        %v3933 = vpack.c.b16 %v3783, %v3780
        %v3934 = vpack.c.b16 %v3784, %v3781
        %v3935 = vpack.c.b16 %v3785, %v3782
        %v3936 = vpack.c.b16 %v3789, %v3786
        %v3937 = vpack.c.b16 %v3790, %v3787
        %v3938 = vpack.c.b16 %v3791, %v3788
        %v3939 = vpack.c.b16 %v3795, %v3792
        %v3940 = vpack.c.b16 %v3796, %v3793
        %v3941 = vpack.c.b16 %v3797, %v3794
        %v3942 = vpack.c.b16 %v3801, %v3798
        %v3943 = vpack.c.b16 %v3802, %v3799
        %v3944 = vpack.c.b16 %v3803, %v3800
        %v3945 = vpack.c.b16 %v3807, %v3804
        %v3946 = vpack.c.b16 %v3808, %v3805
        %v3947 = vpack.c.b16 %v3809, %v3806
        %v3948 = vpack.c.b16 %v3813, %v3810
        %v3949 = vpack.c.b16 %v3814, %v3811
        %v3950 = vpack.c.b16 %v3815, %v3812
        %v3951 = vpack.c.b16 %v3819, %v3816
        %v3952 = vpack.c.b16 %v3820, %v3817
        %v3953 = vpack.c.b16 %v3821, %v3818
        %v3954 = vpack.c.b16 %v3825, %v3822
        %v3955 = vpack.c.b16 %v3826, %v3823
        %v3956 = vpack.c.b16 %v3827, %v3824
        %v3957 = vpack.c.b16 %v3831, %v3828
        %v3958 = vpack.c.b16 %v3832, %v3829
        %v3959 = vpack.c.b16 %v3833, %v3830
        %v3960 = vpack.c.b16 %v3837, %v3834
        %v3961 = vpack.c.b16 %v3838, %v3835
        %v3962 = vpack.c.b16 %v3839, %v3836
        %v3963 = vpack.c.b16 %v3843, %v3840
        %v3964 = vpack.c.b16 %v3844, %v3841
        %v3965 = vpack.c.b16 %v3845, %v3842
        %v3966 = vpack.c.b16 %v3849, %v3846
        %v3967 = vpack.c.b16 %v3850, %v3847
        %v3968 = vpack.c.b16 %v3851, %v3848
        %v3969 = vpack.c.b16 %v3855, %v3852
        %v3970 = vpack.c.b16 %v3856, %v3853
        %v3971 = vpack.c.b16 %v3857, %v3854
        %v3972 = vpack.c.b16 %v3861, %v3858
        %v3973 = vpack.c.b16 %v3862, %v3859
        %v3974 = vpack.c.b16 %v3863, %v3860
        %v3975 = vpack.c.b16 %v3867, %v3864
        %v3976 = vpack.c.b16 %v3868, %v3865
        %v3977 = vpack.c.b16 %v3869, %v3866
        %v3978 = vpack.c.b16 %v3873, %v3870
        %v3979 = vpack.c.b16 %v3874, %v3871
        %v3980 = vpack.c.b16 %v3875, %v3872
        %v3981 = vpack.c.b16 %v3879, %v3876
        %v3982 = vpack.c.b16 %v3880, %v3877
        %v3983 = vpack.c.b16 %v3881, %v3878
        %v3984 = vpack.c.b16 %v3885, %v3882
        %v3985 = vpack.c.b16 %v3886, %v3883
        %v3986 = vpack.c.b16 %v3887, %v3884
        %v3987 = vpack.c.b16 %v3891, %v3888
        %v3988 = vpack.c.b16 %v3892, %v3889
        %v3989 = vpack.c.b16 %v3893, %v3890
        %4086 = vmatprep.subr.bf16.mxu0 %v3895
        %4087 = vmatpush1.bf16.msra.mxu0 %v3894
        %4088 = vmatprep.subr.bf16.mxu0 %v3898
        %4089 = vmatpush1.bf16.msra.mxu0 %v3897
        %4090 = vmatprep.subr.bf16.mxu0 %v3901
        %4091 = vmatpush1.bf16.msra.mxu0 %v3900
        %4092 = vmatprep.subr.bf16.mxu0 %v3904
        %4093 = vmatpush1.bf16.msra.mxu0 %v3903
        %4094 = vmatprep.subr.bf16.mxu0 %v3907
        %4095 = vmatpush1.bf16.msra.mxu0 %v3906
        %4096 = vmatprep.subr.bf16.mxu0 %v3910
        %4097 = vmatpush1.bf16.msra.mxu0 %v3909
        %4098 = vmatprep.subr.bf16.mxu0 %v3913
        %4099 = vmatpush1.bf16.msra.mxu0 %v3912
        %4100 = vmatprep.subr.bf16.mxu0 %v3916
        %4101 = vmatpush1.bf16.msra.mxu0 %v3915
        %4102 = vmatprep.subr.bf16.mxu0 %v3919
        %4103 = vmatpush1.bf16.msra.mxu0 %v3918
        %4104 = vmatprep.subr.bf16.mxu0 %v3922
        %4105 = vmatpush1.bf16.msra.mxu0 %v3921
        %4106 = vmatprep.subr.bf16.mxu0 %v3925
        %4107 = vmatpush1.bf16.msra.mxu0 %v3924
        %4108 = vmatprep.subr.bf16.mxu0 %v3928
        %4109 = vmatpush1.bf16.msra.mxu0 %v3927
        %4110 = vmatprep.subr.bf16.mxu0 %v3931
        %4111 = vmatpush1.bf16.msra.mxu0 %v3930
        %4112 = vmatprep.subr.bf16.mxu0 %v3934
        %4113 = vmatpush1.bf16.msra.mxu0 %v3933
        %4114 = vmatprep.subr.bf16.mxu0 %v3937
        %4115 = vmatpush1.bf16.msra.mxu0 %v3936
        %4116 = vmatprep.subr.bf16.mxu0 %v3940
        %4117 = vmatpush1.bf16.msra.mxu0 %v3939
        %4118 = vmatprep.mubr.bf16.mxu0 %v3383
        %4119 = vmatmul.mubr.bf16.gmra.mrb[0].mxu0 %v3382
        %v4120 = vpop.f32.mrb[0].mxu0
        %v4121 = vadd.f32 0.0, %v4120
        %v4122 = vpop.f32.mrb[0].mxu0
        %v4123 = vadd.f32 0.0, %v4122
        %v4124 = vpop.f32.mrb[0].mxu0
        %v4125 = vadd.f32 0.0, %v4124
        %v4126 = vpop.f32.mrb[0].mxu0
        %v4127 = vadd.f32 0.0, %v4126
        %4128 = vmatprep.mubr.bf16.mxu0 %v3387
        %4129 = vmatmul.mubr.bf16.gmra.mrb[0].mxu0 %v3386
        %v4130 = vpop.f32.mrb[0].mxu0
        %v4131 = vadd.f32 0.0, %v4130
        %v4132 = vpop.f32.mrb[0].mxu0
        %v4133 = vadd.f32 0.0, %v4132
        %v4134 = vpop.f32.mrb[0].mxu0
        %v4135 = vadd.f32 0.0, %v4134
        %v4136 = vpop.f32.mrb[0].mxu0
        %v4137 = vadd.f32 0.0, %v4136
        %4138 = vmatprep.mubr.bf16.mxu0 %v3391
        %4139 = vmatmul.mubr.bf16.gmra.mrb[0].mxu0 %v3390
        %v4140 = vpop.f32.mrb[0].mxu0
        %v4141 = vadd.f32 0.0, %v4140
        %v4142 = vpop.f32.mrb[0].mxu0
        %v4143 = vadd.f32 0.0, %v4142
        %v4144 = vpop.f32.mrb[0].mxu0
        %v4145 = vadd.f32 0.0, %v4144
        %v4146 = vpop.f32.mrb[0].mxu0
        %v4147 = vadd.f32 0.0, %v4146
        %4148 = vmatprep.mubr.bf16.mxu0 %v3395
        %4149 = vmatmul.mubr.bf16.gmra.mrb[0].mxu0 %v3394
        %v4150 = vpop.f32.mrb[0].mxu0
        %v4151 = vadd.f32 0.0, %v4150
        %v4152 = vpop.f32.mrb[0].mxu0
        %v4153 = vadd.f32 0.0, %v4152
        %v4154 = vpop.f32.mrb[0].mxu0
        %v4155 = vadd.f32 0.0, %v4154
        %v4156 = vpop.f32.mrb[0].mxu0
        %v4157 = vadd.f32 0.0, %v4156
        %4158 = vmatprep.mubr.bf16.mxu0 %v3399
        %4159 = vmatmul.mubr.bf16.gmra.mrb[0].mxu0 %v3398
        %v4160 = vpop.f32.mrb[0].mxu0
        %v4161 = vadd.f32 0.0, %v4160
        %v4162 = vpop.f32.mrb[0].mxu0
        %v4163 = vadd.f32 0.0, %v4162
        %v4164 = vpop.f32.mrb[0].mxu0
        %v4165 = vadd.f32 0.0, %v4164
        %v4166 = vpop.f32.mrb[0].mxu0
        %v4167 = vadd.f32 0.0, %v4166
        %4168 = vmatprep.mubr.bf16.mxu0 %v3403
        %4169 = vmatmul.mubr.bf16.gmra.mrb[0].mxu0 %v3402
        %v4170 = vpop.f32.mrb[0].mxu0
        %v4171 = vadd.f32 0.0, %v4170
        %v4172 = vpop.f32.mrb[0].mxu0
        %v4173 = vadd.f32 0.0, %v4172
        %v4174 = vpop.f32.mrb[0].mxu0
        %v4175 = vadd.f32 0.0, %v4174
        %v4176 = vpop.f32.mrb[0].mxu0
        %v4177 = vadd.f32 0.0, %v4176
        %4178 = vmatprep.mubr.bf16.mxu0 %v3407
        %4179 = vmatmul.mubr.bf16.gmra.mrb[0].mxu0 %v3406
        %v4180 = vpop.f32.mrb[0].mxu0
        %v4181 = vadd.f32 0.0, %v4180
        %v4182 = vpop.f32.mrb[0].mxu0
        %v4183 = vadd.f32 0.0, %v4182
        %v4184 = vpop.f32.mrb[0].mxu0
        %v4185 = vadd.f32 0.0, %v4184
        %v4186 = vpop.f32.mrb[0].mxu0
        %v4187 = vadd.f32 0.0, %v4186
        %4188 = vmatprep.mubr.bf16.mxu0 %v3411
        %4189 = vmatmul.mubr.bf16.gmra.mrb[0].mxu0 %v3410
        %v4190 = vpop.f32.mrb[0].mxu0
        %v4191 = vadd.f32 0.0, %v4190
        %v4192 = vpop.f32.mrb[0].mxu0
        %v4193 = vadd.f32 0.0, %v4192
        %v4194 = vpop.f32.mrb[0].mxu0
        %v4195 = vadd.f32 0.0, %v4194
        %v4196 = vpop.f32.mrb[0].mxu0
        %v4197 = vadd.f32 0.0, %v4196
        %4198 = vmatprep.mubr.bf16.mxu0 %v3415
        %4199 = vmatmul.mubr.bf16.gmra.mrb[0].mxu0 %v3414
        %v4200 = vpop.f32.mrb[0].mxu0
        %v4201 = vadd.f32 0.0, %v4200
        %v4202 = vpop.f32.mrb[0].mxu0
        %v4203 = vadd.f32 0.0, %v4202
        %v4204 = vpop.f32.mrb[0].mxu0
        %v4205 = vadd.f32 0.0, %v4204
        %v4206 = vpop.f32.mrb[0].mxu0
        %v4207 = vadd.f32 0.0, %v4206
        %4208 = vmatprep.mubr.bf16.mxu0 %v3419
        %4209 = vmatmul.mubr.bf16.gmra.mrb[0].mxu0 %v3418
        %v4210 = vpop.f32.mrb[0].mxu0
        %v4211 = vadd.f32 0.0, %v4210
        %v4212 = vpop.f32.mrb[0].mxu0
        %v4213 = vadd.f32 0.0, %v4212
        %v4214 = vpop.f32.mrb[0].mxu0
        %v4215 = vadd.f32 0.0, %v4214
        %v4216 = vpop.f32.mrb[0].mxu0
        %v4217 = vadd.f32 0.0, %v4216
        %4218 = vmatprep.mubr.bf16.mxu0 %v3423
        %4219 = vmatmul.mubr.bf16.gmra.mrb[0].mxu0 %v3422
        %v4220 = vpop.f32.mrb[0].mxu0
        %v4221 = vadd.f32 0.0, %v4220
        %v4222 = vpop.f32.mrb[0].mxu0
        %v4223 = vadd.f32 0.0, %v4222
        %v4224 = vpop.f32.mrb[0].mxu0
        %v4225 = vadd.f32 0.0, %v4224
        %v4226 = vpop.f32.mrb[0].mxu0
        %v4227 = vadd.f32 0.0, %v4226
        %4228 = vmatprep.mubr.bf16.mxu0 %v3427
        %4229 = vmatmul.mubr.bf16.gmra.mrb[0].mxu0 %v3426
        %v4230 = vpop.f32.mrb[0].mxu0
        %v4231 = vadd.f32 0.0, %v4230
        %v4232 = vpop.f32.mrb[0].mxu0
        %v4233 = vadd.f32 0.0, %v4232
        %v4234 = vpop.f32.mrb[0].mxu0
        %v4235 = vadd.f32 0.0, %v4234
        %v4236 = vpop.f32.mrb[0].mxu0
        %v4237 = vadd.f32 0.0, %v4236
        %4238 = vmatprep.mubr.bf16.mxu0 %v3431
        %4239 = vmatmul.mubr.bf16.gmra.mrb[0].mxu0 %v3430
        %v4240 = vpop.f32.mrb[0].mxu0
        %v4241 = vadd.f32 0.0, %v4240
        %v4242 = vpop.f32.mrb[0].mxu0
        %v4243 = vadd.f32 0.0, %v4242
        %v4244 = vpop.f32.mrb[0].mxu0
        %v4245 = vadd.f32 0.0, %v4244
        %v4246 = vpop.f32.mrb[0].mxu0
        %v4247 = vadd.f32 0.0, %v4246
        %4248 = vmatprep.mubr.bf16.mxu0 %v3435
        %4249 = vmatmul.mubr.bf16.gmra.mrb[0].mxu0 %v3434
        %v4250 = vpop.f32.mrb[0].mxu0
        %v4251 = vadd.f32 0.0, %v4250
        %v4252 = vpop.f32.mrb[0].mxu0
        %v4253 = vadd.f32 0.0, %v4252
        %v4254 = vpop.f32.mrb[0].mxu0
        %v4255 = vadd.f32 0.0, %v4254
        %v4256 = vpop.f32.mrb[0].mxu0
        %v4257 = vadd.f32 0.0, %v4256
        %4258 = vmatprep.mubr.bf16.mxu0 %v3439
        %4259 = vmatmul.mubr.bf16.gmra.mrb[0].mxu0 %v3438
        %v4260 = vpop.f32.mrb[0].mxu0
        %v4261 = vadd.f32 0.0, %v4260
        %v4262 = vpop.f32.mrb[0].mxu0
        %v4263 = vadd.f32 0.0, %v4262
        %v4264 = vpop.f32.mrb[0].mxu0
        %v4265 = vadd.f32 0.0, %v4264
        %v4266 = vpop.f32.mrb[0].mxu0
        %v4267 = vadd.f32 0.0, %v4266
        %4268 = vmatprep.mubr.bf16.mxu0 %v3443
        %4269 = vmatmul.mubr.bf16.gmra.mrb[0].mxu0 %v3442
        %v4270 = vpop.f32.mrb[0].mxu0
        %v4271 = vadd.f32 0.0, %v4270
        %v4272 = vpop.f32.mrb[0].mxu0
        %v4273 = vadd.f32 0.0, %v4272
        %v4274 = vpop.f32.mrb[0].mxu0
        %v4275 = vadd.f32 0.0, %v4274
        %v4276 = vpop.f32.mrb[0].mxu0
        %v4277 = vadd.f32 0.0, %v4276
        %4278 = vdwg.mxu0
        %4279 = vmatprep.subr.bf16.mxu0 %v3943
        %4280 = vmatpush1.bf16.msra.mxu0 %v3942
        %4281 = vmatprep.subr.bf16.mxu0 %v3946
        %4282 = vmatpush1.bf16.msra.mxu0 %v3945
        %4283 = vmatprep.subr.bf16.mxu0 %v3949
        %4284 = vmatpush1.bf16.msra.mxu0 %v3948
        %4285 = vmatprep.subr.bf16.mxu0 %v3952
        %4286 = vmatpush1.bf16.msra.mxu0 %v3951
        %4287 = vmatprep.subr.bf16.mxu0 %v3955
        %4288 = vmatpush1.bf16.msra.mxu0 %v3954
        %4289 = vmatprep.subr.bf16.mxu0 %v3958
        %4290 = vmatpush1.bf16.msra.mxu0 %v3957
        %4291 = vmatprep.subr.bf16.mxu0 %v3961
        %4292 = vmatpush1.bf16.msra.mxu0 %v3960
        %4293 = vmatprep.subr.bf16.mxu0 %v3964
        %4294 = vmatpush1.bf16.msra.mxu0 %v3963
        %4295 = vmatprep.subr.bf16.mxu0 %v3967
        %4296 = vmatpush1.bf16.msra.mxu0 %v3966
        %4297 = vmatprep.subr.bf16.mxu0 %v3970
        %4298 = vmatpush1.bf16.msra.mxu0 %v3969
        %4299 = vmatprep.subr.bf16.mxu0 %v3973
        %4300 = vmatpush1.bf16.msra.mxu0 %v3972
        %4301 = vmatprep.subr.bf16.mxu0 %v3976
        %4302 = vmatpush1.bf16.msra.mxu0 %v3975
        %4303 = vmatprep.subr.bf16.mxu0 %v3979
        %4304 = vmatpush1.bf16.msra.mxu0 %v3978
        %4305 = vmatprep.subr.bf16.mxu0 %v3982
        %4306 = vmatpush1.bf16.msra.mxu0 %v3981
        %4307 = vmatprep.subr.bf16.mxu0 %v3985
        %4308 = vmatpush1.bf16.msra.mxu0 %v3984
        %4309 = vmatprep.subr.bf16.mxu0 %v3988
        %4310 = vmatpush1.bf16.msra.mxu0 %v3987
        %4311 = vmatprep.mubr.bf16.mxu0 %v3385
        %4312 = vmatmul.mubr.bf16.gmra.mrb[0].mxu0 %v3384
        %v4313 = vpop.f32.mrb[0].mxu0
        %v4314 = vadd.f32 %v4121, %v4313
        %v4315 = vpop.f32.mrb[0].mxu0
        %v4316 = vadd.f32 %v4123, %v4315
        %v4317 = vpop.f32.mrb[0].mxu0
        %v4318 = vadd.f32 %v4125, %v4317
        %v4319 = vpop.f32.mrb[0].mxu0
        %v4320 = vadd.f32 %v4127, %v4319
        %4321 = vmatprep.mubr.bf16.mxu0 %v3389
        %4322 = vmatmul.mubr.bf16.gmra.mrb[0].mxu0 %v3388
        %v4323 = vpop.f32.mrb[0].mxu0
        %v4324 = vadd.f32 %v4131, %v4323
        %v4325 = vpop.f32.mrb[0].mxu0
        %v4326 = vadd.f32 %v4133, %v4325
        %v4327 = vpop.f32.mrb[0].mxu0
        %v4328 = vadd.f32 %v4135, %v4327
        %v4329 = vpop.f32.mrb[0].mxu0
        %v4330 = vadd.f32 %v4137, %v4329
        %4331 = vmatprep.mubr.bf16.mxu0 %v3393
        %4332 = vmatmul.mubr.bf16.gmra.mrb[0].mxu0 %v3392
        %v4333 = vpop.f32.mrb[0].mxu0
        %v4334 = vadd.f32 %v4141, %v4333
        %v4335 = vpop.f32.mrb[0].mxu0
        %v4336 = vadd.f32 %v4143, %v4335
        %v4337 = vpop.f32.mrb[0].mxu0
        %v4338 = vadd.f32 %v4145, %v4337
        %v4339 = vpop.f32.mrb[0].mxu0
        %v4340 = vadd.f32 %v4147, %v4339
        %4341 = vmatprep.mubr.bf16.mxu0 %v3397
        %4342 = vmatmul.mubr.bf16.gmra.mrb[0].mxu0 %v3396
        %v4343 = vpop.f32.mrb[0].mxu0
        %v4344 = vadd.f32 %v4151, %v4343
        %v4345 = vpop.f32.mrb[0].mxu0
        %v4346 = vadd.f32 %v4153, %v4345
        %v4347 = vpop.f32.mrb[0].mxu0
        %v4348 = vadd.f32 %v4155, %v4347
        %v4349 = vpop.f32.mrb[0].mxu0
        %v4350 = vadd.f32 %v4157, %v4349
        %4351 = vmatprep.mubr.bf16.mxu0 %v3401
        %4352 = vmatmul.mubr.bf16.gmra.mrb[0].mxu0 %v3400
        %v4353 = vpop.f32.mrb[0].mxu0
        %v4354 = vadd.f32 %v4161, %v4353
        %v4355 = vpop.f32.mrb[0].mxu0
        %v4356 = vadd.f32 %v4163, %v4355
        %v4357 = vpop.f32.mrb[0].mxu0
        %v4358 = vadd.f32 %v4165, %v4357
        %v4359 = vpop.f32.mrb[0].mxu0
        %v4360 = vadd.f32 %v4167, %v4359
        %4361 = vmatprep.mubr.bf16.mxu0 %v3405
        %4362 = vmatmul.mubr.bf16.gmra.mrb[0].mxu0 %v3404
        %v4363 = vpop.f32.mrb[0].mxu0
        %v4364 = vadd.f32 %v4171, %v4363
        %v4365 = vpop.f32.mrb[0].mxu0
        %v4366 = vadd.f32 %v4173, %v4365
        %v4367 = vpop.f32.mrb[0].mxu0
        %v4368 = vadd.f32 %v4175, %v4367
        %v4369 = vpop.f32.mrb[0].mxu0
        %v4370 = vadd.f32 %v4177, %v4369
        %4371 = vmatprep.mubr.bf16.mxu0 %v3409
        %4372 = vmatmul.mubr.bf16.gmra.mrb[0].mxu0 %v3408
        %v4373 = vpop.f32.mrb[0].mxu0
        %v4374 = vadd.f32 %v4181, %v4373
        %v4375 = vpop.f32.mrb[0].mxu0
        %v4376 = vadd.f32 %v4183, %v4375
        %v4377 = vpop.f32.mrb[0].mxu0
        %v4378 = vadd.f32 %v4185, %v4377
        %v4379 = vpop.f32.mrb[0].mxu0
        %v4380 = vadd.f32 %v4187, %v4379
        %4381 = vmatprep.mubr.bf16.mxu0 %v3413
        %4382 = vmatmul.mubr.bf16.gmra.mrb[0].mxu0 %v3412
        %v4383 = vpop.f32.mrb[0].mxu0
        %v4384 = vadd.f32 %v4191, %v4383
        %v4385 = vpop.f32.mrb[0].mxu0
        %v4386 = vadd.f32 %v4193, %v4385
        %v4387 = vpop.f32.mrb[0].mxu0
        %v4388 = vadd.f32 %v4195, %v4387
        %v4389 = vpop.f32.mrb[0].mxu0
        %v4390 = vadd.f32 %v4197, %v4389
        %4391 = vmatprep.mubr.bf16.mxu0 %v3417
        %4392 = vmatmul.mubr.bf16.gmra.mrb[0].mxu0 %v3416
        %v4393 = vpop.f32.mrb[0].mxu0
        %v4394 = vadd.f32 %v4201, %v4393
        %v4395 = vpop.f32.mrb[0].mxu0
        %v4396 = vadd.f32 %v4203, %v4395
        %v4397 = vpop.f32.mrb[0].mxu0
        %v4398 = vadd.f32 %v4205, %v4397
        %v4399 = vpop.f32.mrb[0].mxu0
        %v4400 = vadd.f32 %v4207, %v4399
        %4401 = vmatprep.mubr.bf16.mxu0 %v3421
        %4402 = vmatmul.mubr.bf16.gmra.mrb[0].mxu0 %v3420
        %v4403 = vpop.f32.mrb[0].mxu0
        %v4404 = vadd.f32 %v4211, %v4403
        %v4405 = vpop.f32.mrb[0].mxu0
        %v4406 = vadd.f32 %v4213, %v4405
        %v4407 = vpop.f32.mrb[0].mxu0
        %v4408 = vadd.f32 %v4215, %v4407
        %v4409 = vpop.f32.mrb[0].mxu0
        %v4410 = vadd.f32 %v4217, %v4409
        %4411 = vmatprep.mubr.bf16.mxu0 %v3425
        %4412 = vmatmul.mubr.bf16.gmra.mrb[0].mxu0 %v3424
        %v4413 = vpop.f32.mrb[0].mxu0
        %v4414 = vadd.f32 %v4221, %v4413
        %v4415 = vpop.f32.mrb[0].mxu0
        %v4416 = vadd.f32 %v4223, %v4415
        %v4417 = vpop.f32.mrb[0].mxu0
        %v4418 = vadd.f32 %v4225, %v4417
        %v4419 = vpop.f32.mrb[0].mxu0
        %v4420 = vadd.f32 %v4227, %v4419
        %4421 = vmatprep.mubr.bf16.mxu0 %v3429
        %4422 = vmatmul.mubr.bf16.gmra.mrb[0].mxu0 %v3428
        %v4423 = vpop.f32.mrb[0].mxu0
        %v4424 = vadd.f32 %v4231, %v4423
        %v4425 = vpop.f32.mrb[0].mxu0
        %v4426 = vadd.f32 %v4233, %v4425
        %v4427 = vpop.f32.mrb[0].mxu0
        %v4428 = vadd.f32 %v4235, %v4427
        %v4429 = vpop.f32.mrb[0].mxu0
        %v4430 = vadd.f32 %v4237, %v4429
        %4431 = vmatprep.mubr.bf16.mxu0 %v3433
        %4432 = vmatmul.mubr.bf16.gmra.mrb[0].mxu0 %v3432
        %v4433 = vpop.f32.mrb[0].mxu0
        %v4434 = vadd.f32 %v4241, %v4433
        %v4435 = vpop.f32.mrb[0].mxu0
        %v4436 = vadd.f32 %v4243, %v4435
        %v4437 = vpop.f32.mrb[0].mxu0
        %v4438 = vadd.f32 %v4245, %v4437
        %v4439 = vpop.f32.mrb[0].mxu0
        %v4440 = vadd.f32 %v4247, %v4439
        %4441 = vmatprep.mubr.bf16.mxu0 %v3437
        %4442 = vmatmul.mubr.bf16.gmra.mrb[0].mxu0 %v3436
        %v4443 = vpop.f32.mrb[0].mxu0
        %v4444 = vadd.f32 %v4251, %v4443
        %v4445 = vpop.f32.mrb[0].mxu0
        %v4446 = vadd.f32 %v4253, %v4445
        %v4447 = vpop.f32.mrb[0].mxu0
        %v4448 = vadd.f32 %v4255, %v4447
        %v4449 = vpop.f32.mrb[0].mxu0
        %v4450 = vadd.f32 %v4257, %v4449
        %4451 = vmatprep.mubr.bf16.mxu0 %v3441
        %4452 = vmatmul.mubr.bf16.gmra.mrb[0].mxu0 %v3440
        %v4453 = vpop.f32.mrb[0].mxu0
        %v4454 = vadd.f32 %v4261, %v4453
        %v4455 = vpop.f32.mrb[0].mxu0
        %v4456 = vadd.f32 %v4263, %v4455
        %v4457 = vpop.f32.mrb[0].mxu0
        %v4458 = vadd.f32 %v4265, %v4457
        %v4459 = vpop.f32.mrb[0].mxu0
        %v4460 = vadd.f32 %v4267, %v4459
        %4461 = vmatprep.mubr.bf16.mxu0 %v3445
        %4462 = vmatmul.mubr.bf16.gmra.mrb[0].mxu0 %v3444
        %v4463 = vpop.f32.mrb[0].mxu0
        %v4464 = vadd.f32 %v4271, %v4463
        %v4465 = vpop.f32.mrb[0].mxu0
        %v4466 = vadd.f32 %v4273, %v4465
        %v4467 = vpop.f32.mrb[0].mxu0
        %v4468 = vadd.f32 %v4275, %v4467
        %v4469 = vpop.f32.mrb[0].mxu0
        %v4470 = vadd.f32 %v4277, %v4469
        %4471 = vdwg.mxu0
        %4472 = vmatprep.subr.bf16.mxu0 0
        %4473 = vmatpush1.bf16.msra.mxu0 %v3896
        %4474 = vmatprep.subr.bf16.mxu0 0
        %4475 = vmatpush1.bf16.msra.mxu0 %v3899
        %4476 = vmatprep.subr.bf16.mxu0 0
        %4477 = vmatpush1.bf16.msra.mxu0 %v3902
        %4478 = vmatprep.subr.bf16.mxu0 0
        %4479 = vmatpush1.bf16.msra.mxu0 %v3905
        %4480 = vmatprep.subr.bf16.mxu0 0
        %4481 = vmatpush1.bf16.msra.mxu0 %v3908
        %4482 = vmatprep.subr.bf16.mxu0 0
        %4483 = vmatpush1.bf16.msra.mxu0 %v3911
        %4484 = vmatprep.subr.bf16.mxu0 0
        %4485 = vmatpush1.bf16.msra.mxu0 %v3914
        %4486 = vmatprep.subr.bf16.mxu0 0
        %4487 = vmatpush1.bf16.msra.mxu0 %v3917
        %4488 = vmatprep.subr.bf16.mxu0 0
        %4489 = vmatpush1.bf16.msra.mxu0 %v3920
        %4490 = vmatprep.subr.bf16.mxu0 0
        %4491 = vmatpush1.bf16.msra.mxu0 %v3923
        %4492 = vmatprep.subr.bf16.mxu0 0
        %4493 = vmatpush1.bf16.msra.mxu0 %v3926
        %4494 = vmatprep.subr.bf16.mxu0 0
        %4495 = vmatpush1.bf16.msra.mxu0 %v3929
        %4496 = vmatprep.subr.bf16.mxu0 0
        %4497 = vmatpush1.bf16.msra.mxu0 %v3932
        %4498 = vmatprep.subr.bf16.mxu0 0
        %4499 = vmatpush1.bf16.msra.mxu0 %v3935
        %4500 = vmatprep.subr.bf16.mxu0 0
        %4501 = vmatpush1.bf16.msra.mxu0 %v3938
        %4502 = vmatprep.subr.bf16.mxu0 0
        %4503 = vmatpush1.bf16.msra.mxu0 %v3941
        %4504 = vmatprep.mubr.bf16.mxu0 %v3383
        %4505 = vmatmul.mubr.bf16.gmra.mrb[0].mxu0 %v3382
        %v4506 = vpop.f32.mrb[0].mxu0
        %v4507 = vadd.f32 0.0, %v4506
        %v4508 = vpop.f32.mrb[0].mxu0
        %v4509 = vpop.f32.mrb[0].mxu0
        %v4510 = vadd.f32 0.0, %v4509
        %v4511 = vpop.f32.mrb[0].mxu0
        %4512 = vmatprep.mubr.bf16.mxu0 %v3387
        %4513 = vmatmul.mubr.bf16.gmra.mrb[0].mxu0 %v3386
        %v4514 = vpop.f32.mrb[0].mxu0
        %v4515 = vadd.f32 0.0, %v4514
        %v4516 = vpop.f32.mrb[0].mxu0
        %v4517 = vpop.f32.mrb[0].mxu0
        %v4518 = vadd.f32 0.0, %v4517
        %v4519 = vpop.f32.mrb[0].mxu0
        %4520 = vmatprep.mubr.bf16.mxu0 %v3391
        %4521 = vmatmul.mubr.bf16.gmra.mrb[0].mxu0 %v3390
        %v4522 = vpop.f32.mrb[0].mxu0
        %v4523 = vadd.f32 0.0, %v4522
        %v4524 = vpop.f32.mrb[0].mxu0
        %v4525 = vpop.f32.mrb[0].mxu0
        %v4526 = vadd.f32 0.0, %v4525
        %v4527 = vpop.f32.mrb[0].mxu0
        %4528 = vmatprep.mubr.bf16.mxu0 %v3395
        %4529 = vmatmul.mubr.bf16.gmra.mrb[0].mxu0 %v3394
        %v4530 = vpop.f32.mrb[0].mxu0
        %v4531 = vadd.f32 0.0, %v4530
        %v4532 = vpop.f32.mrb[0].mxu0
        %v4533 = vpop.f32.mrb[0].mxu0
        %v4534 = vadd.f32 0.0, %v4533
        %v4535 = vpop.f32.mrb[0].mxu0
        %4536 = vmatprep.mubr.bf16.mxu0 %v3399
        %4537 = vmatmul.mubr.bf16.gmra.mrb[0].mxu0 %v3398
        %v4538 = vpop.f32.mrb[0].mxu0
        %v4539 = vadd.f32 0.0, %v4538
        %v4540 = vpop.f32.mrb[0].mxu0
        %v4541 = vpop.f32.mrb[0].mxu0
        %v4542 = vadd.f32 0.0, %v4541
        %v4543 = vpop.f32.mrb[0].mxu0
        %4544 = vmatprep.mubr.bf16.mxu0 %v3403
        %4545 = vmatmul.mubr.bf16.gmra.mrb[0].mxu0 %v3402
        %v4546 = vpop.f32.mrb[0].mxu0
        %v4547 = vadd.f32 0.0, %v4546
        %v4548 = vpop.f32.mrb[0].mxu0
        %v4549 = vpop.f32.mrb[0].mxu0
        %v4550 = vadd.f32 0.0, %v4549
        %v4551 = vpop.f32.mrb[0].mxu0
        %4552 = vmatprep.mubr.bf16.mxu0 %v3407
        %4553 = vmatmul.mubr.bf16.gmra.mrb[0].mxu0 %v3406
        %v4554 = vpop.f32.mrb[0].mxu0
        %v4555 = vadd.f32 0.0, %v4554
        %v4556 = vpop.f32.mrb[0].mxu0
        %v4557 = vpop.f32.mrb[0].mxu0
        %v4558 = vadd.f32 0.0, %v4557
        %v4559 = vpop.f32.mrb[0].mxu0
        %4560 = vmatprep.mubr.bf16.mxu0 %v3411
        %4561 = vmatmul.mubr.bf16.gmra.mrb[0].mxu0 %v3410
        %v4562 = vpop.f32.mrb[0].mxu0
        %v4563 = vadd.f32 0.0, %v4562
        %v4564 = vpop.f32.mrb[0].mxu0
        %v4565 = vpop.f32.mrb[0].mxu0
        %v4566 = vadd.f32 0.0, %v4565
        %v4567 = vpop.f32.mrb[0].mxu0
        %4568 = vmatprep.mubr.bf16.mxu0 %v3415
        %4569 = vmatmul.mubr.bf16.gmra.mrb[0].mxu0 %v3414
        %v4570 = vpop.f32.mrb[0].mxu0
        %v4571 = vadd.f32 0.0, %v4570
        %v4572 = vpop.f32.mrb[0].mxu0
        %v4573 = vpop.f32.mrb[0].mxu0
        %v4574 = vadd.f32 0.0, %v4573
        %v4575 = vpop.f32.mrb[0].mxu0
        %4576 = vmatprep.mubr.bf16.mxu0 %v3419
        %4577 = vmatmul.mubr.bf16.gmra.mrb[0].mxu0 %v3418
        %v4578 = vpop.f32.mrb[0].mxu0
        %v4579 = vadd.f32 0.0, %v4578
        %v4580 = vpop.f32.mrb[0].mxu0
        %v4581 = vpop.f32.mrb[0].mxu0
        %v4582 = vadd.f32 0.0, %v4581
        %v4583 = vpop.f32.mrb[0].mxu0
        %4584 = vmatprep.mubr.bf16.mxu0 %v3423
        %4585 = vmatmul.mubr.bf16.gmra.mrb[0].mxu0 %v3422
        %v4586 = vpop.f32.mrb[0].mxu0
        %v4587 = vadd.f32 0.0, %v4586
        %v4588 = vpop.f32.mrb[0].mxu0
        %v4589 = vpop.f32.mrb[0].mxu0
        %v4590 = vadd.f32 0.0, %v4589
        %v4591 = vpop.f32.mrb[0].mxu0
        %4592 = vmatprep.mubr.bf16.mxu0 %v3427
        %4593 = vmatmul.mubr.bf16.gmra.mrb[0].mxu0 %v3426
        %v4594 = vpop.f32.mrb[0].mxu0
        %v4595 = vadd.f32 0.0, %v4594
        %v4596 = vpop.f32.mrb[0].mxu0
        %v4597 = vpop.f32.mrb[0].mxu0
        %v4598 = vadd.f32 0.0, %v4597
        %v4599 = vpop.f32.mrb[0].mxu0
        %4600 = vmatprep.mubr.bf16.mxu0 %v3431
        %4601 = vmatmul.mubr.bf16.gmra.mrb[0].mxu0 %v3430
        %v4602 = vpop.f32.mrb[0].mxu0
        %v4603 = vadd.f32 0.0, %v4602
        %v4604 = vpop.f32.mrb[0].mxu0
        %v4605 = vpop.f32.mrb[0].mxu0
        %v4606 = vadd.f32 0.0, %v4605
        %v4607 = vpop.f32.mrb[0].mxu0
        %4608 = vmatprep.mubr.bf16.mxu0 %v3435
        %4609 = vmatmul.mubr.bf16.gmra.mrb[0].mxu0 %v3434
        %v4610 = vpop.f32.mrb[0].mxu0
        %v4611 = vadd.f32 0.0, %v4610
        %v4612 = vpop.f32.mrb[0].mxu0
        %v4613 = vpop.f32.mrb[0].mxu0
        %v4614 = vadd.f32 0.0, %v4613
        %v4615 = vpop.f32.mrb[0].mxu0
        %4616 = vmatprep.mubr.bf16.mxu0 %v3439
        %4617 = vmatmul.mubr.bf16.gmra.mrb[0].mxu0 %v3438
        %v4618 = vpop.f32.mrb[0].mxu0
        %v4619 = vadd.f32 0.0, %v4618
        %v4620 = vpop.f32.mrb[0].mxu0
        %v4621 = vpop.f32.mrb[0].mxu0
        %v4622 = vadd.f32 0.0, %v4621
        %v4623 = vpop.f32.mrb[0].mxu0
        %4624 = vmatprep.mubr.bf16.mxu0 %v3443
        %4625 = vmatmul.mubr.bf16.gmra.mrb[0].mxu0 %v3442
        %v4626 = vpop.f32.mrb[0].mxu0
        %v4627 = vadd.f32 0.0, %v4626
        %v4628 = vpop.f32.mrb[0].mxu0
        %v4629 = vpop.f32.mrb[0].mxu0
        %v4630 = vadd.f32 0.0, %v4629
        %v4631 = vpop.f32.mrb[0].mxu0
        %4632 = vdwg.mxu0
        %4633 = vmatprep.subr.bf16.mxu0 0
        %4634 = vmatpush1.bf16.msra.mxu0 %v3944
        %4635 = vmatprep.subr.bf16.mxu0 0
        %4636 = vmatpush1.bf16.msra.mxu0 %v3947
        %4637 = vmatprep.subr.bf16.mxu0 0
        %4638 = vmatpush1.bf16.msra.mxu0 %v3950
        %4639 = vmatprep.subr.bf16.mxu0 0
        %4640 = vmatpush1.bf16.msra.mxu0 %v3953
        %4641 = vmatprep.subr.bf16.mxu0 0
        %4642 = vmatpush1.bf16.msra.mxu0 %v3956
        %4643 = vmatprep.subr.bf16.mxu0 0
        %4644 = vmatpush1.bf16.msra.mxu0 %v3959
        %4645 = vmatprep.subr.bf16.mxu0 0
        %4646 = vmatpush1.bf16.msra.mxu0 %v3962
        %4647 = vmatprep.subr.bf16.mxu0 0
        %4648 = vmatpush1.bf16.msra.mxu0 %v3965
        %4649 = vmatprep.subr.bf16.mxu0 0
        %4650 = vmatpush1.bf16.msra.mxu0 %v3968
        %4651 = vmatprep.subr.bf16.mxu0 0
        %4652 = vmatpush1.bf16.msra.mxu0 %v3971
        %4653 = vmatprep.subr.bf16.mxu0 0
        %4654 = vmatpush1.bf16.msra.mxu0 %v3974
        %4655 = vmatprep.subr.bf16.mxu0 0
        %4656 = vmatpush1.bf16.msra.mxu0 %v3977
        %4657 = vmatprep.subr.bf16.mxu0 0
        %4658 = vmatpush1.bf16.msra.mxu0 %v3980
        %4659 = vmatprep.subr.bf16.mxu0 0
        %4660 = vmatpush1.bf16.msra.mxu0 %v3983
        %4661 = vmatprep.subr.bf16.mxu0 0
        %4662 = vmatpush1.bf16.msra.mxu0 %v3986
        %4663 = vmatprep.subr.bf16.mxu0 0
        %4664 = vmatpush1.bf16.msra.mxu0 %v3989
        %4665 = vmatprep.mubr.bf16.mxu0 %v3385
        %4666 = vmatmul.mubr.bf16.gmra.mrb[0].mxu0 %v3384
        %v4667 = vpop.f32.mrb[0].mxu0
        %v4668 = vadd.f32 %v4507, %v4667
        %v4669 = vpop.f32.mrb[0].mxu0
        %v4670 = vpop.f32.mrb[0].mxu0
        %v4671 = vadd.f32 %v4510, %v4670
        %v4672 = vpop.f32.mrb[0].mxu0
        %4673 = vmatprep.mubr.bf16.mxu0 %v3389
        %4674 = vmatmul.mubr.bf16.gmra.mrb[0].mxu0 %v3388
        %v4675 = vpop.f32.mrb[0].mxu0
        %v4676 = vadd.f32 %v4515, %v4675
        %v4677 = vpop.f32.mrb[0].mxu0
        %v4678 = vpop.f32.mrb[0].mxu0
        %v4679 = vadd.f32 %v4518, %v4678
        %v4680 = vpop.f32.mrb[0].mxu0
        %4681 = vmatprep.mubr.bf16.mxu0 %v3393
        %4682 = vmatmul.mubr.bf16.gmra.mrb[0].mxu0 %v3392
        %v4683 = vpop.f32.mrb[0].mxu0
        %v4684 = vadd.f32 %v4523, %v4683
        %v4685 = vpop.f32.mrb[0].mxu0
        %v4686 = vpop.f32.mrb[0].mxu0
        %v4687 = vadd.f32 %v4526, %v4686
        %v4688 = vpop.f32.mrb[0].mxu0
        %4689 = vmatprep.mubr.bf16.mxu0 %v3397
        %4690 = vmatmul.mubr.bf16.gmra.mrb[0].mxu0 %v3396
        %v4691 = vpop.f32.mrb[0].mxu0
        %v4692 = vadd.f32 %v4531, %v4691
        %v4693 = vpop.f32.mrb[0].mxu0
        %v4694 = vpop.f32.mrb[0].mxu0
        %v4695 = vadd.f32 %v4534, %v4694
        %v4696 = vpop.f32.mrb[0].mxu0
        %4697 = vmatprep.mubr.bf16.mxu0 %v3401
        %4698 = vmatmul.mubr.bf16.gmra.mrb[0].mxu0 %v3400
        %v4699 = vpop.f32.mrb[0].mxu0
        %v4700 = vadd.f32 %v4539, %v4699
        %v4701 = vpop.f32.mrb[0].mxu0
        %v4702 = vpop.f32.mrb[0].mxu0
        %v4703 = vadd.f32 %v4542, %v4702
        %v4704 = vpop.f32.mrb[0].mxu0
        %4705 = vmatprep.mubr.bf16.mxu0 %v3405
        %4706 = vmatmul.mubr.bf16.gmra.mrb[0].mxu0 %v3404
        %v4707 = vpop.f32.mrb[0].mxu0
        %v4708 = vadd.f32 %v4547, %v4707
        %v4709 = vpop.f32.mrb[0].mxu0
        %v4710 = vpop.f32.mrb[0].mxu0
        %v4711 = vadd.f32 %v4550, %v4710
        %v4712 = vpop.f32.mrb[0].mxu0
        %4713 = vmatprep.mubr.bf16.mxu0 %v3409
        %4714 = vmatmul.mubr.bf16.gmra.mrb[0].mxu0 %v3408
        %v4715 = vpop.f32.mrb[0].mxu0
        %v4716 = vadd.f32 %v4555, %v4715
        %v4717 = vpop.f32.mrb[0].mxu0
        %v4718 = vpop.f32.mrb[0].mxu0
        %v4719 = vadd.f32 %v4558, %v4718
        %v4720 = vpop.f32.mrb[0].mxu0
        %4721 = vmatprep.mubr.bf16.mxu0 %v3413
        %4722 = vmatmul.mubr.bf16.gmra.mrb[0].mxu0 %v3412
        %v4723 = vpop.f32.mrb[0].mxu0
        %v4724 = vadd.f32 %v4563, %v4723
        %v4725 = vpop.f32.mrb[0].mxu0
        %v4726 = vpop.f32.mrb[0].mxu0
        %v4727 = vadd.f32 %v4566, %v4726
        %v4728 = vpop.f32.mrb[0].mxu0
        %4729 = vmatprep.mubr.bf16.mxu0 %v3417
        %4730 = vmatmul.mubr.bf16.gmra.mrb[0].mxu0 %v3416
        %v4731 = vpop.f32.mrb[0].mxu0
        %v4732 = vadd.f32 %v4571, %v4731
        %v4733 = vpop.f32.mrb[0].mxu0
        %v4734 = vpop.f32.mrb[0].mxu0
        %v4735 = vadd.f32 %v4574, %v4734
        %v4736 = vpop.f32.mrb[0].mxu0
        %4737 = vmatprep.mubr.bf16.mxu0 %v3421
        %4738 = vmatmul.mubr.bf16.gmra.mrb[0].mxu0 %v3420
        %v4739 = vpop.f32.mrb[0].mxu0
        %v4740 = vadd.f32 %v4579, %v4739
        %v4741 = vpop.f32.mrb[0].mxu0
        %v4742 = vpop.f32.mrb[0].mxu0
        %v4743 = vadd.f32 %v4582, %v4742
        %v4744 = vpop.f32.mrb[0].mxu0
        %4745 = vmatprep.mubr.bf16.mxu0 %v3425
        %4746 = vmatmul.mubr.bf16.gmra.mrb[0].mxu0 %v3424
        %v4747 = vpop.f32.mrb[0].mxu0
        %v4748 = vadd.f32 %v4587, %v4747
        %v4749 = vpop.f32.mrb[0].mxu0
        %v4750 = vpop.f32.mrb[0].mxu0
        %v4751 = vadd.f32 %v4590, %v4750
        %v4752 = vpop.f32.mrb[0].mxu0
        %4753 = vmatprep.mubr.bf16.mxu0 %v3429
        %4754 = vmatmul.mubr.bf16.gmra.mrb[0].mxu0 %v3428
        %v4755 = vpop.f32.mrb[0].mxu0
        %v4756 = vadd.f32 %v4595, %v4755
        %v4757 = vpop.f32.mrb[0].mxu0
        %v4758 = vpop.f32.mrb[0].mxu0
        %v4759 = vadd.f32 %v4598, %v4758
        %v4760 = vpop.f32.mrb[0].mxu0
        %4761 = vmatprep.mubr.bf16.mxu0 %v3433
        %4762 = vmatmul.mubr.bf16.gmra.mrb[0].mxu0 %v3432
        %v4763 = vpop.f32.mrb[0].mxu0
        %v4764 = vadd.f32 %v4603, %v4763
        %v4765 = vpop.f32.mrb[0].mxu0
        %v4766 = vpop.f32.mrb[0].mxu0
        %v4767 = vadd.f32 %v4606, %v4766
        %v4768 = vpop.f32.mrb[0].mxu0
        %4769 = vmatprep.mubr.bf16.mxu0 %v3437
        %4770 = vmatmul.mubr.bf16.gmra.mrb[0].mxu0 %v3436
        %v4771 = vpop.f32.mrb[0].mxu0
        %v4772 = vadd.f32 %v4611, %v4771
        %v4773 = vpop.f32.mrb[0].mxu0
        %v4774 = vpop.f32.mrb[0].mxu0
        %v4775 = vadd.f32 %v4614, %v4774
        %v4776 = vpop.f32.mrb[0].mxu0
        %4777 = vmatprep.mubr.bf16.mxu0 %v3441
        %4778 = vmatmul.mubr.bf16.gmra.mrb[0].mxu0 %v3440
        %v4779 = vpop.f32.mrb[0].mxu0
        %v4780 = vadd.f32 %v4619, %v4779
        %v4781 = vpop.f32.mrb[0].mxu0
        %v4782 = vpop.f32.mrb[0].mxu0
        %v4783 = vadd.f32 %v4622, %v4782
        %v4784 = vpop.f32.mrb[0].mxu0
        %4785 = vmatprep.mubr.bf16.mxu0 %v3445
        %4786 = vmatmul.mubr.bf16.gmra.mrb[0].mxu0 %v3444
        %v4787 = vpop.f32.mrb[0].mxu0
        %v4788 = vadd.f32 %v4627, %v4787
        %v4789 = vpop.f32.mrb[0].mxu0
        %v4790 = vpop.f32.mrb[0].mxu0
        %v4791 = vadd.f32 %v4630, %v4790
        %v4792 = vpop.f32.mrb[0].mxu0
        %4793 = vdwg.mxu0
        %v4794 = vadd.f32 %v3286, %v4314
        %v4795 = vadd.f32 %v3287, %v4316
        %v4796 = vadd.f32 %v3288, %v4668
        %v4797 = vadd.f32 %v3289, %v4318
        %v4798 = vadd.f32 %v3290, %v4320
        %v4799 = vadd.f32 %v3291, %v4671
        %v4800 = vadd.f32 %v3292, %v4324
        %v4801 = vadd.f32 %v3293, %v4326
        %v4802 = vadd.f32 %v3294, %v4676
        %v4803 = vadd.f32 %v3295, %v4328
        %v4804 = vadd.f32 %v3296, %v4330
        %v4805 = vadd.f32 %v3297, %v4679
        %v4806 = vadd.f32 %v3298, %v4334
        %v4807 = vadd.f32 %v3299, %v4336
        %v4808 = vadd.f32 %v3300, %v4684
        %v4809 = vadd.f32 %v3301, %v4338
        %v4810 = vadd.f32 %v3302, %v4340
        %v4811 = vadd.f32 %v3303, %v4687
        %v4812 = vadd.f32 %v3304, %v4344
        %v4813 = vadd.f32 %v3305, %v4346
        %v4814 = vadd.f32 %v3306, %v4692
        %v4815 = vadd.f32 %v3307, %v4348
        %v4816 = vadd.f32 %v3308, %v4350
        %v4817 = vadd.f32 %v3309, %v4695
        %v4818 = vadd.f32 %v3310, %v4354
        %v4819 = vadd.f32 %v3311, %v4356
        %v4820 = vadd.f32 %v3312, %v4700
        %v4821 = vadd.f32 %v3313, %v4358
        %v4822 = vadd.f32 %v3314, %v4360
        %v4823 = vadd.f32 %v3315, %v4703
        %v4824 = vadd.f32 %v3316, %v4364
        %v4825 = vadd.f32 %v3317, %v4366
        %v4826 = vadd.f32 %v3318, %v4708
        %v4827 = vadd.f32 %v3319, %v4368
        %v4828 = vadd.f32 %v3320, %v4370
        %v4829 = vadd.f32 %v3321, %v4711
        %v4830 = vadd.f32 %v3322, %v4374
        %v4831 = vadd.f32 %v3323, %v4376
        %v4832 = vadd.f32 %v3324, %v4716
        %v4833 = vadd.f32 %v3325, %v4378
        %v4834 = vadd.f32 %v3326, %v4380
        %v4835 = vadd.f32 %v3327, %v4719
        %v4836 = vadd.f32 %v3328, %v4384
        %v4837 = vadd.f32 %v3329, %v4386
        %v4838 = vadd.f32 %v3330, %v4724
        %v4839 = vadd.f32 %v3331, %v4388
        %v4840 = vadd.f32 %v3332, %v4390
        %v4841 = vadd.f32 %v3333, %v4727
        %v4842 = vadd.f32 %v3334, %v4394
        %v4843 = vadd.f32 %v3335, %v4396
        %v4844 = vadd.f32 %v3336, %v4732
        %v4845 = vadd.f32 %v3337, %v4398
        %v4846 = vadd.f32 %v3338, %v4400
        %v4847 = vadd.f32 %v3339, %v4735
        %v4848 = vadd.f32 %v3340, %v4404
        %v4849 = vadd.f32 %v3341, %v4406
        %v4850 = vadd.f32 %v3342, %v4740
        %v4851 = vadd.f32 %v3343, %v4408
        %v4852 = vadd.f32 %v3344, %v4410
        %v4853 = vadd.f32 %v3345, %v4743
        %v4854 = vadd.f32 %v3346, %v4414
        %v4855 = vadd.f32 %v3347, %v4416
        %v4856 = vadd.f32 %v3348, %v4748
        %v4857 = vadd.f32 %v3349, %v4418
        %v4858 = vadd.f32 %v3350, %v4420
        %v4859 = vadd.f32 %v3351, %v4751
        %v4860 = vadd.f32 %v3352, %v4424
        %v4861 = vadd.f32 %v3353, %v4426
        %v4862 = vadd.f32 %v3354, %v4756
        %v4863 = vadd.f32 %v3355, %v4428
        %v4864 = vadd.f32 %v3356, %v4430
        %v4865 = vadd.f32 %v3357, %v4759
        %v4866 = vadd.f32 %v3358, %v4434
        %v4867 = vadd.f32 %v3359, %v4436
        %v4868 = vadd.f32 %v3360, %v4764
        %v4869 = vadd.f32 %v3361, %v4438
        %v4870 = vadd.f32 %v3362, %v4440
        %v4871 = vadd.f32 %v3363, %v4767
        %v4872 = vadd.f32 %v3364, %v4444
        %v4873 = vadd.f32 %v3365, %v4446
        %v4874 = vadd.f32 %v3366, %v4772
        %v4875 = vadd.f32 %v3367, %v4448
        %v4876 = vadd.f32 %v3368, %v4450
        %v4877 = vadd.f32 %v3369, %v4775
        %v4878 = vadd.f32 %v3370, %v4454
        %v4879 = vadd.f32 %v3371, %v4456
        %v4880 = vadd.f32 %v3372, %v4780
        %v4881 = vadd.f32 %v3373, %v4458
        %v4882 = vadd.f32 %v3374, %v4460
        %v4883 = vadd.f32 %v3375, %v4783
        %v4884 = vadd.f32 %v3376, %v4464
        %v4885 = vadd.f32 %v3377, %v4466
        %v4886 = vadd.f32 %v3378, %v4788
        %v4887 = vadd.f32 %v3379, %v4468
        %v4888 = vadd.f32 %v3380, %v4470
        %v4889 = vadd.f32 %v3381, %v4791
        %4890 = vst [vmem:[#allocation3] sm:$0xff] %v4794
        %4891 = vst [vmem:[#allocation3 + $0x8] sm:$0xff] %v4795
        %4892 = vst [vmem:[#allocation3 + $0x10] sm:$0xff] %v4796
        %4893 = vst [vmem:[#allocation3 + $0x18] sm:$0xff] %v4797
        %4894 = vst [vmem:[#allocation3 + $0x20] sm:$0xff] %v4798
        %4895 = vst [vmem:[#allocation3 + $0x28] sm:$0xff] %v4799
        %4896 = vst [vmem:[#allocation3 + $0x30] sm:$0xff] %v4800
        %4897 = vst [vmem:[#allocation3 + $0x38] sm:$0xff] %v4801
        %4898 = vst [vmem:[#allocation3 + $0x40] sm:$0xff] %v4802
        %4899 = vst [vmem:[#allocation3 + $0x48] sm:$0xff] %v4803
        %4900 = vst [vmem:[#allocation3 + $0x50] sm:$0xff] %v4804
        %4901 = vst [vmem:[#allocation3 + $0x58] sm:$0xff] %v4805
        %4902 = vst [vmem:[#allocation3 + $0x60] sm:$0xff] %v4806
        %4903 = vst [vmem:[#allocation3 + $0x68] sm:$0xff] %v4807
        %4904 = vst [vmem:[#allocation3 + $0x70] sm:$0xff] %v4808
        %4905 = vst [vmem:[#allocation3 + $0x78] sm:$0xff] %v4809
        %4906 = vst [vmem:[#allocation3 + $0x80] sm:$0xff] %v4810
        %4907 = vst [vmem:[#allocation3 + $0x88] sm:$0xff] %v4811
        %4908 = vst [vmem:[#allocation3 + $0x90] sm:$0xff] %v4812
        %4909 = vst [vmem:[#allocation3 + $0x98] sm:$0xff] %v4813
        %4910 = vst [vmem:[#allocation3 + $0xa0] sm:$0xff] %v4814
        %4911 = vst [vmem:[#allocation3 + $0xa8] sm:$0xff] %v4815
        %4912 = vst [vmem:[#allocation3 + $0xb0] sm:$0xff] %v4816
        %4913 = vst [vmem:[#allocation3 + $0xb8] sm:$0xff] %v4817
        %4914 = vst [vmem:[#allocation3 + $0xc0] sm:$0xff] %v4818
        %4915 = vst [vmem:[#allocation3 + $0xc8] sm:$0xff] %v4819
        %4916 = vst [vmem:[#allocation3 + $0xd0] sm:$0xff] %v4820
        %4917 = vst [vmem:[#allocation3 + $0xd8] sm:$0xff] %v4821
        %4918 = vst [vmem:[#allocation3 + $0xe0] sm:$0xff] %v4822
        %4919 = vst [vmem:[#allocation3 + $0xe8] sm:$0xff] %v4823
        %4920 = vst [vmem:[#allocation3 + $0xf0] sm:$0xff] %v4824
        %4921 = vst [vmem:[#allocation3 + $0xf8] sm:$0xff] %v4825
        %4922 = vst [vmem:[#allocation3 + $0x100] sm:$0xff] %v4826
        %4923 = vst [vmem:[#allocation3 + $0x108] sm:$0xff] %v4827
        %4924 = vst [vmem:[#allocation3 + $0x110] sm:$0xff] %v4828
        %4925 = vst [vmem:[#allocation3 + $0x118] sm:$0xff] %v4829
        %4926 = vst [vmem:[#allocation3 + $0x120] sm:$0xff] %v4830
        %4927 = vst [vmem:[#allocation3 + $0x128] sm:$0xff] %v4831
        %4928 = vst [vmem:[#allocation3 + $0x130] sm:$0xff] %v4832
        %4929 = vst [vmem:[#allocation3 + $0x138] sm:$0xff] %v4833
        %4930 = vst [vmem:[#allocation3 + $0x140] sm:$0xff] %v4834
        %4931 = vst [vmem:[#allocation3 + $0x148] sm:$0xff] %v4835
        %4932 = vst [vmem:[#allocation3 + $0x150] sm:$0xff] %v4836
        %4933 = vst [vmem:[#allocation3 + $0x158] sm:$0xff] %v4837
        %4934 = vst [vmem:[#allocation3 + $0x160] sm:$0xff] %v4838
        %4935 = vst [vmem:[#allocation3 + $0x168] sm:$0xff] %v4839
        %4936 = vst [vmem:[#allocation3 + $0x170] sm:$0xff] %v4840
        %4937 = vst [vmem:[#allocation3 + $0x178] sm:$0xff] %v4841
        %4938 = vst [vmem:[#allocation3 + $0x180] sm:$0xff] %v4842
        %4939 = vst [vmem:[#allocation3 + $0x188] sm:$0xff] %v4843
        %4940 = vst [vmem:[#allocation3 + $0x190] sm:$0xff] %v4844
        %4941 = vst [vmem:[#allocation3 + $0x198] sm:$0xff] %v4845
        %4942 = vst [vmem:[#allocation3 + $0x1a0] sm:$0xff] %v4846
        %4943 = vst [vmem:[#allocation3 + $0x1a8] sm:$0xff] %v4847
        %4944 = vst [vmem:[#allocation3 + $0x1b0] sm:$0xff] %v4848
        %4945 = vst [vmem:[#allocation3 + $0x1b8] sm:$0xff] %v4849
        %4946 = vst [vmem:[#allocation3 + $0x1c0] sm:$0xff] %v4850
        %4947 = vst [vmem:[#allocation3 + $0x1c8] sm:$0xff] %v4851
        %4948 = vst [vmem:[#allocation3 + $0x1d0] sm:$0xff] %v4852
        %4949 = vst [vmem:[#allocation3 + $0x1d8] sm:$0xff] %v4853
        %4950 = vst [vmem:[#allocation3 + $0x1e0] sm:$0xff] %v4854
        %4951 = vst [vmem:[#allocation3 + $0x1e8] sm:$0xff] %v4855
        %4952 = vst [vmem:[#allocation3 + $0x1f0] sm:$0xff] %v4856
        %4953 = vst [vmem:[#allocation3 + $0x1f8] sm:$0xff] %v4857
        %4954 = vst [vmem:[#allocation3 + $0x200] sm:$0xff] %v4858
        %4955 = vst [vmem:[#allocation3 + $0x208] sm:$0xff] %v4859
        %4956 = vst [vmem:[#allocation3 + $0x210] sm:$0xff] %v4860
        %4957 = vst [vmem:[#allocation3 + $0x218] sm:$0xff] %v4861
        %4958 = vst [vmem:[#allocation3 + $0x220] sm:$0xff] %v4862
        %4959 = vst [vmem:[#allocation3 + $0x228] sm:$0xff] %v4863
        %4960 = vst [vmem:[#allocation3 + $0x230] sm:$0xff] %v4864
        %4961 = vst [vmem:[#allocation3 + $0x238] sm:$0xff] %v4865
        %4962 = vst [vmem:[#allocation3 + $0x240] sm:$0xff] %v4866
        %4963 = vst [vmem:[#allocation3 + $0x248] sm:$0xff] %v4867
        %4964 = vst [vmem:[#allocation3 + $0x250] sm:$0xff] %v4868
        %4965 = vst [vmem:[#allocation3 + $0x258] sm:$0xff] %v4869
        %4966 = vst [vmem:[#allocation3 + $0x260] sm:$0xff] %v4870
        %4967 = vst [vmem:[#allocation3 + $0x268] sm:$0xff] %v4871
        %4968 = vst [vmem:[#allocation3 + $0x270] sm:$0xff] %v4872
        %4969 = vst [vmem:[#allocation3 + $0x278] sm:$0xff] %v4873
        %4970 = vst [vmem:[#allocation3 + $0x280] sm:$0xff] %v4874
        %4971 = vst [vmem:[#allocation3 + $0x288] sm:$0xff] %v4875
        %4972 = vst [vmem:[#allocation3 + $0x290] sm:$0xff] %v4876
        %4973 = vst [vmem:[#allocation3 + $0x298] sm:$0xff] %v4877
        %4974 = vst [vmem:[#allocation3 + $0x2a0] sm:$0xff] %v4878
        %4975 = vst [vmem:[#allocation3 + $0x2a8] sm:$0xff] %v4879
        %4976 = vst [vmem:[#allocation3 + $0x2b0] sm:$0xff] %v4880
        %4977 = vst [vmem:[#allocation3 + $0x2b8] sm:$0xff] %v4881
        %4978 = vst [vmem:[#allocation3 + $0x2c0] sm:$0xff] %v4882
        %4979 = vst [vmem:[#allocation3 + $0x2c8] sm:$0xff] %v4883
        %4980 = vst [vmem:[#allocation3 + $0x2d0] sm:$0xff] %v4884
        %4981 = vst [vmem:[#allocation3 + $0x2d8] sm:$0xff] %v4885
        %4982 = vst [vmem:[#allocation3 + $0x2e0] sm:$0xff] %v4886
        %4983 = vst [vmem:[#allocation3 + $0x2e8] sm:$0xff] %v4887
        %4984 = vst [vmem:[#allocation3 + $0x2f0] sm:$0xff] %v4888
        %4985 = vst [vmem:[#allocation3 + $0x2f8] sm:$0xff] %v4889
        %p4986 = scmp.eq.s32.totalorder %s28, 2
        // Predicated region
        $region49: #{tpu_custom_call.1} parent=31 // pred_check
          %p4987 = pneg %p4986
        $region50: #{tpu_custom_call.1} parent=31 // pred_check_branch
          %4989 = sbr.rel (%p4987) target = $region52
        $region51: #{tpu_custom_call.1} parent=31 // pred_region
          %v4990 = vld [vmem:[#allocation3] sm:$0xff]
          %v4991 = vld [vmem:[#allocation3 + $0x8] sm:$0xff]
          %v4992 = vld [vmem:[#allocation3 + $0x10] sm:$0xff]
          %v4993 = vld [vmem:[#allocation3 + $0x18] sm:$0xff]
          %v4994 = vld [vmem:[#allocation3 + $0x20] sm:$0xff]
          %v4995 = vld [vmem:[#allocation3 + $0x28] sm:$0xff]
          %v4996 = vld [vmem:[#allocation3 + $0x30] sm:$0xff]
          %v4997 = vld [vmem:[#allocation3 + $0x38] sm:$0xff]
          %v4998 = vld [vmem:[#allocation3 + $0x40] sm:$0xff]
          %v4999 = vld [vmem:[#allocation3 + $0x48] sm:$0xff]
          %v5000 = vld [vmem:[#allocation3 + $0x50] sm:$0xff]
          %v5001 = vld [vmem:[#allocation3 + $0x58] sm:$0xff]
          %v5002 = vld [vmem:[#allocation3 + $0x60] sm:$0xff]
          %v5003 = vld [vmem:[#allocation3 + $0x68] sm:$0xff]
          %v5004 = vld [vmem:[#allocation3 + $0x70] sm:$0xff]
          %v5005 = vld [vmem:[#allocation3 + $0x78] sm:$0xff]
          %v5006 = vld [vmem:[#allocation3 + $0x80] sm:$0xff]
          %v5007 = vld [vmem:[#allocation3 + $0x88] sm:$0xff]
          %v5008 = vld [vmem:[#allocation3 + $0x90] sm:$0xff]
          %v5009 = vld [vmem:[#allocation3 + $0x98] sm:$0xff]
          %v5010 = vld [vmem:[#allocation3 + $0xa0] sm:$0xff]
          %v5011 = vld [vmem:[#allocation3 + $0xa8] sm:$0xff]
          %v5012 = vld [vmem:[#allocation3 + $0xb0] sm:$0xff]
          %v5013 = vld [vmem:[#allocation3 + $0xb8] sm:$0xff]
          %v5014 = vld [vmem:[#allocation3 + $0xc0] sm:$0xff]
          %v5015 = vld [vmem:[#allocation3 + $0xc8] sm:$0xff]
          %v5016 = vld [vmem:[#allocation3 + $0xd0] sm:$0xff]
          %v5017 = vld [vmem:[#allocation3 + $0xd8] sm:$0xff]
          %v5018 = vld [vmem:[#allocation3 + $0xe0] sm:$0xff]
          %v5019 = vld [vmem:[#allocation3 + $0xe8] sm:$0xff]
          %v5020 = vld [vmem:[#allocation3 + $0xf0] sm:$0xff]
          %v5021 = vld [vmem:[#allocation3 + $0xf8] sm:$0xff]
          %v5022 = vld [vmem:[#allocation3 + $0x100] sm:$0xff]
          %v5023 = vld [vmem:[#allocation3 + $0x108] sm:$0xff]
          %v5024 = vld [vmem:[#allocation3 + $0x110] sm:$0xff]
          %v5025 = vld [vmem:[#allocation3 + $0x118] sm:$0xff]
          %v5026 = vld [vmem:[#allocation3 + $0x120] sm:$0xff]
          %v5027 = vld [vmem:[#allocation3 + $0x128] sm:$0xff]
          %v5028 = vld [vmem:[#allocation3 + $0x130] sm:$0xff]
          %v5029 = vld [vmem:[#allocation3 + $0x138] sm:$0xff]
          %v5030 = vld [vmem:[#allocation3 + $0x140] sm:$0xff]
          %v5031 = vld [vmem:[#allocation3 + $0x148] sm:$0xff]
          %v5032 = vld [vmem:[#allocation3 + $0x150] sm:$0xff]
          %v5033 = vld [vmem:[#allocation3 + $0x158] sm:$0xff]
          %v5034 = vld [vmem:[#allocation3 + $0x160] sm:$0xff]
          %v5035 = vld [vmem:[#allocation3 + $0x168] sm:$0xff]
          %v5036 = vld [vmem:[#allocation3 + $0x170] sm:$0xff]
          %v5037 = vld [vmem:[#allocation3 + $0x178] sm:$0xff]
          %v5038 = vld [vmem:[#allocation3 + $0x180] sm:$0xff]
          %v5039 = vld [vmem:[#allocation3 + $0x188] sm:$0xff]
          %v5040 = vld [vmem:[#allocation3 + $0x190] sm:$0xff]
          %v5041 = vld [vmem:[#allocation3 + $0x198] sm:$0xff]
          %v5042 = vld [vmem:[#allocation3 + $0x1a0] sm:$0xff]
          %v5043 = vld [vmem:[#allocation3 + $0x1a8] sm:$0xff]
          %v5044 = vld [vmem:[#allocation3 + $0x1b0] sm:$0xff]
          %v5045 = vld [vmem:[#allocation3 + $0x1b8] sm:$0xff]
          %v5046 = vld [vmem:[#allocation3 + $0x1c0] sm:$0xff]
          %v5047 = vld [vmem:[#allocation3 + $0x1c8] sm:$0xff]
          %v5048 = vld [vmem:[#allocation3 + $0x1d0] sm:$0xff]
          %v5049 = vld [vmem:[#allocation3 + $0x1d8] sm:$0xff]
          %v5050 = vld [vmem:[#allocation3 + $0x1e0] sm:$0xff]
          %v5051 = vld [vmem:[#allocation3 + $0x1e8] sm:$0xff]
          %v5052 = vld [vmem:[#allocation3 + $0x1f0] sm:$0xff]
          %v5053 = vld [vmem:[#allocation3 + $0x1f8] sm:$0xff]
          %v5054 = vld [vmem:[#allocation3 + $0x200] sm:$0xff]
          %v5055 = vld [vmem:[#allocation3 + $0x208] sm:$0xff]
          %v5056 = vld [vmem:[#allocation3 + $0x210] sm:$0xff]
          %v5057 = vld [vmem:[#allocation3 + $0x218] sm:$0xff]
          %v5058 = vld [vmem:[#allocation3 + $0x220] sm:$0xff]
          %v5059 = vld [vmem:[#allocation3 + $0x228] sm:$0xff]
          %v5060 = vld [vmem:[#allocation3 + $0x230] sm:$0xff]
          %v5061 = vld [vmem:[#allocation3 + $0x238] sm:$0xff]
          %v5062 = vld [vmem:[#allocation3 + $0x240] sm:$0xff]
          %v5063 = vld [vmem:[#allocation3 + $0x248] sm:$0xff]
          %v5064 = vld [vmem:[#allocation3 + $0x250] sm:$0xff]
          %v5065 = vld [vmem:[#allocation3 + $0x258] sm:$0xff]
          %v5066 = vld [vmem:[#allocation3 + $0x260] sm:$0xff]
          %v5067 = vld [vmem:[#allocation3 + $0x268] sm:$0xff]
          %v5068 = vld [vmem:[#allocation3 + $0x270] sm:$0xff]
          %v5069 = vld [vmem:[#allocation3 + $0x278] sm:$0xff]
          %v5070 = vld [vmem:[#allocation3 + $0x280] sm:$0xff]
          %v5071 = vld [vmem:[#allocation3 + $0x288] sm:$0xff]
          %v5072 = vld [vmem:[#allocation3 + $0x290] sm:$0xff]
          %v5073 = vld [vmem:[#allocation3 + $0x298] sm:$0xff]
          %v5074 = vld [vmem:[#allocation3 + $0x2a0] sm:$0xff]
          %v5075 = vld [vmem:[#allocation3 + $0x2a8] sm:$0xff]
          %v5076 = vld [vmem:[#allocation3 + $0x2b0] sm:$0xff]
          %v5077 = vld [vmem:[#allocation3 + $0x2b8] sm:$0xff]
          %v5078 = vld [vmem:[#allocation3 + $0x2c0] sm:$0xff]
          %v5079 = vld [vmem:[#allocation3 + $0x2c8] sm:$0xff]
          %v5080 = vld [vmem:[#allocation3 + $0x2d0] sm:$0xff]
          %v5081 = vld [vmem:[#allocation3 + $0x2d8] sm:$0xff]
          %v5082 = vld [vmem:[#allocation3 + $0x2e0] sm:$0xff]
          %v5083 = vld [vmem:[#allocation3 + $0x2e8] sm:$0xff]
          %v5084 = vld [vmem:[#allocation3 + $0x2f0] sm:$0xff]
          %v5085 = vld [vmem:[#allocation3 + $0x2f8] sm:$0xff]
          %5086 = vst [vmem:[%s279] sm:$0xff] %v4990
          %5087 = vst [vmem:[%s279 + $0x8] sm:$0xff] %v4991
          %5088 = vst [vmem:[%s279 + $0x10] sm:$0xff] %v4992
          %5089 = vst [vmem:[%s279 + $0x18] sm:$0xff] %v4993
          %5090 = vst [vmem:[%s279 + $0x20] sm:$0xff] %v4994
          %5091 = vst [vmem:[%s279 + $0x28] sm:$0xff] %v4995
          %5092 = vst [vmem:[%s279 + $0x30] sm:$0xff] %v4996
          %5093 = vst [vmem:[%s279 + $0x38] sm:$0xff] %v4997
          %5094 = vst [vmem:[%s279 + $0x40] sm:$0xff] %v4998
          %5095 = vst [vmem:[%s279 + $0x48] sm:$0xff] %v4999
          %5096 = vst [vmem:[%s279 + $0x50] sm:$0xff] %v5000
          %5097 = vst [vmem:[%s279 + $0x58] sm:$0xff] %v5001
          %5098 = vst [vmem:[%s279 + $0x60] sm:$0xff] %v5002
          %5099 = vst [vmem:[%s279 + $0x68] sm:$0xff] %v5003
          %5100 = vst [vmem:[%s279 + $0x70] sm:$0xff] %v5004
          %5101 = vst [vmem:[%s279 + $0x78] sm:$0xff] %v5005
          %5102 = vst [vmem:[%s279 + $0x80] sm:$0xff] %v5006
          %5103 = vst [vmem:[%s279 + $0x88] sm:$0xff] %v5007
          %5104 = vst [vmem:[%s279 + $0x90] sm:$0xff] %v5008
          %5105 = vst [vmem:[%s279 + $0x98] sm:$0xff] %v5009
          %5106 = vst [vmem:[%s279 + $0xa0] sm:$0xff] %v5010
          %5107 = vst [vmem:[%s279 + $0xa8] sm:$0xff] %v5011
          %5108 = vst [vmem:[%s279 + $0xb0] sm:$0xff] %v5012
          %5109 = vst [vmem:[%s279 + $0xb8] sm:$0xff] %v5013
          %5110 = vst [vmem:[%s279 + $0xc0] sm:$0xff] %v5014
          %5111 = vst [vmem:[%s279 + $0xc8] sm:$0xff] %v5015
          %5112 = vst [vmem:[%s279 + $0xd0] sm:$0xff] %v5016
          %5113 = vst [vmem:[%s279 + $0xd8] sm:$0xff] %v5017
          %5114 = vst [vmem:[%s279 + $0xe0] sm:$0xff] %v5018
          %5115 = vst [vmem:[%s279 + $0xe8] sm:$0xff] %v5019
          %5116 = vst [vmem:[%s279 + $0xf0] sm:$0xff] %v5020
          %5117 = vst [vmem:[%s279 + $0xf8] sm:$0xff] %v5021
          %5118 = vst [vmem:[%s279 + $0x100] sm:$0xff] %v5022
          %5119 = vst [vmem:[%s279 + $0x108] sm:$0xff] %v5023
          %5120 = vst [vmem:[%s279 + $0x110] sm:$0xff] %v5024
          %5121 = vst [vmem:[%s279 + $0x118] sm:$0xff] %v5025
          %5122 = vst [vmem:[%s279 + $0x120] sm:$0xff] %v5026
          %5123 = vst [vmem:[%s279 + $0x128] sm:$0xff] %v5027
          %5124 = vst [vmem:[%s279 + $0x130] sm:$0xff] %v5028
          %5125 = vst [vmem:[%s279 + $0x138] sm:$0xff] %v5029
          %5126 = vst [vmem:[%s279 + $0x140] sm:$0xff] %v5030
          %5127 = vst [vmem:[%s279 + $0x148] sm:$0xff] %v5031
          %5128 = vst [vmem:[%s279 + $0x150] sm:$0xff] %v5032
          %5129 = vst [vmem:[%s279 + $0x158] sm:$0xff] %v5033
          %5130 = vst [vmem:[%s279 + $0x160] sm:$0xff] %v5034
          %5131 = vst [vmem:[%s279 + $0x168] sm:$0xff] %v5035
          %5132 = vst [vmem:[%s279 + $0x170] sm:$0xff] %v5036
          %5133 = vst [vmem:[%s279 + $0x178] sm:$0xff] %v5037
          %5134 = vst [vmem:[%s279 + $0x180] sm:$0xff] %v5038
          %5135 = vst [vmem:[%s279 + $0x188] sm:$0xff] %v5039
          %5136 = vst [vmem:[%s279 + $0x190] sm:$0xff] %v5040
          %5137 = vst [vmem:[%s279 + $0x198] sm:$0xff] %v5041
          %5138 = vst [vmem:[%s279 + $0x1a0] sm:$0xff] %v5042
          %5139 = vst [vmem:[%s279 + $0x1a8] sm:$0xff] %v5043
          %5140 = vst [vmem:[%s279 + $0x1b0] sm:$0xff] %v5044
          %5141 = vst [vmem:[%s279 + $0x1b8] sm:$0xff] %v5045
          %5142 = vst [vmem:[%s279 + $0x1c0] sm:$0xff] %v5046
          %5143 = vst [vmem:[%s279 + $0x1c8] sm:$0xff] %v5047
          %5144 = vst [vmem:[%s279 + $0x1d0] sm:$0xff] %v5048
          %5145 = vst [vmem:[%s279 + $0x1d8] sm:$0xff] %v5049
          %5146 = vst [vmem:[%s279 + $0x1e0] sm:$0xff] %v5050
          %5147 = vst [vmem:[%s279 + $0x1e8] sm:$0xff] %v5051
          %5148 = vst [vmem:[%s279 + $0x1f0] sm:$0xff] %v5052
          %5149 = vst [vmem:[%s279 + $0x1f8] sm:$0xff] %v5053
          %5150 = vst [vmem:[%s279 + $0x200] sm:$0xff] %v5054
          %5151 = vst [vmem:[%s279 + $0x208] sm:$0xff] %v5055
          %5152 = vst [vmem:[%s279 + $0x210] sm:$0xff] %v5056
          %5153 = vst [vmem:[%s279 + $0x218] sm:$0xff] %v5057
          %5154 = vst [vmem:[%s279 + $0x220] sm:$0xff] %v5058
          %5155 = vst [vmem:[%s279 + $0x228] sm:$0xff] %v5059
          %5156 = vst [vmem:[%s279 + $0x230] sm:$0xff] %v5060
          %5157 = vst [vmem:[%s279 + $0x238] sm:$0xff] %v5061
          %5158 = vst [vmem:[%s279 + $0x240] sm:$0xff] %v5062
          %5159 = vst [vmem:[%s279 + $0x248] sm:$0xff] %v5063
          %5160 = vst [vmem:[%s279 + $0x250] sm:$0xff] %v5064
          %5161 = vst [vmem:[%s279 + $0x258] sm:$0xff] %v5065
          %5162 = vst [vmem:[%s279 + $0x260] sm:$0xff] %v5066
          %5163 = vst [vmem:[%s279 + $0x268] sm:$0xff] %v5067
          %5164 = vst [vmem:[%s279 + $0x270] sm:$0xff] %v5068
          %5165 = vst [vmem:[%s279 + $0x278] sm:$0xff] %v5069
          %5166 = vst [vmem:[%s279 + $0x280] sm:$0xff] %v5070
          %5167 = vst [vmem:[%s279 + $0x288] sm:$0xff] %v5071
          %5168 = vst [vmem:[%s279 + $0x290] sm:$0xff] %v5072
          %5169 = vst [vmem:[%s279 + $0x298] sm:$0xff] %v5073
          %5170 = vst [vmem:[%s279 + $0x2a0] sm:$0xff] %v5074
          %5171 = vst [vmem:[%s279 + $0x2a8] sm:$0xff] %v5075
          %5172 = vst [vmem:[%s279 + $0x2b0] sm:$0xff] %v5076
          %5173 = vst [vmem:[%s279 + $0x2b8] sm:$0xff] %v5077
          %5174 = vst [vmem:[%s279 + $0x2c0] sm:$0xff] %v5078
          %5175 = vst [vmem:[%s279 + $0x2c8] sm:$0xff] %v5079
          %5176 = vst [vmem:[%s279 + $0x2d0] sm:$0xff] %v5080
          %5177 = vst [vmem:[%s279 + $0x2d8] sm:$0xff] %v5081
          %5178 = vst [vmem:[%s279 + $0x2e0] sm:$0xff] %v5082
          %5179 = vst [vmem:[%s279 + $0x2e8] sm:$0xff] %v5083
          %5180 = vst [vmem:[%s279 + $0x2f0] sm:$0xff] %v5084
          %5181 = vst [vmem:[%s279 + $0x2f8] sm:$0xff] %v5085
        $region52: #{tpu_custom_call.1} parent=31 // pred_fallthru
          _
        %s5182 = sand.u32 %s121, 1
        %s5183 = scalar_lea.sflag [#allocation6], %s5182
        %s5184 = sand.u32 %s121, 1
        %s5185 = smul.addr %s5184, 768
        %s5186 = scalar_lea.vmem [#allocation10], %s5185
        // Predicated region
        $region53: #{tpu_custom_call.1} parent=31 // pred_check
          %p5187 = pneg %p131
        $region54: #{tpu_custom_call.1} parent=31 // pred_check_branch
          %5189 = sbr.rel (%p5187) target = $region56
        $region55: #{tpu_custom_call.1} parent=31 // pred_region
          %s5190 = smul.u32 32, %s27
          %s5192 = ssub.s32 12288, 12288
          %5193 = vsyncadd %s5183, %s5192
          %s5194 = smul.addr %s5190, 3
          %s5195 = smul.addr %s5194, 128
          %s5196 = scalar_lea.hbm %s3, %s5195
          %s5197 = sshll.u32 %s5186, 4
          %s5198 = int_to_ptr.vmem [resolvable:$true] %s5197
          %5203 = dma.vmem_to_hbm [thread:$0]  %s5198, 12288, %s5196, %s5183, 384, 384, 24
        $region56: #{tpu_custom_call.1} parent=31 // pred_fallthru
          _
      $region32: #{tpu_custom_call.1} parent=5 // pred_fallthru
        _
      %p5204 = scmp.le.s32.totalorder 2, %s18
      // Predicated region
      $region57: #{tpu_custom_call.1} parent=5 // pred_check
        %p5205 = pneg %p5204
      $region58: #{tpu_custom_call.1} parent=5 // pred_check_branch
        %5207 = sbr.rel (%p5205) target = $region60
      $region59: #{tpu_custom_call.1} parent=5 // pred_region
        %s5208 = ssub.s32 %s18, 2
        // Predicated region
        $region61: #{tpu_custom_call.1} parent=59 // pred_check
          %p5209 = pneg %p137
        $region62: #{tpu_custom_call.1} parent=59 // pred_check_branch
          %5211 = sbr.rel (%p5209) target = $region64
        $region63: #{tpu_custom_call.1} parent=59 // pred_region
          %s5212 = sand.u32 %s122, 1
          %s5213 = scalar_lea.sflag [#allocation6], %s5212
          %s5214 = sand.u32 %s122, 1
          %s5215 = smul.addr %s5214, 768
          %s5216 = scalar_lea.vmem [#allocation10], %s5215
          %5217 = dma.done %s5213, 12288
        $region64: #{tpu_custom_call.1} parent=59 // pred_fallthru
          _
      $region60: #{tpu_custom_call.1} parent=5 // pred_fallthru
        _
    $region6: #{tpu_custom_call.1} parent=1 // loop_footer
      %s22 = sadd.s32 1, %s18
    $region7: #{tpu_custom_call.1} parent=1 // loop_footer_branch
      %17 = sbr.rel target = $region3
    $region8: #{tpu_custom_call.1} parent=1 // loop_exit
      _
    %5218 = vsyncpa [#allocation5], 1
    %s5219 = scalar_lea.sflag [#allocation5], 1
    %5220 = vsyncpa %s5219, 1
    %5221 = vsyncpa [#allocation8], 1
    %s5222 = scalar_lea.sflag [#allocation8], 1
    %5223 = vsyncpa %s5222, 1
    %5224 = vsyncpa [#allocation6], 1
    %s5225 = scalar_lea.sflag [#allocation6], 1
    %5226 = vsyncpa %s5225, 1

</llo_original>
